<compile_context>
chip_gen: v7x
topology: tpu7x:2x2x1
jax: 0.10.0
libtpu: 0.0.40
codegen_flags: <defaults>
</compile_context>

<pallas_src>
import functools

import jax
import jax.numpy as jnp
from jax import lax
from jax.experimental import pallas as pl
from jax.experimental.pallas import tpu as pltpu


def deeper_lstm_kernel(
    inv_norm_ref,  # SMEM [1, 1] f32 : 1 / ||img||_F (global, whole batch)
    x_ref,         # [T, Bt, E]  f32 : gathered embedding rows (pre-bias/tanh)
    img_ref,       # [Bt, Dimg]  f32
    b_emb_ref,     # [1, E]      f32
    w_ih1_ref,     # [E, 4H]     bf16
    w_hh1_ref,     # [H, 4H]     bf16
    b1_ref,        # [1, 4H]     f32  (b_ih1 + b_hh1)
    w_ih2_ref,     # [H, 4H]     bf16
    w_hh2_ref,     # [H, 4H]     bf16
    b2_ref,        # [1, 4H]     f32  (b_ih2 + b_hh2)
    w_img_ref,     # [Dimg, De]  bf16
    b_img_ref,     # [1, De]     f32
    w_q_ref,       # [4H, R]     bf16
    b_q_ref,       # [1, R]      f32
    w_mlp_ref,     # [R, Out]    bf16
    b_mlp_ref,     # [1, Out]    f32
    out_ref,       # [Bt, Out]   f32
):
    T, Bt, E = x_ref.shape
    H = w_hh1_ref.shape[0]
    f32 = jnp.float32
    bf16 = jnp.bfloat16

    def mm(a, b):
        # bf16 x bf16 operands, f32 accumulation on the MXU.
        return jnp.dot(a.astype(bf16), b.astype(bf16), preferred_element_type=f32)

    # ---- image branch first: independent of the recurrence, so its MXU/EUP
    # work hides under the serial h->h dependency chain. ----------------------
    img_n = img_ref[...] * inv_norm_ref[0, 0]
    img_features = jnp.tanh(mm(img_n, w_img_ref[...]) + b_img_ref[...])

    # ---- hoisted, time-invariant work ---------------------------------------
    # Embedding bias+tanh and the layer-1 input projection for ALL timesteps
    # as one big MXU matmul: [T*Bt, E] @ [E, 4H]  (bias b1 folded in here).
    emb = jnp.tanh(x_ref[...].reshape(T * Bt, E) + b_emb_ref[...])
    xg1 = mm(emb, w_ih1_ref[...]) + b1_ref[...]              # [T*Bt, 4H], f32

    # Hoist recurrent weights and the bias broadcast out of the loop (JAX does
    # not CSE broadcast_in_dim, so re-emitting it per step wastes VPU slots).
    w_hh1 = w_hh1_ref[...]
    w_ih2 = w_ih2_ref[...]
    w_hh2 = w_hh2_ref[...]
    b2b = jnp.broadcast_to(b2_ref[...], (Bt, 4 * H)).astype(f32)

    def lstm_gates(gates, c):
        # PyTorch gate order: i, f, g, o.  H is a multiple of 128 so these are
        # full-tile lane slices (no XLU relayout).
        i = jax.nn.sigmoid(gates[:, 0 * H:1 * H])
        f = jax.nn.sigmoid(gates[:, 1 * H:2 * H])
        g = jnp.tanh(gates[:, 2 * H:3 * H])
        o = jax.nn.sigmoid(gates[:, 3 * H:4 * H])
        c_new = f * c + i * g
        h_new = o * jnp.tanh(c_new)
        return h_new, c_new

    # ---- recurrence: fully unrolled static loop (T small & static) so the
    # scheduler can overlap MXU (h@W_hh), EUP (sigmoid/tanh) and VPU updates
    # across neighbouring steps. Only h @ W_hh work remains in the chain. -----
    zeros = jnp.zeros((Bt, H), f32)
    h1, c1, h2, c2 = zeros, zeros, zeros, zeros
    for t in range(T):
        # static, sublane-aligned slice of the precomputed projection
        g1 = xg1[t * Bt:(t + 1) * Bt, :] + mm(h1, w_hh1)
        h1, c1 = lstm_gates(g1, c1)
        g2 = mm(h1, w_ih2) + mm(h2, w_hh2) + b2b
        h2, c2 = lstm_gates(g2, c2)

    # hidden.transpose(0,1).view(B,-1) == [h1, h2]; same for cell;
    # q_embed = cat(hidden, cell) -> [Bt, 4H]   (128-tile-aligned concat).
    q_embed = jnp.concatenate([h1, h2, c1, c2], axis=1)
    ques_features = jnp.tanh(mm(q_embed, w_q_ref[...]) + b_q_ref[...])

    x = ques_features * img_features
    out_ref[...] = (mm(x, w_mlp_ref[...]) + b_mlp_ref[...]).astype(out_ref.dtype)


def deeper_lstm_forward(img, ques_tokens, q_lens, params, *, block_b=8):
    """DeeperLSTM forward.

    img         : [B, Dimg] f32 image features (raw_images=False path).
    ques_tokens : [B, T] int32 token ids — the one-hot question the module
                  feeds its embedding Linear, in index form
                  (Linear(one_hot(tok)) == W_emb[tok] + b_emb, done as a gather).
    q_lens      : [B] int32 lengths (only used for the descending sort, exactly
                  like the module: the LSTM still runs over all T steps).
    """
    B, Dimg = img.shape
    T = ques_tokens.shape[1]
    E = params["w_emb"].shape[1]
    Out = params["w_mlp"].shape[1]

    block_b = min(block_b, B)
    assert B % block_b == 0, "batch must be divisible by block_b"
    assert block_b % 8 == 0 or block_b == B, "batch tile must be sublane aligned"

    # -- glue, faithful to the torch forward (sort questions only) ------------
    order = jnp.argsort(-q_lens)
    toks = ques_tokens[order]                                  # [B, T]
    # embedding Linear on one-hot == row gather of W_emb; bias+tanh are fused
    # in-kernel with the hoisted W_ih1 projection.
    x_pre = jnp.take(params["w_emb"], toks, axis=0)            # [B, T, E]
    x_pre = jnp.transpose(x_pre, (1, 0, 2))                    # [T, B, E]
    # Global Frobenius norm (torch.norm(img, p=2) over the WHOLE tensor). It
    # couples the batch, so reduce it here and pass a single SMEM scalar.
    inv_norm = lax.rsqrt(jnp.sum(jnp.square(img.astype(jnp.float32))))
    inv_norm = inv_norm.reshape(1, 1)

    bf = lambda w: w.astype(jnp.bfloat16)        # matmul weights in bf16
    args = (
        inv_norm, x_pre, img,
        params["b_emb"],
        bf(params["w_ih1"]), bf(params["w_hh1"]), params["b1"],
        bf(params["w_ih2"]), bf(params["w_hh2"]), params["b2"],
        bf(params["w_img"]), params["b_img"],
        bf(params["w_q"]), params["b_q"],
        bf(params["w_mlp"]), params["b_mlp"],
    )

    def whole(a):  # full-array VMEM block, resident across all grid steps
        nd = a.ndim
        return pl.BlockSpec(a.shape, lambda b, nd=nd: (0,) * nd)

    in_specs = [
        pl.BlockSpec((1, 1), lambda b: (0, 0),
                     memory_space=pltpu.MemorySpace.SMEM),       # inv_norm
        pl.BlockSpec((T, block_b, E), lambda b: (0, b, 0)),      # x_pre
        pl.BlockSpec((block_b, Dimg), lambda b: (b, 0)),         # img
    ] + [whole(a) for a in args[3:]]

    out_specs = pl.BlockSpec((block_b, Out), lambda b: (b, 0))   # lane-dense

    return pl.pallas_call(
        deeper_lstm_kernel,
        out_shape=jax.ShapeDtypeStruct((B, Out), jnp.float32),
        grid=(B // block_b,),
        in_specs=in_specs,
        out_specs=out_specs,
        compiler_params=pltpu.CompilerParams(
            dimension_semantics=("parallel",),   # megacore: split batch tiles
        ),
    )(*args)


def reference_forward(img, ques_onehot, q_lens, params):
    """Pure-JAX f32 reference mirroring the PyTorch module's forward exactly."""
    order = jnp.argsort(-q_lens)
    ques = ques_onehot[order]                     # sort questions only
    B, T, _ = ques.shape
    H = params["w_hh1"].shape[0]

    emb = jnp.tanh(ques @ params["w_emb"] + params["b_emb"])   # [B, T, E]

    def cell(x, h, c, w_ih, w_hh, b):
        g = x @ w_ih + h @ w_hh + b
        i, f, gg, o = jnp.split(g, 4, axis=1)
        c = jax.nn.sigmoid(f) * c + jax.nn.sigmoid(i) * jnp.tanh(gg)
        h = jax.nn.sigmoid(o) * jnp.tanh(c)
        return h, c

    h1 = c1 = h2 = c2 = jnp.zeros((B, H), jnp.float32)
    for t in range(T):
        h1, c1 = cell(emb[:, t], h1, c1, params["w_ih1"], params["w_hh1"], params["b1"])
        h2, c2 = cell(h1, h2, c2, params["w_ih2"], params["w_hh2"], params["b2"])

    q_embed = jnp.concatenate([h1, h2, c1, c2], axis=1)
    img_n = img / jnp.sqrt(jnp.sum(img * img))
    img_f = jnp.tanh(img_n @ params["w_img"] + params["b_img"])
    q_f = jnp.tanh(q_embed @ params["w_q"] + params["b_q"])
    return (q_f * img_f) @ params["w_mlp"] + params["b_mlp"]


def init_params(key, vocab_size, embed_dim, image_dim, image_embed_dim,
                hidden_dim, rnn_output_dim, output_dim):
    """Deterministic synthetic init.  Linear weights are stored transposed
    ([in, out]) so the kernel computes x @ W."""
    H = hidden_dim
    ks = iter(jax.random.split(key, 16))

    def u(shape, a):
        return jax.random.uniform(next(ks), shape, jnp.float32, -a, a)

    lstm_a = 1.0 / (H ** 0.5)
    return {
        # embedding: Linear(vocab -> embed), uniform(-0.08, 0.08)
        "w_emb": u((vocab_size, embed_dim), 0.08),
        "b_emb": u((1, embed_dim), 0.08),
        # LSTM layer 1
        "w_ih1": u((embed_dim, 4 * H), lstm_a),
        "w_hh1": u((H, 4 * H), lstm_a),
        "b1":    u((1, 4 * H), lstm_a),          # b_ih + b_hh folded
        # LSTM layer 2
        "w_ih2": u((H, 4 * H), lstm_a),
        "w_hh2": u((H, 4 * H), lstm_a),
        "b2":    u((1, 4 * H), lstm_a),
        # image_embed: Linear(image_dim -> image_embed_dim)
        "w_img": u((image_dim, image_embed_dim), 0.08),
        "b_img": u((1, image_embed_dim), 0.08),
        # question_embed: Linear(2*num_layers*H -> rnn_output_dim)
        "w_q":   u((2 * 2 * H, rnn_output_dim), 0.08),
        "b_q":   u((1, rnn_output_dim), 0.08),
        # mlp: Linear(rnn_output_dim -> output_dim)
        "w_mlp": u((rnn_output_dim, output_dim), 0.08),
        "b_mlp": u((1, output_dim), 0.08),
    }


if __name__ == "__main__":
    # Small but lane-aligned shapes (multiples of (8, 128)) so gate slices,
    # the q_embed concat and the output store are full tiles.
    B, T = 16, 8
    vocab_size, embed_dim = 256, 128
    image_dim, image_embed_dim = 256, 128
    hidden_dim = 128
    rnn_output_dim = 128          # must equal image_embed_dim (elementwise prod)
    output_dim = 128

    key = jax.random.PRNGKey(0)
    k_img, k_tok, k_len, k_par = jax.random.split(key, 4)

    img = jax.random.normal(k_img, (B, image_dim), jnp.float32)
    tokens = jax.random.randint(k_tok, (B, T), 0, vocab_size).astype(jnp.int32)
    q_lens = jax.random.randint(k_len, (B,), 1, T + 1).astype(jnp.int32)

    params = init_params(k_par, vocab_size, embed_dim, image_dim,
                         image_embed_dim, hidden_dim, rnn_output_dim, output_dim)

    fwd = jax.jit(functools.partial(deeper_lstm_forward, block_b=8))
    out = jax.block_until_ready(fwd(img, tokens, q_lens, params))

    assert out.shape == (B, output_dim), out.shape
    assert bool(jnp.all(jnp.isfinite(out)))

    # pure-JAX f32 reference over the equivalent one-hot questions
    ques_onehot = jax.nn.one_hot(tokens, vocab_size, dtype=jnp.float32)
    ref = reference_forward(img, ques_onehot, q_lens, params)
    max_err = float(jnp.max(jnp.abs(out - ref)))
    assert max_err < 2e-2, max_err        # bf16-matmul tolerance

    print("KERNEL_OK")
</pallas_src>

<mosaic_0001>
module attributes {stable_mosaic.version = 11 : i64} {
  func.func @deeper_lstm_kernel(%arg0: i32, %arg1: memref<1x1xf32, #tpu.memory_space<smem>>, %arg2: memref<8x8x128xf32, #tpu.memory_space<vmem>>, %arg3: memref<8x256xf32, #tpu.memory_space<vmem>>, %arg4: memref<1x128xf32, #tpu.memory_space<vmem>>, %arg5: memref<128x512xbf16, #tpu.memory_space<vmem>>, %arg6: memref<128x512xbf16, #tpu.memory_space<vmem>>, %arg7: memref<1x512xf32, #tpu.memory_space<vmem>>, %arg8: memref<128x512xbf16, #tpu.memory_space<vmem>>, %arg9: memref<128x512xbf16, #tpu.memory_space<vmem>>, %arg10: memref<1x512xf32, #tpu.memory_space<vmem>>, %arg11: memref<256x128xbf16, #tpu.memory_space<vmem>>, %arg12: memref<1x128xf32, #tpu.memory_space<vmem>>, %arg13: memref<512x128xbf16, #tpu.memory_space<vmem>>, %arg14: memref<1x128xf32, #tpu.memory_space<vmem>>, %arg15: memref<128x128xbf16, #tpu.memory_space<vmem>>, %arg16: memref<1x128xf32, #tpu.memory_space<vmem>>, %arg17: memref<8x128xf32, #tpu.memory_space<vmem>>) attributes {dimension_semantics = [#tpu.dimension_semantics<parallel>], iteration_bounds = array<i64: 2>, scalar_prefetch = 0 : i64, scratch_operands = 0 : i64, tpu.core_type = #tpu.core_type<tc>, window_params = [{transform_indices = @transform_0, window_bounds = array<i64: 1, 1>}, {transform_indices = @transform_1, window_bounds = array<i64: 8, 8, 128>}, {transform_indices = @transform_2, window_bounds = array<i64: 8, 256>}, {pipeline_mode = #tpu.pipeline_mode<synchronous>, transform_indices = @transform_3, window_bounds = array<i64: 1, 128>}, {pipeline_mode = #tpu.pipeline_mode<synchronous>, transform_indices = @transform_4, window_bounds = array<i64: 128, 512>}, {pipeline_mode = #tpu.pipeline_mode<synchronous>, transform_indices = @transform_5, window_bounds = array<i64: 128, 512>}, {pipeline_mode = #tpu.pipeline_mode<synchronous>, transform_indices = @transform_6, window_bounds = array<i64: 1, 512>}, {pipeline_mode = #tpu.pipeline_mode<synchronous>, transform_indices = @transform_7, window_bounds = array<i64: 128, 512>}, {pipeline_mode = #tpu.pipeline_mode<synchronous>, transform_indices = @transform_8, window_bounds = array<i64: 128, 512>}, {pipeline_mode = #tpu.pipeline_mode<synchronous>, transform_indices = @transform_9, window_bounds = array<i64: 1, 512>}, {pipeline_mode = #tpu.pipeline_mode<synchronous>, transform_indices = @transform_10, window_bounds = array<i64: 256, 128>}, {pipeline_mode = #tpu.pipeline_mode<synchronous>, transform_indices = @transform_11, window_bounds = array<i64: 1, 128>}, {pipeline_mode = #tpu.pipeline_mode<synchronous>, transform_indices = @transform_12, window_bounds = array<i64: 512, 128>}, {pipeline_mode = #tpu.pipeline_mode<synchronous>, transform_indices = @transform_13, window_bounds = array<i64: 1, 128>}, {pipeline_mode = #tpu.pipeline_mode<synchronous>, transform_indices = @transform_14, window_bounds = array<i64: 128, 128>}, {pipeline_mode = #tpu.pipeline_mode<synchronous>, transform_indices = @transform_15, window_bounds = array<i64: 1, 128>}, {transform_indices = @transform_16, window_bounds = array<i64: 8, 128>}]} {
    %c0 = arith.constant 0 : index
    %c0_0 = arith.constant 0 : index
    %0 = vector.load %arg3[%c0, %c0_0] : memref<8x256xf32, #tpu.memory_space<vmem>>, vector<8x256xf32>
    %c0_1 = arith.constant 0 : index
    %c0_2 = arith.constant 0 : index
    %1 = memref.load %arg1[%c0_1, %c0_2] : memref<1x1xf32, #tpu.memory_space<smem>>
    %2 = vector.broadcast %1 : f32 to vector<8x256xf32>
    %3 = arith.mulf %0, %2 : vector<8x256xf32>
    %c0_3 = arith.constant 0 : index
    %c0_4 = arith.constant 0 : index
    %4 = vector.load %arg11[%c0_3, %c0_4] : memref<256x128xbf16, #tpu.memory_space<vmem>>, vector<256x128xbf16>
    %5 = arith.truncf %3 : vector<8x256xf32> to vector<8x256xbf16>
    %cst = arith.constant dense<0.000000e+00> : vector<8x128xf32>
    %6 = tpu.matmul %5, %4, %cst {dimension_numbers = #tpu.dot_dimension_numbers<[1], [0], [0], [1], [0, 0, 1, 1], [], []>} : vector<8x256xbf16>, vector<256x128xbf16>, vector<8x128xf32> -> vector<8x128xf32>
    %c0_5 = arith.constant 0 : index
    %c0_6 = arith.constant 0 : index
    %7 = vector.load %arg12[%c0_5, %c0_6] : memref<1x128xf32, #tpu.memory_space<vmem>>, vector<1x128xf32>
    %8 = vector.broadcast %7 : vector<1x128xf32> to vector<8x128xf32>
    %9 = arith.addf %6, %8 : vector<8x128xf32>
    %10 = math.tanh %9 : vector<8x128xf32>
    %c0_7 = arith.constant 0 : index
    %c0_8 = arith.constant 0 : index
    %c0_9 = arith.constant 0 : index
    %11 = vector.load %arg2[%c0_7, %c0_8, %c0_9] : memref<8x8x128xf32, #tpu.memory_space<vmem>>, vector<8x8x128xf32>
    %12 = vector.shape_cast %11 : vector<8x8x128xf32> to vector<64x128xf32>
    %c0_10 = arith.constant 0 : index
    %c0_11 = arith.constant 0 : index
    %13 = vector.load %arg4[%c0_10, %c0_11] : memref<1x128xf32, #tpu.memory_space<vmem>>, vector<1x128xf32>
    %14 = vector.broadcast %13 : vector<1x128xf32> to vector<64x128xf32>
    %15 = arith.addf %12, %14 : vector<64x128xf32>
    %16 = math.tanh %15 : vector<64x128xf32>
    %c0_12 = arith.constant 0 : index
    %c0_13 = arith.constant 0 : index
    %17 = vector.load %arg5[%c0_12, %c0_13] : memref<128x512xbf16, #tpu.memory_space<vmem>>, vector<128x512xbf16>
    %18 = arith.truncf %16 : vector<64x128xf32> to vector<64x128xbf16>
    %cst_14 = arith.constant dense<0.000000e+00> : vector<64x512xf32>
    %19 = tpu.matmul %18, %17, %cst_14 {dimension_numbers = #tpu.dot_dimension_numbers<[1], [0], [0], [1], [0, 0, 1, 1], [], []>} : vector<64x128xbf16>, vector<128x512xbf16>, vector<64x512xf32> -> vector<64x512xf32>
    %c0_15 = arith.constant 0 : index
    %c0_16 = arith.constant 0 : index
    %20 = vector.load %arg7[%c0_15, %c0_16] : memref<1x512xf32, #tpu.memory_space<vmem>>, vector<1x512xf32>
    %21 = vector.broadcast %20 : vector<1x512xf32> to vector<64x512xf32>
    %22 = arith.addf %19, %21 : vector<64x512xf32>
    %c0_17 = arith.constant 0 : index
    %c0_18 = arith.constant 0 : index
    %23 = vector.load %arg6[%c0_17, %c0_18] : memref<128x512xbf16, #tpu.memory_space<vmem>>, vector<128x512xbf16>
    %c0_19 = arith.constant 0 : index
    %c0_20 = arith.constant 0 : index
    %24 = vector.load %arg8[%c0_19, %c0_20] : memref<128x512xbf16, #tpu.memory_space<vmem>>, vector<128x512xbf16>
    %c0_21 = arith.constant 0 : index
    %c0_22 = arith.constant 0 : index
    %25 = vector.load %arg9[%c0_21, %c0_22] : memref<128x512xbf16, #tpu.memory_space<vmem>>, vector<128x512xbf16>
    %c0_23 = arith.constant 0 : index
    %c0_24 = arith.constant 0 : index
    %26 = vector.load %arg10[%c0_23, %c0_24] : memref<1x512xf32, #tpu.memory_space<vmem>>, vector<1x512xf32>
    %27 = vector.shape_cast %26 : vector<1x512xf32> to vector<1x512xf32>
    %28 = vector.broadcast %27 : vector<1x512xf32> to vector<8x512xf32>
    %cst_25 = arith.constant 0.000000e+00 : f32
    %29 = vector.broadcast %cst_25 : f32 to vector<8x128xf32>
    %30 = vector.extract_strided_slice %22 {offsets = [0, 0], sizes = [8, 512], strides = [1, 1]} : vector<64x512xf32> to vector<8x512xf32>
    %31 = arith.truncf %29 : vector<8x128xf32> to vector<8x128xbf16>
    %cst_26 = arith.constant dense<0.000000e+00> : vector<8x512xf32>
    %32 = tpu.matmul %31, %23, %cst_26 {dimension_numbers = #tpu.dot_dimension_numbers<[1], [0], [0], [1], [0, 0, 1, 1], [], []>} : vector<8x128xbf16>, vector<128x512xbf16>, vector<8x512xf32> -> vector<8x512xf32>
    %33 = arith.addf %30, %32 : vector<8x512xf32>
    %34 = vector.extract_strided_slice %33 {offsets = [0, 0], sizes = [8, 128], strides = [1, 1]} : vector<8x512xf32> to vector<8x128xf32>
    %35 = arith.negf %34 : vector<8x128xf32>
    %36 = math.exp %35 : vector<8x128xf32>
    %cst_27 = arith.constant 1.000000e+00 : f32
    %37 = vector.broadcast %cst_27 : f32 to vector<8x128xf32>
    %38 = arith.addf %37, %36 : vector<8x128xf32>
    %39 = arith.divf %37, %38 : vector<8x128xf32>
    %40 = vector.extract_strided_slice %33 {offsets = [0, 128], sizes = [8, 128], strides = [1, 1]} : vector<8x512xf32> to vector<8x128xf32>
    %41 = arith.negf %40 : vector<8x128xf32>
    %42 = math.exp %41 : vector<8x128xf32>
    %cst_28 = arith.constant 1.000000e+00 : f32
    %43 = vector.broadcast %cst_28 : f32 to vector<8x128xf32>
    %44 = arith.addf %43, %42 : vector<8x128xf32>
    %45 = arith.divf %43, %44 : vector<8x128xf32>
    %46 = vector.extract_strided_slice %33 {offsets = [0, 256], sizes = [8, 128], strides = [1, 1]} : vector<8x512xf32> to vector<8x128xf32>
    %47 = math.tanh %46 : vector<8x128xf32>
    %48 = vector.extract_strided_slice %33 {offsets = [0, 384], sizes = [8, 128], strides = [1, 1]} : vector<8x512xf32> to vector<8x128xf32>
    %49 = arith.negf %48 : vector<8x128xf32>
    %50 = math.exp %49 : vector<8x128xf32>
    %cst_29 = arith.constant 1.000000e+00 : f32
    %51 = vector.broadcast %cst_29 : f32 to vector<8x128xf32>
    %52 = arith.addf %51, %50 : vector<8x128xf32>
    %53 = arith.divf %51, %52 : vector<8x128xf32>
    %54 = arith.mulf %45, %29 : vector<8x128xf32>
    %55 = arith.mulf %39, %47 : vector<8x128xf32>
    %56 = arith.addf %54, %55 : vector<8x128xf32>
    %57 = math.tanh %56 : vector<8x128xf32>
    %58 = arith.mulf %53, %57 : vector<8x128xf32>
    %59 = arith.truncf %58 : vector<8x128xf32> to vector<8x128xbf16>
    %cst_30 = arith.constant dense<0.000000e+00> : vector<8x512xf32>
    %60 = tpu.matmul %59, %24, %cst_30 {dimension_numbers = #tpu.dot_dimension_numbers<[1], [0], [0], [1], [0, 0, 1, 1], [], []>} : vector<8x128xbf16>, vector<128x512xbf16>, vector<8x512xf32> -> vector<8x512xf32>
    %61 = arith.truncf %29 : vector<8x128xf32> to vector<8x128xbf16>
    %cst_31 = arith.constant dense<0.000000e+00> : vector<8x512xf32>
    %62 = tpu.matmul %61, %25, %cst_31 {dimension_numbers = #tpu.dot_dimension_numbers<[1], [0], [0], [1], [0, 0, 1, 1], [], []>} : vector<8x128xbf16>, vector<128x512xbf16>, vector<8x512xf32> -> vector<8x512xf32>
    %63 = arith.addf %60, %62 : vector<8x512xf32>
    %64 = arith.addf %63, %28 : vector<8x512xf32>
    %65 = vector.extract_strided_slice %64 {offsets = [0, 0], sizes = [8, 128], strides = [1, 1]} : vector<8x512xf32> to vector<8x128xf32>
    %66 = arith.negf %65 : vector<8x128xf32>
    %67 = math.exp %66 : vector<8x128xf32>
    %cst_32 = arith.constant 1.000000e+00 : f32
    %68 = vector.broadcast %cst_32 : f32 to vector<8x128xf32>
    %69 = arith.addf %68, %67 : vector<8x128xf32>
    %70 = arith.divf %68, %69 : vector<8x128xf32>
    %71 = vector.extract_strided_slice %64 {offsets = [0, 128], sizes = [8, 128], strides = [1, 1]} : vector<8x512xf32> to vector<8x128xf32>
    %72 = arith.negf %71 : vector<8x128xf32>
    %73 = math.exp %72 : vector<8x128xf32>
    %cst_33 = arith.constant 1.000000e+00 : f32
    %74 = vector.broadcast %cst_33 : f32 to vector<8x128xf32>
    %75 = arith.addf %74, %73 : vector<8x128xf32>
    %76 = arith.divf %74, %75 : vector<8x128xf32>
    %77 = vector.extract_strided_slice %64 {offsets = [0, 256], sizes = [8, 128], strides = [1, 1]} : vector<8x512xf32> to vector<8x128xf32>
    %78 = math.tanh %77 : vector<8x128xf32>
    %79 = vector.extract_strided_slice %64 {offsets = [0, 384], sizes = [8, 128], strides = [1, 1]} : vector<8x512xf32> to vector<8x128xf32>
    %80 = arith.negf %79 : vector<8x128xf32>
    %81 = math.exp %80 : vector<8x128xf32>
    %cst_34 = arith.constant 1.000000e+00 : f32
    %82 = vector.broadcast %cst_34 : f32 to vector<8x128xf32>
    %83 = arith.addf %82, %81 : vector<8x128xf32>
    %84 = arith.divf %82, %83 : vector<8x128xf32>
    %85 = arith.mulf %76, %29 : vector<8x128xf32>
    %86 = arith.mulf %70, %78 : vector<8x128xf32>
    %87 = arith.addf %85, %86 : vector<8x128xf32>
    %88 = math.tanh %87 : vector<8x128xf32>
    %89 = arith.mulf %84, %88 : vector<8x128xf32>
    %90 = vector.extract_strided_slice %22 {offsets = [8, 0], sizes = [8, 512], strides = [1, 1]} : vector<64x512xf32> to vector<8x512xf32>
    %91 = arith.truncf %58 : vector<8x128xf32> to vector<8x128xbf16>
    %cst_35 = arith.constant dense<0.000000e+00> : vector<8x512xf32>
    %92 = tpu.matmul %91, %23, %cst_35 {dimension_numbers = #tpu.dot_dimension_numbers<[1], [0], [0], [1], [0, 0, 1, 1], [], []>} : vector<8x128xbf16>, vector<128x512xbf16>, vector<8x512xf32> -> vector<8x512xf32>
    %93 = arith.addf %90, %92 : vector<8x512xf32>
    %94 = vector.extract_strided_slice %93 {offsets = [0, 0], sizes = [8, 128], strides = [1, 1]} : vector<8x512xf32> to vector<8x128xf32>
    %95 = arith.negf %94 : vector<8x128xf32>
    %96 = math.exp %95 : vector<8x128xf32>
    %cst_36 = arith.constant 1.000000e+00 : f32
    %97 = vector.broadcast %cst_36 : f32 to vector<8x128xf32>
    %98 = arith.addf %97, %96 : vector<8x128xf32>
    %99 = arith.divf %97, %98 : vector<8x128xf32>
    %100 = vector.extract_strided_slice %93 {offsets = [0, 128], sizes = [8, 128], strides = [1, 1]} : vector<8x512xf32> to vector<8x128xf32>
    %101 = arith.negf %100 : vector<8x128xf32>
    %102 = math.exp %101 : vector<8x128xf32>
    %cst_37 = arith.constant 1.000000e+00 : f32
    %103 = vector.broadcast %cst_37 : f32 to vector<8x128xf32>
    %104 = arith.addf %103, %102 : vector<8x128xf32>
    %105 = arith.divf %103, %104 : vector<8x128xf32>
    %106 = vector.extract_strided_slice %93 {offsets = [0, 256], sizes = [8, 128], strides = [1, 1]} : vector<8x512xf32> to vector<8x128xf32>
    %107 = math.tanh %106 : vector<8x128xf32>
    %108 = vector.extract_strided_slice %93 {offsets = [0, 384], sizes = [8, 128], strides = [1, 1]} : vector<8x512xf32> to vector<8x128xf32>
    %109 = arith.negf %108 : vector<8x128xf32>
    %110 = math.exp %109 : vector<8x128xf32>
    %cst_38 = arith.constant 1.000000e+00 : f32
    %111 = vector.broadcast %cst_38 : f32 to vector<8x128xf32>
    %112 = arith.addf %111, %110 : vector<8x128xf32>
    %113 = arith.divf %111, %112 : vector<8x128xf32>
    %114 = arith.mulf %105, %56 : vector<8x128xf32>
    %115 = arith.mulf %99, %107 : vector<8x128xf32>
    %116 = arith.addf %114, %115 : vector<8x128xf32>
    %117 = math.tanh %116 : vector<8x128xf32>
    %118 = arith.mulf %113, %117 : vector<8x128xf32>
    %119 = arith.truncf %118 : vector<8x128xf32> to vector<8x128xbf16>
    %cst_39 = arith.constant dense<0.000000e+00> : vector<8x512xf32>
    %120 = tpu.matmul %119, %24, %cst_39 {dimension_numbers = #tpu.dot_dimension_numbers<[1], [0], [0], [1], [0, 0, 1, 1], [], []>} : vector<8x128xbf16>, vector<128x512xbf16>, vector<8x512xf32> -> vector<8x512xf32>
    %121 = arith.truncf %89 : vector<8x128xf32> to vector<8x128xbf16>
    %cst_40 = arith.constant dense<0.000000e+00> : vector<8x512xf32>
    %122 = tpu.matmul %121, %25, %cst_40 {dimension_numbers = #tpu.dot_dimension_numbers<[1], [0], [0], [1], [0, 0, 1, 1], [], []>} : vector<8x128xbf16>, vector<128x512xbf16>, vector<8x512xf32> -> vector<8x512xf32>
    %123 = arith.addf %120, %122 : vector<8x512xf32>
    %124 = arith.addf %123, %28 : vector<8x512xf32>
    %125 = vector.extract_strided_slice %124 {offsets = [0, 0], sizes = [8, 128], strides = [1, 1]} : vector<8x512xf32> to vector<8x128xf32>
    %126 = arith.negf %125 : vector<8x128xf32>
    %127 = math.exp %126 : vector<8x128xf32>
    %cst_41 = arith.constant 1.000000e+00 : f32
    %128 = vector.broadcast %cst_41 : f32 to vector<8x128xf32>
    %129 = arith.addf %128, %127 : vector<8x128xf32>
    %130 = arith.divf %128, %129 : vector<8x128xf32>
    %131 = vector.extract_strided_slice %124 {offsets = [0, 128], sizes = [8, 128], strides = [1, 1]} : vector<8x512xf32> to vector<8x128xf32>
    %132 = arith.negf %131 : vector<8x128xf32>
    %133 = math.exp %132 : vector<8x128xf32>
    %cst_42 = arith.constant 1.000000e+00 : f32
    %134 = vector.broadcast %cst_42 : f32 to vector<8x128xf32>
    %135 = arith.addf %134, %133 : vector<8x128xf32>
    %136 = arith.divf %134, %135 : vector<8x128xf32>
    %137 = vector.extract_strided_slice %124 {offsets = [0, 256], sizes = [8, 128], strides = [1, 1]} : vector<8x512xf32> to vector<8x128xf32>
    %138 = math.tanh %137 : vector<8x128xf32>
    %139 = vector.extract_strided_slice %124 {offsets = [0, 384], sizes = [8, 128], strides = [1, 1]} : vector<8x512xf32> to vector<8x128xf32>
    %140 = arith.negf %139 : vector<8x128xf32>
    %141 = math.exp %140 : vector<8x128xf32>
    %cst_43 = arith.constant 1.000000e+00 : f32
    %142 = vector.broadcast %cst_43 : f32 to vector<8x128xf32>
    %143 = arith.addf %142, %141 : vector<8x128xf32>
    %144 = arith.divf %142, %143 : vector<8x128xf32>
    %145 = arith.mulf %136, %87 : vector<8x128xf32>
    %146 = arith.mulf %130, %138 : vector<8x128xf32>
    %147 = arith.addf %145, %146 : vector<8x128xf32>
    %148 = math.tanh %147 : vector<8x128xf32>
    %149 = arith.mulf %144, %148 : vector<8x128xf32>
    %150 = vector.extract_strided_slice %22 {offsets = [16, 0], sizes = [8, 512], strides = [1, 1]} : vector<64x512xf32> to vector<8x512xf32>
    %151 = arith.truncf %118 : vector<8x128xf32> to vector<8x128xbf16>
    %cst_44 = arith.constant dense<0.000000e+00> : vector<8x512xf32>
    %152 = tpu.matmul %151, %23, %cst_44 {dimension_numbers = #tpu.dot_dimension_numbers<[1], [0], [0], [1], [0, 0, 1, 1], [], []>} : vector<8x128xbf16>, vector<128x512xbf16>, vector<8x512xf32> -> vector<8x512xf32>
    %153 = arith.addf %150, %152 : vector<8x512xf32>
    %154 = vector.extract_strided_slice %153 {offsets = [0, 0], sizes = [8, 128], strides = [1, 1]} : vector<8x512xf32> to vector<8x128xf32>
    %155 = arith.negf %154 : vector<8x128xf32>
    %156 = math.exp %155 : vector<8x128xf32>
    %cst_45 = arith.constant 1.000000e+00 : f32
    %157 = vector.broadcast %cst_45 : f32 to vector<8x128xf32>
    %158 = arith.addf %157, %156 : vector<8x128xf32>
    %159 = arith.divf %157, %158 : vector<8x128xf32>
    %160 = vector.extract_strided_slice %153 {offsets = [0, 128], sizes = [8, 128], strides = [1, 1]} : vector<8x512xf32> to vector<8x128xf32>
    %161 = arith.negf %160 : vector<8x128xf32>
    %162 = math.exp %161 : vector<8x128xf32>
    %cst_46 = arith.constant 1.000000e+00 : f32
    %163 = vector.broadcast %cst_46 : f32 to vector<8x128xf32>
    %164 = arith.addf %163, %162 : vector<8x128xf32>
    %165 = arith.divf %163, %164 : vector<8x128xf32>
    %166 = vector.extract_strided_slice %153 {offsets = [0, 256], sizes = [8, 128], strides = [1, 1]} : vector<8x512xf32> to vector<8x128xf32>
    %167 = math.tanh %166 : vector<8x128xf32>
    %168 = vector.extract_strided_slice %153 {offsets = [0, 384], sizes = [8, 128], strides = [1, 1]} : vector<8x512xf32> to vector<8x128xf32>
    %169 = arith.negf %168 : vector<8x128xf32>
    %170 = math.exp %169 : vector<8x128xf32>
    %cst_47 = arith.constant 1.000000e+00 : f32
    %171 = vector.broadcast %cst_47 : f32 to vector<8x128xf32>
    %172 = arith.addf %171, %170 : vector<8x128xf32>
    %173 = arith.divf %171, %172 : vector<8x128xf32>
    %174 = arith.mulf %165, %116 : vector<8x128xf32>
    %175 = arith.mulf %159, %167 : vector<8x128xf32>
    %176 = arith.addf %174, %175 : vector<8x128xf32>
    %177 = math.tanh %176 : vector<8x128xf32>
    %178 = arith.mulf %173, %177 : vector<8x128xf32>
    %179 = arith.truncf %178 : vector<8x128xf32> to vector<8x128xbf16>
    %cst_48 = arith.constant dense<0.000000e+00> : vector<8x512xf32>
    %180 = tpu.matmul %179, %24, %cst_48 {dimension_numbers = #tpu.dot_dimension_numbers<[1], [0], [0], [1], [0, 0, 1, 1], [], []>} : vector<8x128xbf16>, vector<128x512xbf16>, vector<8x512xf32> -> vector<8x512xf32>
    %181 = arith.truncf %149 : vector<8x128xf32> to vector<8x128xbf16>
    %cst_49 = arith.constant dense<0.000000e+00> : vector<8x512xf32>
    %182 = tpu.matmul %181, %25, %cst_49 {dimension_numbers = #tpu.dot_dimension_numbers<[1], [0], [0], [1], [0, 0, 1, 1], [], []>} : vector<8x128xbf16>, vector<128x512xbf16>, vector<8x512xf32> -> vector<8x512xf32>
    %183 = arith.addf %180, %182 : vector<8x512xf32>
    %184 = arith.addf %183, %28 : vector<8x512xf32>
    %185 = vector.extract_strided_slice %184 {offsets = [0, 0], sizes = [8, 128], strides = [1, 1]} : vector<8x512xf32> to vector<8x128xf32>
    %186 = arith.negf %185 : vector<8x128xf32>
    %187 = math.exp %186 : vector<8x128xf32>
    %cst_50 = arith.constant 1.000000e+00 : f32
    %188 = vector.broadcast %cst_50 : f32 to vector<8x128xf32>
    %189 = arith.addf %188, %187 : vector<8x128xf32>
    %190 = arith.divf %188, %189 : vector<8x128xf32>
    %191 = vector.extract_strided_slice %184 {offsets = [0, 128], sizes = [8, 128], strides = [1, 1]} : vector<8x512xf32> to vector<8x128xf32>
    %192 = arith.negf %191 : vector<8x128xf32>
    %193 = math.exp %192 : vector<8x128xf32>
    %cst_51 = arith.constant 1.000000e+00 : f32
    %194 = vector.broadcast %cst_51 : f32 to vector<8x128xf32>
    %195 = arith.addf %194, %193 : vector<8x128xf32>
    %196 = arith.divf %194, %195 : vector<8x128xf32>
    %197 = vector.extract_strided_slice %184 {offsets = [0, 256], sizes = [8, 128], strides = [1, 1]} : vector<8x512xf32> to vector<8x128xf32>
    %198 = math.tanh %197 : vector<8x128xf32>
    %199 = vector.extract_strided_slice %184 {offsets = [0, 384], sizes = [8, 128], strides = [1, 1]} : vector<8x512xf32> to vector<8x128xf32>
    %200 = arith.negf %199 : vector<8x128xf32>
    %201 = math.exp %200 : vector<8x128xf32>
    %cst_52 = arith.constant 1.000000e+00 : f32
    %202 = vector.broadcast %cst_52 : f32 to vector<8x128xf32>
    %203 = arith.addf %202, %201 : vector<8x128xf32>
    %204 = arith.divf %202, %203 : vector<8x128xf32>
    %205 = arith.mulf %196, %147 : vector<8x128xf32>
    %206 = arith.mulf %190, %198 : vector<8x128xf32>
    %207 = arith.addf %205, %206 : vector<8x128xf32>
    %208 = math.tanh %207 : vector<8x128xf32>
    %209 = arith.mulf %204, %208 : vector<8x128xf32>
    %210 = vector.extract_strided_slice %22 {offsets = [24, 0], sizes = [8, 512], strides = [1, 1]} : vector<64x512xf32> to vector<8x512xf32>
    %211 = arith.truncf %178 : vector<8x128xf32> to vector<8x128xbf16>
    %cst_53 = arith.constant dense<0.000000e+00> : vector<8x512xf32>
    %212 = tpu.matmul %211, %23, %cst_53 {dimension_numbers = #tpu.dot_dimension_numbers<[1], [0], [0], [1], [0, 0, 1, 1], [], []>} : vector<8x128xbf16>, vector<128x512xbf16>, vector<8x512xf32> -> vector<8x512xf32>
    %213 = arith.addf %210, %212 : vector<8x512xf32>
    %214 = vector.extract_strided_slice %213 {offsets = [0, 0], sizes = [8, 128], strides = [1, 1]} : vector<8x512xf32> to vector<8x128xf32>
    %215 = arith.negf %214 : vector<8x128xf32>
    %216 = math.exp %215 : vector<8x128xf32>
    %cst_54 = arith.constant 1.000000e+00 : f32
    %217 = vector.broadcast %cst_54 : f32 to vector<8x128xf32>
    %218 = arith.addf %217, %216 : vector<8x128xf32>
    %219 = arith.divf %217, %218 : vector<8x128xf32>
    %220 = vector.extract_strided_slice %213 {offsets = [0, 128], sizes = [8, 128], strides = [1, 1]} : vector<8x512xf32> to vector<8x128xf32>
    %221 = arith.negf %220 : vector<8x128xf32>
    %222 = math.exp %221 : vector<8x128xf32>
    %cst_55 = arith.constant 1.000000e+00 : f32
    %223 = vector.broadcast %cst_55 : f32 to vector<8x128xf32>
    %224 = arith.addf %223, %222 : vector<8x128xf32>
    %225 = arith.divf %223, %224 : vector<8x128xf32>
    %226 = vector.extract_strided_slice %213 {offsets = [0, 256], sizes = [8, 128], strides = [1, 1]} : vector<8x512xf32> to vector<8x128xf32>
    %227 = math.tanh %226 : vector<8x128xf32>
    %228 = vector.extract_strided_slice %213 {offsets = [0, 384], sizes = [8, 128], strides = [1, 1]} : vector<8x512xf32> to vector<8x128xf32>
    %229 = arith.negf %228 : vector<8x128xf32>
    %230 = math.exp %229 : vector<8x128xf32>
    %cst_56 = arith.constant 1.000000e+00 : f32
    %231 = vector.broadcast %cst_56 : f32 to vector<8x128xf32>
    %232 = arith.addf %231, %230 : vector<8x128xf32>
    %233 = arith.divf %231, %232 : vector<8x128xf32>
    %234 = arith.mulf %225, %176 : vector<8x128xf32>
    %235 = arith.mulf %219, %227 : vector<8x128xf32>
    %236 = arith.addf %234, %235 : vector<8x128xf32>
    %237 = math.tanh %236 : vector<8x128xf32>
    %238 = arith.mulf %233, %237 : vector<8x128xf32>
    %239 = arith.truncf %238 : vector<8x128xf32> to vector<8x128xbf16>
    %cst_57 = arith.constant dense<0.000000e+00> : vector<8x512xf32>
    %240 = tpu.matmul %239, %24, %cst_57 {dimension_numbers = #tpu.dot_dimension_numbers<[1], [0], [0], [1], [0, 0, 1, 1], [], []>} : vector<8x128xbf16>, vector<128x512xbf16>, vector<8x512xf32> -> vector<8x512xf32>
    %241 = arith.truncf %209 : vector<8x128xf32> to vector<8x128xbf16>
    %cst_58 = arith.constant dense<0.000000e+00> : vector<8x512xf32>
    %242 = tpu.matmul %241, %25, %cst_58 {dimension_numbers = #tpu.dot_dimension_numbers<[1], [0], [0], [1], [0, 0, 1, 1], [], []>} : vector<8x128xbf16>, vector<128x512xbf16>, vector<8x512xf32> -> vector<8x512xf32>
    %243 = arith.addf %240, %242 : vector<8x512xf32>
    %244 = arith.addf %243, %28 : vector<8x512xf32>
    %245 = vector.extract_strided_slice %244 {offsets = [0, 0], sizes = [8, 128], strides = [1, 1]} : vector<8x512xf32> to vector<8x128xf32>
    %246 = arith.negf %245 : vector<8x128xf32>
    %247 = math.exp %246 : vector<8x128xf32>
    %cst_59 = arith.constant 1.000000e+00 : f32
    %248 = vector.broadcast %cst_59 : f32 to vector<8x128xf32>
    %249 = arith.addf %248, %247 : vector<8x128xf32>
    %250 = arith.divf %248, %249 : vector<8x128xf32>
    %251 = vector.extract_strided_slice %244 {offsets = [0, 128], sizes = [8, 128], strides = [1, 1]} : vector<8x512xf32> to vector<8x128xf32>
    %252 = arith.negf %251 : vector<8x128xf32>
    %253 = math.exp %252 : vector<8x128xf32>
    %cst_60 = arith.constant 1.000000e+00 : f32
    %254 = vector.broadcast %cst_60 : f32 to vector<8x128xf32>
    %255 = arith.addf %254, %253 : vector<8x128xf32>
    %256 = arith.divf %254, %255 : vector<8x128xf32>
    %257 = vector.extract_strided_slice %244 {offsets = [0, 256], sizes = [8, 128], strides = [1, 1]} : vector<8x512xf32> to vector<8x128xf32>
    %258 = math.tanh %257 : vector<8x128xf32>
    %259 = vector.extract_strided_slice %244 {offsets = [0, 384], sizes = [8, 128], strides = [1, 1]} : vector<8x512xf32> to vector<8x128xf32>
    %260 = arith.negf %259 : vector<8x128xf32>
    %261 = math.exp %260 : vector<8x128xf32>
    %cst_61 = arith.constant 1.000000e+00 : f32
    %262 = vector.broadcast %cst_61 : f32 to vector<8x128xf32>
    %263 = arith.addf %262, %261 : vector<8x128xf32>
    %264 = arith.divf %262, %263 : vector<8x128xf32>
    %265 = arith.mulf %256, %207 : vector<8x128xf32>
    %266 = arith.mulf %250, %258 : vector<8x128xf32>
    %267 = arith.addf %265, %266 : vector<8x128xf32>
    %268 = math.tanh %267 : vector<8x128xf32>
    %269 = arith.mulf %264, %268 : vector<8x128xf32>
    %270 = vector.extract_strided_slice %22 {offsets = [32, 0], sizes = [8, 512], strides = [1, 1]} : vector<64x512xf32> to vector<8x512xf32>
    %271 = arith.truncf %238 : vector<8x128xf32> to vector<8x128xbf16>
    %cst_62 = arith.constant dense<0.000000e+00> : vector<8x512xf32>
    %272 = tpu.matmul %271, %23, %cst_62 {dimension_numbers = #tpu.dot_dimension_numbers<[1], [0], [0], [1], [0, 0, 1, 1], [], []>} : vector<8x128xbf16>, vector<128x512xbf16>, vector<8x512xf32> -> vector<8x512xf32>
    %273 = arith.addf %270, %272 : vector<8x512xf32>
    %274 = vector.extract_strided_slice %273 {offsets = [0, 0], sizes = [8, 128], strides = [1, 1]} : vector<8x512xf32> to vector<8x128xf32>
    %275 = arith.negf %274 : vector<8x128xf32>
    %276 = math.exp %275 : vector<8x128xf32>
    %cst_63 = arith.constant 1.000000e+00 : f32
    %277 = vector.broadcast %cst_63 : f32 to vector<8x128xf32>
    %278 = arith.addf %277, %276 : vector<8x128xf32>
    %279 = arith.divf %277, %278 : vector<8x128xf32>
    %280 = vector.extract_strided_slice %273 {offsets = [0, 128], sizes = [8, 128], strides = [1, 1]} : vector<8x512xf32> to vector<8x128xf32>
    %281 = arith.negf %280 : vector<8x128xf32>
    %282 = math.exp %281 : vector<8x128xf32>
    %cst_64 = arith.constant 1.000000e+00 : f32
    %283 = vector.broadcast %cst_64 : f32 to vector<8x128xf32>
    %284 = arith.addf %283, %282 : vector<8x128xf32>
    %285 = arith.divf %283, %284 : vector<8x128xf32>
    %286 = vector.extract_strided_slice %273 {offsets = [0, 256], sizes = [8, 128], strides = [1, 1]} : vector<8x512xf32> to vector<8x128xf32>
    %287 = math.tanh %286 : vector<8x128xf32>
    %288 = vector.extract_strided_slice %273 {offsets = [0, 384], sizes = [8, 128], strides = [1, 1]} : vector<8x512xf32> to vector<8x128xf32>
    %289 = arith.negf %288 : vector<8x128xf32>
    %290 = math.exp %289 : vector<8x128xf32>
    %cst_65 = arith.constant 1.000000e+00 : f32
    %291 = vector.broadcast %cst_65 : f32 to vector<8x128xf32>
    %292 = arith.addf %291, %290 : vector<8x128xf32>
    %293 = arith.divf %291, %292 : vector<8x128xf32>
    %294 = arith.mulf %285, %236 : vector<8x128xf32>
    %295 = arith.mulf %279, %287 : vector<8x128xf32>
    %296 = arith.addf %294, %295 : vector<8x128xf32>
    %297 = math.tanh %296 : vector<8x128xf32>
    %298 = arith.mulf %293, %297 : vector<8x128xf32>
    %299 = arith.truncf %298 : vector<8x128xf32> to vector<8x128xbf16>
    %cst_66 = arith.constant dense<0.000000e+00> : vector<8x512xf32>
    %300 = tpu.matmul %299, %24, %cst_66 {dimension_numbers = #tpu.dot_dimension_numbers<[1], [0], [0], [1], [0, 0, 1, 1], [], []>} : vector<8x128xbf16>, vector<128x512xbf16>, vector<8x512xf32> -> vector<8x512xf32>
    %301 = arith.truncf %269 : vector<8x128xf32> to vector<8x128xbf16>
    %cst_67 = arith.constant dense<0.000000e+00> : vector<8x512xf32>
    %302 = tpu.matmul %301, %25, %cst_67 {dimension_numbers = #tpu.dot_dimension_numbers<[1], [0], [0], [1], [0, 0, 1, 1], [], []>} : vector<8x128xbf16>, vector<128x512xbf16>, vector<8x512xf32> -> vector<8x512xf32>
    %303 = arith.addf %300, %302 : vector<8x512xf32>
    %304 = arith.addf %303, %28 : vector<8x512xf32>
    %305 = vector.extract_strided_slice %304 {offsets = [0, 0], sizes = [8, 128], strides = [1, 1]} : vector<8x512xf32> to vector<8x128xf32>
    %306 = arith.negf %305 : vector<8x128xf32>
    %307 = math.exp %306 : vector<8x128xf32>
    %cst_68 = arith.constant 1.000000e+00 : f32
    %308 = vector.broadcast %cst_68 : f32 to vector<8x128xf32>
    %309 = arith.addf %308, %307 : vector<8x128xf32>
    %310 = arith.divf %308, %309 : vector<8x128xf32>
    %311 = vector.extract_strided_slice %304 {offsets = [0, 128], sizes = [8, 128], strides = [1, 1]} : vector<8x512xf32> to vector<8x128xf32>
    %312 = arith.negf %311 : vector<8x128xf32>
    %313 = math.exp %312 : vector<8x128xf32>
    %cst_69 = arith.constant 1.000000e+00 : f32
    %314 = vector.broadcast %cst_69 : f32 to vector<8x128xf32>
    %315 = arith.addf %314, %313 : vector<8x128xf32>
    %316 = arith.divf %314, %315 : vector<8x128xf32>
    %317 = vector.extract_strided_slice %304 {offsets = [0, 256], sizes = [8, 128], strides = [1, 1]} : vector<8x512xf32> to vector<8x128xf32>
    %318 = math.tanh %317 : vector<8x128xf32>
    %319 = vector.extract_strided_slice %304 {offsets = [0, 384], sizes = [8, 128], strides = [1, 1]} : vector<8x512xf32> to vector<8x128xf32>
    %320 = arith.negf %319 : vector<8x128xf32>
    %321 = math.exp %320 : vector<8x128xf32>
    %cst_70 = arith.constant 1.000000e+00 : f32
    %322 = vector.broadcast %cst_70 : f32 to vector<8x128xf32>
    %323 = arith.addf %322, %321 : vector<8x128xf32>
    %324 = arith.divf %322, %323 : vector<8x128xf32>
    %325 = arith.mulf %316, %267 : vector<8x128xf32>
    %326 = arith.mulf %310, %318 : vector<8x128xf32>
    %327 = arith.addf %325, %326 : vector<8x128xf32>
    %328 = math.tanh %327 : vector<8x128xf32>
    %329 = arith.mulf %324, %328 : vector<8x128xf32>
    %330 = vector.extract_strided_slice %22 {offsets = [40, 0], sizes = [8, 512], strides = [1, 1]} : vector<64x512xf32> to vector<8x512xf32>
    %331 = arith.truncf %298 : vector<8x128xf32> to vector<8x128xbf16>
    %cst_71 = arith.constant dense<0.000000e+00> : vector<8x512xf32>
    %332 = tpu.matmul %331, %23, %cst_71 {dimension_numbers = #tpu.dot_dimension_numbers<[1], [0], [0], [1], [0, 0, 1, 1], [], []>} : vector<8x128xbf16>, vector<128x512xbf16>, vector<8x512xf32> -> vector<8x512xf32>
    %333 = arith.addf %330, %332 : vector<8x512xf32>
    %334 = vector.extract_strided_slice %333 {offsets = [0, 0], sizes = [8, 128], strides = [1, 1]} : vector<8x512xf32> to vector<8x128xf32>
    %335 = arith.negf %334 : vector<8x128xf32>
    %336 = math.exp %335 : vector<8x128xf32>
    %cst_72 = arith.constant 1.000000e+00 : f32
    %337 = vector.broadcast %cst_72 : f32 to vector<8x128xf32>
    %338 = arith.addf %337, %336 : vector<8x128xf32>
    %339 = arith.divf %337, %338 : vector<8x128xf32>
    %340 = vector.extract_strided_slice %333 {offsets = [0, 128], sizes = [8, 128], strides = [1, 1]} : vector<8x512xf32> to vector<8x128xf32>
    %341 = arith.negf %340 : vector<8x128xf32>
    %342 = math.exp %341 : vector<8x128xf32>
    %cst_73 = arith.constant 1.000000e+00 : f32
    %343 = vector.broadcast %cst_73 : f32 to vector<8x128xf32>
    %344 = arith.addf %343, %342 : vector<8x128xf32>
    %345 = arith.divf %343, %344 : vector<8x128xf32>
    %346 = vector.extract_strided_slice %333 {offsets = [0, 256], sizes = [8, 128], strides = [1, 1]} : vector<8x512xf32> to vector<8x128xf32>
    %347 = math.tanh %346 : vector<8x128xf32>
    %348 = vector.extract_strided_slice %333 {offsets = [0, 384], sizes = [8, 128], strides = [1, 1]} : vector<8x512xf32> to vector<8x128xf32>
    %349 = arith.negf %348 : vector<8x128xf32>
    %350 = math.exp %349 : vector<8x128xf32>
    %cst_74 = arith.constant 1.000000e+00 : f32
    %351 = vector.broadcast %cst_74 : f32 to vector<8x128xf32>
    %352 = arith.addf %351, %350 : vector<8x128xf32>
    %353 = arith.divf %351, %352 : vector<8x128xf32>
    %354 = arith.mulf %345, %296 : vector<8x128xf32>
    %355 = arith.mulf %339, %347 : vector<8x128xf32>
    %356 = arith.addf %354, %355 : vector<8x128xf32>
    %357 = math.tanh %356 : vector<8x128xf32>
    %358 = arith.mulf %353, %357 : vector<8x128xf32>
    %359 = arith.truncf %358 : vector<8x128xf32> to vector<8x128xbf16>
    %cst_75 = arith.constant dense<0.000000e+00> : vector<8x512xf32>
    %360 = tpu.matmul %359, %24, %cst_75 {dimension_numbers = #tpu.dot_dimension_numbers<[1], [0], [0], [1], [0, 0, 1, 1], [], []>} : vector<8x128xbf16>, vector<128x512xbf16>, vector<8x512xf32> -> vector<8x512xf32>
    %361 = arith.truncf %329 : vector<8x128xf32> to vector<8x128xbf16>
    %cst_76 = arith.constant dense<0.000000e+00> : vector<8x512xf32>
    %362 = tpu.matmul %361, %25, %cst_76 {dimension_numbers = #tpu.dot_dimension_numbers<[1], [0], [0], [1], [0, 0, 1, 1], [], []>} : vector<8x128xbf16>, vector<128x512xbf16>, vector<8x512xf32> -> vector<8x512xf32>
    %363 = arith.addf %360, %362 : vector<8x512xf32>
    %364 = arith.addf %363, %28 : vector<8x512xf32>
    %365 = vector.extract_strided_slice %364 {offsets = [0, 0], sizes = [8, 128], strides = [1, 1]} : vector<8x512xf32> to vector<8x128xf32>
    %366 = arith.negf %365 : vector<8x128xf32>
    %367 = math.exp %366 : vector<8x128xf32>
    %cst_77 = arith.constant 1.000000e+00 : f32
    %368 = vector.broadcast %cst_77 : f32 to vector<8x128xf32>
    %369 = arith.addf %368, %367 : vector<8x128xf32>
    %370 = arith.divf %368, %369 : vector<8x128xf32>
    %371 = vector.extract_strided_slice %364 {offsets = [0, 128], sizes = [8, 128], strides = [1, 1]} : vector<8x512xf32> to vector<8x128xf32>
    %372 = arith.negf %371 : vector<8x128xf32>
    %373 = math.exp %372 : vector<8x128xf32>
    %cst_78 = arith.constant 1.000000e+00 : f32
    %374 = vector.broadcast %cst_78 : f32 to vector<8x128xf32>
    %375 = arith.addf %374, %373 : vector<8x128xf32>
    %376 = arith.divf %374, %375 : vector<8x128xf32>
    %377 = vector.extract_strided_slice %364 {offsets = [0, 256], sizes = [8, 128], strides = [1, 1]} : vector<8x512xf32> to vector<8x128xf32>
    %378 = math.tanh %377 : vector<8x128xf32>
    %379 = vector.extract_strided_slice %364 {offsets = [0, 384], sizes = [8, 128], strides = [1, 1]} : vector<8x512xf32> to vector<8x128xf32>
    %380 = arith.negf %379 : vector<8x128xf32>
    %381 = math.exp %380 : vector<8x128xf32>
    %cst_79 = arith.constant 1.000000e+00 : f32
    %382 = vector.broadcast %cst_79 : f32 to vector<8x128xf32>
    %383 = arith.addf %382, %381 : vector<8x128xf32>
    %384 = arith.divf %382, %383 : vector<8x128xf32>
    %385 = arith.mulf %376, %327 : vector<8x128xf32>
    %386 = arith.mulf %370, %378 : vector<8x128xf32>
    %387 = arith.addf %385, %386 : vector<8x128xf32>
    %388 = math.tanh %387 : vector<8x128xf32>
    %389 = arith.mulf %384, %388 : vector<8x128xf32>
    %390 = vector.extract_strided_slice %22 {offsets = [48, 0], sizes = [8, 512], strides = [1, 1]} : vector<64x512xf32> to vector<8x512xf32>
    %391 = arith.truncf %358 : vector<8x128xf32> to vector<8x128xbf16>
    %cst_80 = arith.constant dense<0.000000e+00> : vector<8x512xf32>
    %392 = tpu.matmul %391, %23, %cst_80 {dimension_numbers = #tpu.dot_dimension_numbers<[1], [0], [0], [1], [0, 0, 1, 1], [], []>} : vector<8x128xbf16>, vector<128x512xbf16>, vector<8x512xf32> -> vector<8x512xf32>
    %393 = arith.addf %390, %392 : vector<8x512xf32>
    %394 = vector.extract_strided_slice %393 {offsets = [0, 0], sizes = [8, 128], strides = [1, 1]} : vector<8x512xf32> to vector<8x128xf32>
    %395 = arith.negf %394 : vector<8x128xf32>
    %396 = math.exp %395 : vector<8x128xf32>
    %cst_81 = arith.constant 1.000000e+00 : f32
    %397 = vector.broadcast %cst_81 : f32 to vector<8x128xf32>
    %398 = arith.addf %397, %396 : vector<8x128xf32>
    %399 = arith.divf %397, %398 : vector<8x128xf32>
    %400 = vector.extract_strided_slice %393 {offsets = [0, 128], sizes = [8, 128], strides = [1, 1]} : vector<8x512xf32> to vector<8x128xf32>
    %401 = arith.negf %400 : vector<8x128xf32>
    %402 = math.exp %401 : vector<8x128xf32>
    %cst_82 = arith.constant 1.000000e+00 : f32
    %403 = vector.broadcast %cst_82 : f32 to vector<8x128xf32>
    %404 = arith.addf %403, %402 : vector<8x128xf32>
    %405 = arith.divf %403, %404 : vector<8x128xf32>
    %406 = vector.extract_strided_slice %393 {offsets = [0, 256], sizes = [8, 128], strides = [1, 1]} : vector<8x512xf32> to vector<8x128xf32>
    %407 = math.tanh %406 : vector<8x128xf32>
    %408 = vector.extract_strided_slice %393 {offsets = [0, 384], sizes = [8, 128], strides = [1, 1]} : vector<8x512xf32> to vector<8x128xf32>
    %409 = arith.negf %408 : vector<8x128xf32>
    %410 = math.exp %409 : vector<8x128xf32>
    %cst_83 = arith.constant 1.000000e+00 : f32
    %411 = vector.broadcast %cst_83 : f32 to vector<8x128xf32>
    %412 = arith.addf %411, %410 : vector<8x128xf32>
    %413 = arith.divf %411, %412 : vector<8x128xf32>
    %414 = arith.mulf %405, %356 : vector<8x128xf32>
    %415 = arith.mulf %399, %407 : vector<8x128xf32>
    %416 = arith.addf %414, %415 : vector<8x128xf32>
    %417 = math.tanh %416 : vector<8x128xf32>
    %418 = arith.mulf %413, %417 : vector<8x128xf32>
    %419 = arith.truncf %418 : vector<8x128xf32> to vector<8x128xbf16>
    %cst_84 = arith.constant dense<0.000000e+00> : vector<8x512xf32>
    %420 = tpu.matmul %419, %24, %cst_84 {dimension_numbers = #tpu.dot_dimension_numbers<[1], [0], [0], [1], [0, 0, 1, 1], [], []>} : vector<8x128xbf16>, vector<128x512xbf16>, vector<8x512xf32> -> vector<8x512xf32>
    %421 = arith.truncf %389 : vector<8x128xf32> to vector<8x128xbf16>
    %cst_85 = arith.constant dense<0.000000e+00> : vector<8x512xf32>
    %422 = tpu.matmul %421, %25, %cst_85 {dimension_numbers = #tpu.dot_dimension_numbers<[1], [0], [0], [1], [0, 0, 1, 1], [], []>} : vector<8x128xbf16>, vector<128x512xbf16>, vector<8x512xf32> -> vector<8x512xf32>
    %423 = arith.addf %420, %422 : vector<8x512xf32>
    %424 = arith.addf %423, %28 : vector<8x512xf32>
    %425 = vector.extract_strided_slice %424 {offsets = [0, 0], sizes = [8, 128], strides = [1, 1]} : vector<8x512xf32> to vector<8x128xf32>
    %426 = arith.negf %425 : vector<8x128xf32>
    %427 = math.exp %426 : vector<8x128xf32>
    %cst_86 = arith.constant 1.000000e+00 : f32
    %428 = vector.broadcast %cst_86 : f32 to vector<8x128xf32>
    %429 = arith.addf %428, %427 : vector<8x128xf32>
    %430 = arith.divf %428, %429 : vector<8x128xf32>
    %431 = vector.extract_strided_slice %424 {offsets = [0, 128], sizes = [8, 128], strides = [1, 1]} : vector<8x512xf32> to vector<8x128xf32>
    %432 = arith.negf %431 : vector<8x128xf32>
    %433 = math.exp %432 : vector<8x128xf32>
    %cst_87 = arith.constant 1.000000e+00 : f32
    %434 = vector.broadcast %cst_87 : f32 to vector<8x128xf32>
    %435 = arith.addf %434, %433 : vector<8x128xf32>
    %436 = arith.divf %434, %435 : vector<8x128xf32>
    %437 = vector.extract_strided_slice %424 {offsets = [0, 256], sizes = [8, 128], strides = [1, 1]} : vector<8x512xf32> to vector<8x128xf32>
    %438 = math.tanh %437 : vector<8x128xf32>
    %439 = vector.extract_strided_slice %424 {offsets = [0, 384], sizes = [8, 128], strides = [1, 1]} : vector<8x512xf32> to vector<8x128xf32>
    %440 = arith.negf %439 : vector<8x128xf32>
    %441 = math.exp %440 : vector<8x128xf32>
    %cst_88 = arith.constant 1.000000e+00 : f32
    %442 = vector.broadcast %cst_88 : f32 to vector<8x128xf32>
    %443 = arith.addf %442, %441 : vector<8x128xf32>
    %444 = arith.divf %442, %443 : vector<8x128xf32>
    %445 = arith.mulf %436, %387 : vector<8x128xf32>
    %446 = arith.mulf %430, %438 : vector<8x128xf32>
    %447 = arith.addf %445, %446 : vector<8x128xf32>
    %448 = math.tanh %447 : vector<8x128xf32>
    %449 = arith.mulf %444, %448 : vector<8x128xf32>
    %450 = vector.extract_strided_slice %22 {offsets = [56, 0], sizes = [8, 512], strides = [1, 1]} : vector<64x512xf32> to vector<8x512xf32>
    %451 = arith.truncf %418 : vector<8x128xf32> to vector<8x128xbf16>
    %cst_89 = arith.constant dense<0.000000e+00> : vector<8x512xf32>
    %452 = tpu.matmul %451, %23, %cst_89 {dimension_numbers = #tpu.dot_dimension_numbers<[1], [0], [0], [1], [0, 0, 1, 1], [], []>} : vector<8x128xbf16>, vector<128x512xbf16>, vector<8x512xf32> -> vector<8x512xf32>
    %453 = arith.addf %450, %452 : vector<8x512xf32>
    %454 = vector.extract_strided_slice %453 {offsets = [0, 0], sizes = [8, 128], strides = [1, 1]} : vector<8x512xf32> to vector<8x128xf32>
    %455 = arith.negf %454 : vector<8x128xf32>
    %456 = math.exp %455 : vector<8x128xf32>
    %cst_90 = arith.constant 1.000000e+00 : f32
    %457 = vector.broadcast %cst_90 : f32 to vector<8x128xf32>
    %458 = arith.addf %457, %456 : vector<8x128xf32>
    %459 = arith.divf %457, %458 : vector<8x128xf32>
    %460 = vector.extract_strided_slice %453 {offsets = [0, 128], sizes = [8, 128], strides = [1, 1]} : vector<8x512xf32> to vector<8x128xf32>
    %461 = arith.negf %460 : vector<8x128xf32>
    %462 = math.exp %461 : vector<8x128xf32>
    %cst_91 = arith.constant 1.000000e+00 : f32
    %463 = vector.broadcast %cst_91 : f32 to vector<8x128xf32>
    %464 = arith.addf %463, %462 : vector<8x128xf32>
    %465 = arith.divf %463, %464 : vector<8x128xf32>
    %466 = vector.extract_strided_slice %453 {offsets = [0, 256], sizes = [8, 128], strides = [1, 1]} : vector<8x512xf32> to vector<8x128xf32>
    %467 = math.tanh %466 : vector<8x128xf32>
    %468 = vector.extract_strided_slice %453 {offsets = [0, 384], sizes = [8, 128], strides = [1, 1]} : vector<8x512xf32> to vector<8x128xf32>
    %469 = arith.negf %468 : vector<8x128xf32>
    %470 = math.exp %469 : vector<8x128xf32>
    %cst_92 = arith.constant 1.000000e+00 : f32
    %471 = vector.broadcast %cst_92 : f32 to vector<8x128xf32>
    %472 = arith.addf %471, %470 : vector<8x128xf32>
    %473 = arith.divf %471, %472 : vector<8x128xf32>
    %474 = arith.mulf %465, %416 : vector<8x128xf32>
    %475 = arith.mulf %459, %467 : vector<8x128xf32>
    %476 = arith.addf %474, %475 : vector<8x128xf32>
    %477 = math.tanh %476 : vector<8x128xf32>
    %478 = arith.mulf %473, %477 : vector<8x128xf32>
    %479 = arith.truncf %478 : vector<8x128xf32> to vector<8x128xbf16>
    %cst_93 = arith.constant dense<0.000000e+00> : vector<8x512xf32>
    %480 = tpu.matmul %479, %24, %cst_93 {dimension_numbers = #tpu.dot_dimension_numbers<[1], [0], [0], [1], [0, 0, 1, 1], [], []>} : vector<8x128xbf16>, vector<128x512xbf16>, vector<8x512xf32> -> vector<8x512xf32>
    %481 = arith.truncf %449 : vector<8x128xf32> to vector<8x128xbf16>
    %cst_94 = arith.constant dense<0.000000e+00> : vector<8x512xf32>
    %482 = tpu.matmul %481, %25, %cst_94 {dimension_numbers = #tpu.dot_dimension_numbers<[1], [0], [0], [1], [0, 0, 1, 1], [], []>} : vector<8x128xbf16>, vector<128x512xbf16>, vector<8x512xf32> -> vector<8x512xf32>
    %483 = arith.addf %480, %482 : vector<8x512xf32>
    %484 = arith.addf %483, %28 : vector<8x512xf32>
    %485 = vector.extract_strided_slice %484 {offsets = [0, 0], sizes = [8, 128], strides = [1, 1]} : vector<8x512xf32> to vector<8x128xf32>
    %486 = arith.negf %485 : vector<8x128xf32>
    %487 = math.exp %486 : vector<8x128xf32>
    %cst_95 = arith.constant 1.000000e+00 : f32
    %488 = vector.broadcast %cst_95 : f32 to vector<8x128xf32>
    %489 = arith.addf %488, %487 : vector<8x128xf32>
    %490 = arith.divf %488, %489 : vector<8x128xf32>
    %491 = vector.extract_strided_slice %484 {offsets = [0, 128], sizes = [8, 128], strides = [1, 1]} : vector<8x512xf32> to vector<8x128xf32>
    %492 = arith.negf %491 : vector<8x128xf32>
    %493 = math.exp %492 : vector<8x128xf32>
    %cst_96 = arith.constant 1.000000e+00 : f32
    %494 = vector.broadcast %cst_96 : f32 to vector<8x128xf32>
    %495 = arith.addf %494, %493 : vector<8x128xf32>
    %496 = arith.divf %494, %495 : vector<8x128xf32>
    %497 = vector.extract_strided_slice %484 {offsets = [0, 256], sizes = [8, 128], strides = [1, 1]} : vector<8x512xf32> to vector<8x128xf32>
    %498 = math.tanh %497 : vector<8x128xf32>
    %499 = vector.extract_strided_slice %484 {offsets = [0, 384], sizes = [8, 128], strides = [1, 1]} : vector<8x512xf32> to vector<8x128xf32>
    %500 = arith.negf %499 : vector<8x128xf32>
    %501 = math.exp %500 : vector<8x128xf32>
    %cst_97 = arith.constant 1.000000e+00 : f32
    %502 = vector.broadcast %cst_97 : f32 to vector<8x128xf32>
    %503 = arith.addf %502, %501 : vector<8x128xf32>
    %504 = arith.divf %502, %503 : vector<8x128xf32>
    %505 = arith.mulf %496, %447 : vector<8x128xf32>
    %506 = arith.mulf %490, %498 : vector<8x128xf32>
    %507 = arith.addf %505, %506 : vector<8x128xf32>
    %508 = math.tanh %507 : vector<8x128xf32>
    %509 = arith.mulf %504, %508 : vector<8x128xf32>
    %510 = tpu.concatenate %478, %509, %476, %507 in 1 : vector<8x128xf32>, vector<8x128xf32>, vector<8x128xf32>, vector<8x128xf32> -> vector<8x512xf32>
    %c0_98 = arith.constant 0 : index
    %c0_99 = arith.constant 0 : index
    %511 = vector.load %arg13[%c0_98, %c0_99] : memref<512x128xbf16, #tpu.memory_space<vmem>>, vector<512x128xbf16>
    %512 = arith.truncf %510 : vector<8x512xf32> to vector<8x512xbf16>
    %cst_100 = arith.constant dense<0.000000e+00> : vector<8x128xf32>
    %513 = tpu.matmul %512, %511, %cst_100 {dimension_numbers = #tpu.dot_dimension_numbers<[1], [0], [0], [1], [0, 0, 1, 1], [], []>} : vector<8x512xbf16>, vector<512x128xbf16>, vector<8x128xf32> -> vector<8x128xf32>
    %c0_101 = arith.constant 0 : index
    %c0_102 = arith.constant 0 : index
    %514 = vector.load %arg14[%c0_101, %c0_102] : memref<1x128xf32, #tpu.memory_space<vmem>>, vector<1x128xf32>
    %515 = vector.broadcast %514 : vector<1x128xf32> to vector<8x128xf32>
    %516 = arith.addf %513, %515 : vector<8x128xf32>
    %517 = math.tanh %516 : vector<8x128xf32>
    %518 = arith.mulf %517, %10 : vector<8x128xf32>
    %c0_103 = arith.constant 0 : index
    %c0_104 = arith.constant 0 : index
    %519 = vector.load %arg15[%c0_103, %c0_104] : memref<128x128xbf16, #tpu.memory_space<vmem>>, vector<128x128xbf16>
    %520 = arith.truncf %518 : vector<8x128xf32> to vector<8x128xbf16>
    %cst_105 = arith.constant dense<0.000000e+00> : vector<8x128xf32>
    %521 = tpu.matmul %520, %519, %cst_105 {dimension_numbers = #tpu.dot_dimension_numbers<[1], [0], [0], [1], [0, 0, 1, 1], [], []>} : vector<8x128xbf16>, vector<128x128xbf16>, vector<8x128xf32> -> vector<8x128xf32>
    %c0_106 = arith.constant 0 : index
    %c0_107 = arith.constant 0 : index
    %522 = vector.load %arg16[%c0_106, %c0_107] : memref<1x128xf32, #tpu.memory_space<vmem>>, vector<1x128xf32>
    %523 = vector.broadcast %522 : vector<1x128xf32> to vector<8x128xf32>
    %524 = arith.addf %521, %523 : vector<8x128xf32>
    %c0_108 = arith.constant 0 : index
    %c0_109 = arith.constant 0 : index
    %525 = vector.load %arg17[%c0_108, %c0_109] : memref<8x128xf32, #tpu.memory_space<vmem>>, vector<8x128xf32>
    tpu.vector_store %arg17[%c0_108, %c0_109], %524 {strides = array<i32>} : memref<8x128xf32, #tpu.memory_space<vmem>>, vector<8x128xf32>,
    return
  }
  func.func @transform_0(%arg0: i32) -> (i32, i32) {
    %c0_i32 = arith.constant 0 : i32
    %c0_i32_0 = arith.constant 0 : i32
    %c0_i32_1 = arith.constant 0 : i32
    return %c0_i32, %c0_i32_0 : i32, i32
  }
  func.func @transform_1(%arg0: i32) -> (i32, i32, i32) {
    %c0_i32 = arith.constant 0 : i32
    %c0_i32_0 = arith.constant 0 : i32
    %c0_i32_1 = arith.constant 0 : i32
    return %c0_i32, %arg0, %c0_i32_0 : i32, i32, i32
  }
  func.func @transform_2(%arg0: i32) -> (i32, i32) {
    %c0_i32 = arith.constant 0 : i32
    %c0_i32_0 = arith.constant 0 : i32
    return %arg0, %c0_i32 : i32, i32
  }
  func.func @transform_3(%arg0: i32) -> (i32, i32) {
    %c0_i32 = arith.constant 0 : i32
    %c0_i32_0 = arith.constant 0 : i32
    %c0_i32_1 = arith.constant 0 : i32
    return %c0_i32, %c0_i32_0 : i32, i32
  }
  func.func @transform_4(%arg0: i32) -> (i32, i32) {
    %c0_i32 = arith.constant 0 : i32
    %c0_i32_0 = arith.constant 0 : i32
    %c0_i32_1 = arith.constant 0 : i32
    return %c0_i32, %c0_i32_0 : i32, i32
  }
  func.func @transform_5(%arg0: i32) -> (i32, i32) {
    %c0_i32 = arith.constant 0 : i32
    %c0_i32_0 = arith.constant 0 : i32
    %c0_i32_1 = arith.constant 0 : i32
    return %c0_i32, %c0_i32_0 : i32, i32
  }
  func.func @transform_6(%arg0: i32) -> (i32, i32) {
    %c0_i32 = arith.constant 0 : i32
    %c0_i32_0 = arith.constant 0 : i32
    %c0_i32_1 = arith.constant 0 : i32
    return %c0_i32, %c0_i32_0 : i32, i32
  }
  func.func @transform_7(%arg0: i32) -> (i32, i32) {
    %c0_i32 = arith.constant 0 : i32
    %c0_i32_0 = arith.constant 0 : i32
    %c0_i32_1 = arith.constant 0 : i32
    return %c0_i32, %c0_i32_0 : i32, i32
  }
  func.func @transform_8(%arg0: i32) -> (i32, i32) {
    %c0_i32 = arith.constant 0 : i32
    %c0_i32_0 = arith.constant 0 : i32
    %c0_i32_1 = arith.constant 0 : i32
    return %c0_i32, %c0_i32_0 : i32, i32
  }
  func.func @transform_9(%arg0: i32) -> (i32, i32) {
    %c0_i32 = arith.constant 0 : i32
    %c0_i32_0 = arith.constant 0 : i32
    %c0_i32_1 = arith.constant 0 : i32
    return %c0_i32, %c0_i32_0 : i32, i32
  }
  func.func @transform_10(%arg0: i32) -> (i32, i32) {
    %c0_i32 = arith.constant 0 : i32
    %c0_i32_0 = arith.constant 0 : i32
    %c0_i32_1 = arith.constant 0 : i32
    return %c0_i32, %c0_i32_0 : i32, i32
  }
  func.func @transform_11(%arg0: i32) -> (i32, i32) {
    %c0_i32 = arith.constant 0 : i32
    %c0_i32_0 = arith.constant 0 : i32
    %c0_i32_1 = arith.constant 0 : i32
    return %c0_i32, %c0_i32_0 : i32, i32
  }
  func.func @transform_12(%arg0: i32) -> (i32, i32) {
    %c0_i32 = arith.constant 0 : i32
    %c0_i32_0 = arith.constant 0 : i32
    %c0_i32_1 = arith.constant 0 : i32
    return %c0_i32, %c0_i32_0 : i32, i32
  }
  func.func @transform_13(%arg0: i32) -> (i32, i32) {
    %c0_i32 = arith.constant 0 : i32
    %c0_i32_0 = arith.constant 0 : i32
    %c0_i32_1 = arith.constant 0 : i32
    return %c0_i32, %c0_i32_0 : i32, i32
  }
  func.func @transform_14(%arg0: i32) -> (i32, i32) {
    %c0_i32 = arith.constant 0 : i32
    %c0_i32_0 = arith.constant 0 : i32
    %c0_i32_1 = arith.constant 0 : i32
    return %c0_i32, %c0_i32_0 : i32, i32
  }
  func.func @transform_15(%arg0: i32) -> (i32, i32) {
    %c0_i32 = arith.constant 0 : i32
    %c0_i32_0 = arith.constant 0 : i32
    %c0_i32_1 = arith.constant 0 : i32
    return %c0_i32, %c0_i32_0 : i32, i32
  }
  func.func @transform_16(%arg0: i32) -> (i32, i32) {
    %c0_i32 = arith.constant 0 : i32
    %c0_i32_0 = arith.constant 0 : i32
    return %arg0, %c0_i32 : i32, i32
  }
}

</mosaic_0001>

<llo_original>
// kernel: neg.1
$region0: #{neg.1}
  #allocation0 [shape = 's32[1]{0}', space=sflag, size = 0x4, scoped, tag = 'scoped memory for neg.1']
  %s0 = inlined_call_operand.vmem [shape: s32[16], index: 0, kind: input, shape index: {}]
  %s1 = inlined_call_operand.vmem [shape: s32[16], index: 1, kind: output, shape index: {}]
  %v2 = vld [vmem:[%s0] sm:$0x1]
  %3 = xla_tuple %v2
  %4 = xla_tuple %3
  %v5 = vsub.s32 0, %v2
  %6 = xla_tuple %v5
  %7 = vst [vmem:[%s1] sm:$0x1] %v5

// kernel: deeper_lstm_forward.1
$region0: #{deeper_lstm_forward.1}
  #allocation0 [shape = 'u32[]', space=smem, size = 0x4, offset = 0x4, fixed_abs, tag = 'smem constant byte address 0x4 - core index']
  #allocation1 [shape = 'u32[144,128]{1,0:T(1,128)}', space=vmem, size = 0x12000, scoped, tag = 'internal scratch']
  #allocation2 [shape = 'f32[1,1]{1,0:T(1,128)S(6)}', space=smem, size = 0x200, scoped, tag = 'scoped memory for deeper_lstm_forward.1']
  %s0 = inlined_call_operand.<no memory space> [shape: f32[1,1], index: 0, kind: input, shape index: {}]
  %s1 = inlined_call_operand.vmem [shape: f32[8,16,128], index: 1, kind: input, shape index: {}]
  %s2 = inlined_call_operand.vmem [shape: f32[16,256], index: 2, kind: input, shape index: {}]
  %s3 = inlined_call_operand.vmem [shape: f32[1,128], index: 3, kind: input, shape index: {}]
  %s4 = inlined_call_operand.vmem [shape: bf16[128,512], index: 4, kind: input, shape index: {}]
  %s5 = inlined_call_operand.vmem [shape: bf16[128,512], index: 5, kind: input, shape index: {}]
  %s6 = inlined_call_operand.vmem [shape: f32[1,512], index: 6, kind: input, shape index: {}]
  %s7 = inlined_call_operand.vmem [shape: bf16[128,512], index: 7, kind: input, shape index: {}]
  %s8 = inlined_call_operand.vmem [shape: bf16[128,512], index: 8, kind: input, shape index: {}]
  %s9 = inlined_call_operand.vmem [shape: f32[1,512], index: 9, kind: input, shape index: {}]
  %s10 = inlined_call_operand.vmem [shape: bf16[256,128], index: 10, kind: input, shape index: {}]
  %s11 = inlined_call_operand.vmem [shape: f32[1,128], index: 11, kind: input, shape index: {}]
  %s12 = inlined_call_operand.vmem [shape: bf16[512,128], index: 12, kind: input, shape index: {}]
  %s13 = inlined_call_operand.vmem [shape: f32[1,128], index: 13, kind: input, shape index: {}]
  %s14 = inlined_call_operand.vmem [shape: bf16[128,128], index: 14, kind: input, shape index: {}]
  %s15 = inlined_call_operand.vmem [shape: f32[1,128], index: 15, kind: input, shape index: {}]
  %s16 = inlined_call_operand.hbm [shape: f32[16,128], index: 16, kind: output, shape index: {}]
  %s17 = sld [smem:[#allocation0]]
  $region135: #{deeper_lstm_forward.1} parent=0
    _
  %s19 = ssub.s32 1, %s17
  %s20 = scalar_select 0, %s19, %s17
  %21 = sst [smem:[#allocation2]] %s0
  $region1: #{deeper_lstm_forward.1} parent=0
    #allocation3 [shape = 'u8[65536]{0}', space=vmem, size = 0x10000, scoped, tag = 'input window, operand 1']
    #allocation4 [shape = 'u8[8192]{0}', space=vmem, size = 0x2000, scoped, tag = 'output window, operand 0']
    #allocation5 [shape = 's32[2]{0}', space=sflag, size = 0x8, scoped, tag = 'scoped memory for deeper_lstm_forward.1']
    %22 = vsyncpa [#allocation5], 0
    %s23 = scalar_lea.sflag [#allocation5], 1
    %24 = vsyncpa %s23, 0
    loop: start=0, step=1, limit=4
    $region2: #{deeper_lstm_forward.1} parent=1 // loop_pre_header
      _
    $region3: #{deeper_lstm_forward.1} parent=1 // loop_header
      %s26 = sphi 0, %s30
      %p27 = scmp.ge.s32.totalorder %s26, 4
      %s34 = sphi 0, %s34
      %s36 = sphi 0, %s34
      %s37 = sphi 0, %s36
      %s51 = sphi 0, %s37
      %s57 = sphi 0, %s59
      %s60 = sphi 0, %s57
      %s61 = sphi 0, %s60
      %s77 = sphi 0, %s61
      %s83 = sphi 0, %s85
      %s86 = sphi 0, %s83
      %s87 = sphi 0, %s86
      %s103 = sphi 0, %s87
      %s107 = sphi 0, %s107
      %s109 = sphi 0, %s107
      %s110 = sphi 0, %s109
      %s124 = sphi 0, %s110
      %s128 = sphi 0, %s128
      %s130 = sphi 0, %s128
      %s131 = sphi 0, %s130
      %s145 = sphi 0, %s131
      %s149 = sphi 0, %s149
      %s151 = sphi 0, %s149
      %s152 = sphi 0, %s151
      %s166 = sphi 0, %s152
      %s170 = sphi 0, %s170
      %s172 = sphi 0, %s170
      %s173 = sphi 0, %s172
      %s187 = sphi 0, %s173
      %s191 = sphi 0, %s191
      %s193 = sphi 0, %s191
      %s194 = sphi 0, %s193
      %s208 = sphi 0, %s194
      %s212 = sphi 0, %s212
      %s214 = sphi 0, %s212
      %s215 = sphi 0, %s214
      %s229 = sphi 0, %s215
      %s233 = sphi 0, %s233
      %s235 = sphi 0, %s233
      %s236 = sphi 0, %s235
      %s250 = sphi 0, %s236
      %s254 = sphi 0, %s254
      %s256 = sphi 0, %s254
      %s257 = sphi 0, %s256
      %s271 = sphi 0, %s257
      %s275 = sphi 0, %s275
      %s277 = sphi 0, %s275
      %s278 = sphi 0, %s277
      %s292 = sphi 0, %s278
      %s296 = sphi 0, %s296
      %s298 = sphi 0, %s296
      %s299 = sphi 0, %s298
      %s313 = sphi 0, %s299
      %s317 = sphi 0, %s317
      %s319 = sphi 0, %s317
      %s320 = sphi 0, %s319
      %s334 = sphi 0, %s320
      %s338 = sphi 0, %s338
      %s340 = sphi 0, %s338
      %s341 = sphi 0, %s340
      %s355 = sphi 0, %s341
      %s359 = sphi 0, %s359
      %s361 = sphi 0, %s359
      %s362 = sphi 0, %s361
      %s376 = sphi 0, %s362
      %s382 = sphi 0, %s384
      %s385 = sphi 0, %s382
      %s386 = sphi 0, %s385
      %s402 = sphi 0, %s386
    $region4: #{deeper_lstm_forward.1} parent=1 // loop_header_branch
      %29 = sbr.rel (%p27) target = $region8
    $region5: #{deeper_lstm_forward.1} parent=1 // loop_body
      %s31 = ssub.s32 %s26, 1
      %s32 = ssub.s32 %s26, 2
      %s33 = sadd.s32 %s26, 1
      %s35 = sadd.s32 %s34, 1
      %p38 = scmp.eq.s32.totalorder %s26, 1
      %p39 = scmp.ne.s32.totalorder %s34, %s36
      %p40 = scmp.eq.s32.totalorder %s26, 0
      %p41 = por %p39, %p40
      %p42 = scmp.ne.s32.totalorder %s34, %s36
      %p43 = scmp.eq.s32.totalorder %s31, 1
      %p44 = por %p42, %p43
      %p45 = scmp.ne.s32.totalorder %s36, %s37
      %p46 = scmp.eq.s32.totalorder %s31, 0
      %p47 = por %p45, %p46
      %p48 = scmp.ne.s32.totalorder %s36, %s37
      %p49 = scmp.eq.s32.totalorder %s32, 1
      %p50 = por %p48, %p49
      %p52 = scmp.ne.s32.totalorder %s37, %s51
      %p53 = scmp.eq.s32.totalorder %s32, 0
      %p54 = por %p52, %p53
      %s55 = ssub.s32 %s26, %s33
      %p56 = scmp.eq.s32.totalorder %s55, 0
      %s58 = sadd.s32 %s57, 1
      %s59 = scalar_select %p56, %s57, %s58
      %p62 = pneg %p56
      %p63 = scmp.eq.s32.totalorder %s26, 1
      %p64 = por %p62, %p63
      %p65 = scmp.ne.s32.totalorder %s57, %s60
      %p66 = scmp.eq.s32.totalorder %s26, 0
      %p67 = por %p65, %p66
      %p68 = scmp.ne.s32.totalorder %s57, %s60
      %p69 = scmp.eq.s32.totalorder %s31, 1
      %p70 = por %p68, %p69
      %p71 = scmp.ne.s32.totalorder %s60, %s61
      %p72 = scmp.eq.s32.totalorder %s31, 0
      %p73 = por %p71, %p72
      %p74 = scmp.ne.s32.totalorder %s60, %s61
      %p75 = scmp.eq.s32.totalorder %s32, 1
      %p76 = por %p74, %p75
      %p78 = scmp.ne.s32.totalorder %s61, %s77
      %p79 = scmp.eq.s32.totalorder %s32, 0
      %p80 = por %p78, %p79
      %s81 = ssub.s32 %s26, %s33
      %p82 = scmp.eq.s32.totalorder %s81, 0
      %s84 = sadd.s32 %s83, 1
      %s85 = scalar_select %p82, %s83, %s84
      %p88 = pneg %p82
      %p89 = scmp.eq.s32.totalorder %s26, 1
      %p90 = por %p88, %p89
      %p91 = scmp.ne.s32.totalorder %s83, %s86
      %p92 = scmp.eq.s32.totalorder %s26, 0
      %p93 = por %p91, %p92
      %p94 = scmp.ne.s32.totalorder %s83, %s86
      %p95 = scmp.eq.s32.totalorder %s31, 1
      %p96 = por %p94, %p95
      %p97 = scmp.ne.s32.totalorder %s86, %s87
      %p98 = scmp.eq.s32.totalorder %s31, 0
      %p99 = por %p97, %p98
      %p100 = scmp.ne.s32.totalorder %s86, %s87
      %p101 = scmp.eq.s32.totalorder %s32, 1
      %p102 = por %p100, %p101
      %p104 = scmp.ne.s32.totalorder %s87, %s103
      %p105 = scmp.eq.s32.totalorder %s32, 0
      %p106 = por %p104, %p105
      %s108 = sadd.s32 %s107, 1
      %p111 = scmp.eq.s32.totalorder %s26, 1
      %p112 = scmp.ne.s32.totalorder %s107, %s109
      %p113 = scmp.eq.s32.totalorder %s26, 0
      %p114 = por %p112, %p113
      %p115 = scmp.ne.s32.totalorder %s107, %s109
      %p116 = scmp.eq.s32.totalorder %s31, 1
      %p117 = por %p115, %p116
      %p118 = scmp.ne.s32.totalorder %s109, %s110
      %p119 = scmp.eq.s32.totalorder %s31, 0
      %p120 = por %p118, %p119
      %p121 = scmp.ne.s32.totalorder %s109, %s110
      %p122 = scmp.eq.s32.totalorder %s32, 1
      %p123 = por %p121, %p122
      %p125 = scmp.ne.s32.totalorder %s110, %s124
      %p126 = scmp.eq.s32.totalorder %s32, 0
      %p127 = por %p125, %p126
      %s129 = sadd.s32 %s128, 1
      %p132 = scmp.eq.s32.totalorder %s26, 1
      %p133 = scmp.ne.s32.totalorder %s128, %s130
      %p134 = scmp.eq.s32.totalorder %s26, 0
      %p135 = por %p133, %p134
      %p136 = scmp.ne.s32.totalorder %s128, %s130
      %p137 = scmp.eq.s32.totalorder %s31, 1
      %p138 = por %p136, %p137
      %p139 = scmp.ne.s32.totalorder %s130, %s131
      %p140 = scmp.eq.s32.totalorder %s31, 0
      %p141 = por %p139, %p140
      %p142 = scmp.ne.s32.totalorder %s130, %s131
      %p143 = scmp.eq.s32.totalorder %s32, 1
      %p144 = por %p142, %p143
      %p146 = scmp.ne.s32.totalorder %s131, %s145
      %p147 = scmp.eq.s32.totalorder %s32, 0
      %p148 = por %p146, %p147
      %s150 = sadd.s32 %s149, 1
      %p153 = scmp.eq.s32.totalorder %s26, 1
      %p154 = scmp.ne.s32.totalorder %s149, %s151
      %p155 = scmp.eq.s32.totalorder %s26, 0
      %p156 = por %p154, %p155
      %p157 = scmp.ne.s32.totalorder %s149, %s151
      %p158 = scmp.eq.s32.totalorder %s31, 1
      %p159 = por %p157, %p158
      %p160 = scmp.ne.s32.totalorder %s151, %s152
      %p161 = scmp.eq.s32.totalorder %s31, 0
      %p162 = por %p160, %p161
      %p163 = scmp.ne.s32.totalorder %s151, %s152
      %p164 = scmp.eq.s32.totalorder %s32, 1
      %p165 = por %p163, %p164
      %p167 = scmp.ne.s32.totalorder %s152, %s166
      %p168 = scmp.eq.s32.totalorder %s32, 0
      %p169 = por %p167, %p168
      %s171 = sadd.s32 %s170, 1
      %p174 = scmp.eq.s32.totalorder %s26, 1
      %p175 = scmp.ne.s32.totalorder %s170, %s172
      %p176 = scmp.eq.s32.totalorder %s26, 0
      %p177 = por %p175, %p176
      %p178 = scmp.ne.s32.totalorder %s170, %s172
      %p179 = scmp.eq.s32.totalorder %s31, 1
      %p180 = por %p178, %p179
      %p181 = scmp.ne.s32.totalorder %s172, %s173
      %p182 = scmp.eq.s32.totalorder %s31, 0
      %p183 = por %p181, %p182
      %p184 = scmp.ne.s32.totalorder %s172, %s173
      %p185 = scmp.eq.s32.totalorder %s32, 1
      %p186 = por %p184, %p185
      %p188 = scmp.ne.s32.totalorder %s173, %s187
      %p189 = scmp.eq.s32.totalorder %s32, 0
      %p190 = por %p188, %p189
      %s192 = sadd.s32 %s191, 1
      %p195 = scmp.eq.s32.totalorder %s26, 1
      %p196 = scmp.ne.s32.totalorder %s191, %s193
      %p197 = scmp.eq.s32.totalorder %s26, 0
      %p198 = por %p196, %p197
      %p199 = scmp.ne.s32.totalorder %s191, %s193
      %p200 = scmp.eq.s32.totalorder %s31, 1
      %p201 = por %p199, %p200
      %p202 = scmp.ne.s32.totalorder %s193, %s194
      %p203 = scmp.eq.s32.totalorder %s31, 0
      %p204 = por %p202, %p203
      %p205 = scmp.ne.s32.totalorder %s193, %s194
      %p206 = scmp.eq.s32.totalorder %s32, 1
      %p207 = por %p205, %p206
      %p209 = scmp.ne.s32.totalorder %s194, %s208
      %p210 = scmp.eq.s32.totalorder %s32, 0
      %p211 = por %p209, %p210
      %s213 = sadd.s32 %s212, 1
      %p216 = scmp.eq.s32.totalorder %s26, 1
      %p217 = scmp.ne.s32.totalorder %s212, %s214
      %p218 = scmp.eq.s32.totalorder %s26, 0
      %p219 = por %p217, %p218
      %p220 = scmp.ne.s32.totalorder %s212, %s214
      %p221 = scmp.eq.s32.totalorder %s31, 1
      %p222 = por %p220, %p221
      %p223 = scmp.ne.s32.totalorder %s214, %s215
      %p224 = scmp.eq.s32.totalorder %s31, 0
      %p225 = por %p223, %p224
      %p226 = scmp.ne.s32.totalorder %s214, %s215
      %p227 = scmp.eq.s32.totalorder %s32, 1
      %p228 = por %p226, %p227
      %p230 = scmp.ne.s32.totalorder %s215, %s229
      %p231 = scmp.eq.s32.totalorder %s32, 0
      %p232 = por %p230, %p231
      %s234 = sadd.s32 %s233, 1
      %p237 = scmp.eq.s32.totalorder %s26, 1
      %p238 = scmp.ne.s32.totalorder %s233, %s235
      %p239 = scmp.eq.s32.totalorder %s26, 0
      %p240 = por %p238, %p239
      %p241 = scmp.ne.s32.totalorder %s233, %s235
      %p242 = scmp.eq.s32.totalorder %s31, 1
      %p243 = por %p241, %p242
      %p244 = scmp.ne.s32.totalorder %s235, %s236
      %p245 = scmp.eq.s32.totalorder %s31, 0
      %p246 = por %p244, %p245
      %p247 = scmp.ne.s32.totalorder %s235, %s236
      %p248 = scmp.eq.s32.totalorder %s32, 1
      %p249 = por %p247, %p248
      %p251 = scmp.ne.s32.totalorder %s236, %s250
      %p252 = scmp.eq.s32.totalorder %s32, 0
      %p253 = por %p251, %p252
      %s255 = sadd.s32 %s254, 1
      %p258 = scmp.eq.s32.totalorder %s26, 1
      %p259 = scmp.ne.s32.totalorder %s254, %s256
      %p260 = scmp.eq.s32.totalorder %s26, 0
      %p261 = por %p259, %p260
      %p262 = scmp.ne.s32.totalorder %s254, %s256
      %p263 = scmp.eq.s32.totalorder %s31, 1
      %p264 = por %p262, %p263
      %p265 = scmp.ne.s32.totalorder %s256, %s257
      %p266 = scmp.eq.s32.totalorder %s31, 0
      %p267 = por %p265, %p266
      %p268 = scmp.ne.s32.totalorder %s256, %s257
      %p269 = scmp.eq.s32.totalorder %s32, 1
      %p270 = por %p268, %p269
      %p272 = scmp.ne.s32.totalorder %s257, %s271
      %p273 = scmp.eq.s32.totalorder %s32, 0
      %p274 = por %p272, %p273
      %s276 = sadd.s32 %s275, 1
      %p279 = scmp.eq.s32.totalorder %s26, 1
      %p280 = scmp.ne.s32.totalorder %s275, %s277
      %p281 = scmp.eq.s32.totalorder %s26, 0
      %p282 = por %p280, %p281
      %p283 = scmp.ne.s32.totalorder %s275, %s277
      %p284 = scmp.eq.s32.totalorder %s31, 1
      %p285 = por %p283, %p284
      %p286 = scmp.ne.s32.totalorder %s277, %s278
      %p287 = scmp.eq.s32.totalorder %s31, 0
      %p288 = por %p286, %p287
      %p289 = scmp.ne.s32.totalorder %s277, %s278
      %p290 = scmp.eq.s32.totalorder %s32, 1
      %p291 = por %p289, %p290
      %p293 = scmp.ne.s32.totalorder %s278, %s292
      %p294 = scmp.eq.s32.totalorder %s32, 0
      %p295 = por %p293, %p294
      %s297 = sadd.s32 %s296, 1
      %p300 = scmp.eq.s32.totalorder %s26, 1
      %p301 = scmp.ne.s32.totalorder %s296, %s298
      %p302 = scmp.eq.s32.totalorder %s26, 0
      %p303 = por %p301, %p302
      %p304 = scmp.ne.s32.totalorder %s296, %s298
      %p305 = scmp.eq.s32.totalorder %s31, 1
      %p306 = por %p304, %p305
      %p307 = scmp.ne.s32.totalorder %s298, %s299
      %p308 = scmp.eq.s32.totalorder %s31, 0
      %p309 = por %p307, %p308
      %p310 = scmp.ne.s32.totalorder %s298, %s299
      %p311 = scmp.eq.s32.totalorder %s32, 1
      %p312 = por %p310, %p311
      %p314 = scmp.ne.s32.totalorder %s299, %s313
      %p315 = scmp.eq.s32.totalorder %s32, 0
      %p316 = por %p314, %p315
      %s318 = sadd.s32 %s317, 1
      %p321 = scmp.eq.s32.totalorder %s26, 1
      %p322 = scmp.ne.s32.totalorder %s317, %s319
      %p323 = scmp.eq.s32.totalorder %s26, 0
      %p324 = por %p322, %p323
      %p325 = scmp.ne.s32.totalorder %s317, %s319
      %p326 = scmp.eq.s32.totalorder %s31, 1
      %p327 = por %p325, %p326
      %p328 = scmp.ne.s32.totalorder %s319, %s320
      %p329 = scmp.eq.s32.totalorder %s31, 0
      %p330 = por %p328, %p329
      %p331 = scmp.ne.s32.totalorder %s319, %s320
      %p332 = scmp.eq.s32.totalorder %s32, 1
      %p333 = por %p331, %p332
      %p335 = scmp.ne.s32.totalorder %s320, %s334
      %p336 = scmp.eq.s32.totalorder %s32, 0
      %p337 = por %p335, %p336
      %s339 = sadd.s32 %s338, 1
      %p342 = scmp.eq.s32.totalorder %s26, 1
      %p343 = scmp.ne.s32.totalorder %s338, %s340
      %p344 = scmp.eq.s32.totalorder %s26, 0
      %p345 = por %p343, %p344
      %p346 = scmp.ne.s32.totalorder %s338, %s340
      %p347 = scmp.eq.s32.totalorder %s31, 1
      %p348 = por %p346, %p347
      %p349 = scmp.ne.s32.totalorder %s340, %s341
      %p350 = scmp.eq.s32.totalorder %s31, 0
      %p351 = por %p349, %p350
      %p352 = scmp.ne.s32.totalorder %s340, %s341
      %p353 = scmp.eq.s32.totalorder %s32, 1
      %p354 = por %p352, %p353
      %p356 = scmp.ne.s32.totalorder %s341, %s355
      %p357 = scmp.eq.s32.totalorder %s32, 0
      %p358 = por %p356, %p357
      %s360 = sadd.s32 %s359, 1
      %p363 = scmp.eq.s32.totalorder %s26, 1
      %p364 = scmp.ne.s32.totalorder %s359, %s361
      %p365 = scmp.eq.s32.totalorder %s26, 0
      %p366 = por %p364, %p365
      %p367 = scmp.ne.s32.totalorder %s359, %s361
      %p368 = scmp.eq.s32.totalorder %s31, 1
      %p369 = por %p367, %p368
      %p370 = scmp.ne.s32.totalorder %s361, %s362
      %p371 = scmp.eq.s32.totalorder %s31, 0
      %p372 = por %p370, %p371
      %p373 = scmp.ne.s32.totalorder %s361, %s362
      %p374 = scmp.eq.s32.totalorder %s32, 1
      %p375 = por %p373, %p374
      %p377 = scmp.ne.s32.totalorder %s362, %s376
      %p378 = scmp.eq.s32.totalorder %s32, 0
      %p379 = por %p377, %p378
      %s380 = ssub.s32 %s26, %s33
      %p381 = scmp.eq.s32.totalorder %s380, 0
      %s383 = sadd.s32 %s382, 1
      %s384 = scalar_select %p381, %s382, %s383
      %p387 = pneg %p381
      %p388 = scmp.eq.s32.totalorder %s26, 1
      %p389 = por %p387, %p388
      %p390 = scmp.ne.s32.totalorder %s382, %s385
      %p391 = scmp.eq.s32.totalorder %s26, 0
      %p392 = por %p390, %p391
      %p393 = scmp.ne.s32.totalorder %s382, %s385
      %p394 = scmp.eq.s32.totalorder %s31, 1
      %p395 = por %p393, %p394
      %p396 = scmp.ne.s32.totalorder %s385, %s386
      %p397 = scmp.eq.s32.totalorder %s31, 0
      %p398 = por %p396, %p397
      %p399 = scmp.ne.s32.totalorder %s385, %s386
      %p400 = scmp.eq.s32.totalorder %s32, 1
      %p401 = por %p399, %p400
      %p403 = scmp.ne.s32.totalorder %s386, %s402
      %p404 = scmp.eq.s32.totalorder %s32, 0
      %p405 = por %p403, %p404
      %p406 = scmp.le.s32.totalorder 1, %s26
      %p407 = scmp.lt.s32.totalorder %s26, 3
      %p408 = pnand %p406, %p407
      %p409 = pneg %p408
      // Predicated region
      $region9: #{deeper_lstm_forward.1} parent=5 // pred_check
        _
      $region10: #{deeper_lstm_forward.1} parent=5 // pred_check_branch
        %411 = sbr.rel (%p408) target = $region12
      $region11: #{deeper_lstm_forward.1} parent=5 // pred_region
        %s412 = ssub.s32 %s26, 1
        // Predicated region
        $region13: #{deeper_lstm_forward.1} parent=11 // pred_check
          %p413 = pneg %p47
        $region14: #{deeper_lstm_forward.1} parent=11 // pred_check_branch
          %415 = sbr.rel (%p413) target = $region16
        $region15: #{deeper_lstm_forward.1} parent=11 // pred_region
          _
        $region16: #{deeper_lstm_forward.1} parent=11 // pred_fallthru
          _
        // Predicated region
        $region17: #{deeper_lstm_forward.1} parent=11 // pred_check
          %p416 = pneg %p120
        $region18: #{deeper_lstm_forward.1} parent=11 // pred_check_branch
          %418 = sbr.rel (%p416) target = $region20
        $region19: #{deeper_lstm_forward.1} parent=11 // pred_region
          _
        $region20: #{deeper_lstm_forward.1} parent=11 // pred_fallthru
          _
        // Predicated region
        $region21: #{deeper_lstm_forward.1} parent=11 // pred_check
          %p419 = pneg %p141
        $region22: #{deeper_lstm_forward.1} parent=11 // pred_check_branch
          %421 = sbr.rel (%p419) target = $region24
        $region23: #{deeper_lstm_forward.1} parent=11 // pred_region
          _
        $region24: #{deeper_lstm_forward.1} parent=11 // pred_fallthru
          _
        // Predicated region
        $region25: #{deeper_lstm_forward.1} parent=11 // pred_check
          %p422 = pneg %p162
        $region26: #{deeper_lstm_forward.1} parent=11 // pred_check_branch
          %424 = sbr.rel (%p422) target = $region28
        $region27: #{deeper_lstm_forward.1} parent=11 // pred_region
          _
        $region28: #{deeper_lstm_forward.1} parent=11 // pred_fallthru
          _
        // Predicated region
        $region29: #{deeper_lstm_forward.1} parent=11 // pred_check
          %p425 = pneg %p183
        $region30: #{deeper_lstm_forward.1} parent=11 // pred_check_branch
          %427 = sbr.rel (%p425) target = $region32
        $region31: #{deeper_lstm_forward.1} parent=11 // pred_region
          _
        $region32: #{deeper_lstm_forward.1} parent=11 // pred_fallthru
          _
        // Predicated region
        $region33: #{deeper_lstm_forward.1} parent=11 // pred_check
          %p428 = pneg %p204
        $region34: #{deeper_lstm_forward.1} parent=11 // pred_check_branch
          %430 = sbr.rel (%p428) target = $region36
        $region35: #{deeper_lstm_forward.1} parent=11 // pred_region
          _
        $region36: #{deeper_lstm_forward.1} parent=11 // pred_fallthru
          _
        // Predicated region
        $region37: #{deeper_lstm_forward.1} parent=11 // pred_check
          %p431 = pneg %p225
        $region38: #{deeper_lstm_forward.1} parent=11 // pred_check_branch
          %433 = sbr.rel (%p431) target = $region40
        $region39: #{deeper_lstm_forward.1} parent=11 // pred_region
          _
        $region40: #{deeper_lstm_forward.1} parent=11 // pred_fallthru
          _
        // Predicated region
        $region41: #{deeper_lstm_forward.1} parent=11 // pred_check
          %p434 = pneg %p246
        $region42: #{deeper_lstm_forward.1} parent=11 // pred_check_branch
          %436 = sbr.rel (%p434) target = $region44
        $region43: #{deeper_lstm_forward.1} parent=11 // pred_region
          _
        $region44: #{deeper_lstm_forward.1} parent=11 // pred_fallthru
          _
        // Predicated region
        $region45: #{deeper_lstm_forward.1} parent=11 // pred_check
          %p437 = pneg %p267
        $region46: #{deeper_lstm_forward.1} parent=11 // pred_check_branch
          %439 = sbr.rel (%p437) target = $region48
        $region47: #{deeper_lstm_forward.1} parent=11 // pred_region
          _
        $region48: #{deeper_lstm_forward.1} parent=11 // pred_fallthru
          _
        // Predicated region
        $region49: #{deeper_lstm_forward.1} parent=11 // pred_check
          %p440 = pneg %p288
        $region50: #{deeper_lstm_forward.1} parent=11 // pred_check_branch
          %442 = sbr.rel (%p440) target = $region52
        $region51: #{deeper_lstm_forward.1} parent=11 // pred_region
          _
        $region52: #{deeper_lstm_forward.1} parent=11 // pred_fallthru
          _
        // Predicated region
        $region53: #{deeper_lstm_forward.1} parent=11 // pred_check
          %p443 = pneg %p309
        $region54: #{deeper_lstm_forward.1} parent=11 // pred_check_branch
          %445 = sbr.rel (%p443) target = $region56
        $region55: #{deeper_lstm_forward.1} parent=11 // pred_region
          _
        $region56: #{deeper_lstm_forward.1} parent=11 // pred_fallthru
          _
        // Predicated region
        $region57: #{deeper_lstm_forward.1} parent=11 // pred_check
          %p446 = pneg %p330
        $region58: #{deeper_lstm_forward.1} parent=11 // pred_check_branch
          %448 = sbr.rel (%p446) target = $region60
        $region59: #{deeper_lstm_forward.1} parent=11 // pred_region
          _
        $region60: #{deeper_lstm_forward.1} parent=11 // pred_fallthru
          _
        // Predicated region
        $region61: #{deeper_lstm_forward.1} parent=11 // pred_check
          %p449 = pneg %p351
        $region62: #{deeper_lstm_forward.1} parent=11 // pred_check_branch
          %451 = sbr.rel (%p449) target = $region64
        $region63: #{deeper_lstm_forward.1} parent=11 // pred_region
          _
        $region64: #{deeper_lstm_forward.1} parent=11 // pred_fallthru
          _
        // Predicated region
        $region65: #{deeper_lstm_forward.1} parent=11 // pred_check
          %p452 = pneg %p372
        $region66: #{deeper_lstm_forward.1} parent=11 // pred_check_branch
          %454 = sbr.rel (%p452) target = $region68
        $region67: #{deeper_lstm_forward.1} parent=11 // pred_region
          _
        $region68: #{deeper_lstm_forward.1} parent=11 // pred_fallthru
          _
      $region12: #{deeper_lstm_forward.1} parent=5 // pred_fallthru
        _
      %p455 = scmp.lt.s32.totalorder %s26, 2
      // Predicated region
      $region69: #{deeper_lstm_forward.1} parent=5 // pred_check
        %p456 = pneg %p455
      $region70: #{deeper_lstm_forward.1} parent=5 // pred_check_branch
        %458 = sbr.rel (%p456) target = $region72
      $region71: #{deeper_lstm_forward.1} parent=5 // pred_region
        // Predicated region
        $region73: #{deeper_lstm_forward.1} parent=71 // pred_check
          %p459 = pneg %p67
        $region74: #{deeper_lstm_forward.1} parent=71 // pred_check_branch
          %461 = sbr.rel (%p459) target = $region76
        $region75: #{deeper_lstm_forward.1} parent=71 // pred_region
          %s462 = sand.u32 %s57, 1
          %s463 = sand.u32 %s57, 1
          %s464 = smul.addr %s463, 64
          %s465 = scalar_lea.vmem [#allocation3], %s464
          %s466 = smul.addr %s26, 8
          %s467 = scalar_lea.vmem %s1, %s466
          // Predicated region
          $region77: #{deeper_lstm_forward.1} parent=75 // pred_check
            _
          $region78: #{deeper_lstm_forward.1} parent=75 // pred_check_branch
            %469 = sbr.rel (0) target = $region80
          $region79: #{deeper_lstm_forward.1} parent=75 // pred_region
            // Predicated region
            $region81: #{deeper_lstm_forward.1} parent=79 // pred_check
              _
            $region82: #{deeper_lstm_forward.1} parent=79 // pred_check_branch
              %471 = sbr.rel (0) target = $region84
            $region83: #{deeper_lstm_forward.1} parent=79 // pred_region
              // Predicated region
              $region96: #{deeper_lstm_forward.1} parent=83 // pred_check
                _
              $region97: #{deeper_lstm_forward.1} parent=83 // pred_check_branch
                %500 = sbr.rel (0) target = $region99
              $region98: #{deeper_lstm_forward.1} parent=83 // pred_region
                loop: start=0, step=1, limit=1
                $region100: #{deeper_lstm_forward.1} parent=98 // loop_pre_header
                  _
                $region101: #{deeper_lstm_forward.1} parent=98 // loop_header
                  %s502 = sphi 0, %s506
                  %p503 = scmp.ge.s32.totalorder %s502, 1
                  %s507 = sphi %s467, %s467
                  %s508 = sphi %s465, %s465
                $region102: #{deeper_lstm_forward.1} parent=98 // loop_header_branch
                  %505 = sbr.rel (%p503) target = $region106
                $region103: #{deeper_lstm_forward.1} parent=98 // loop_body
                  %v509 = vld [vmem:[%s507] sm:$0xff]
                  %510 = vst [vmem:[%s508] sm:$0xff] %v509
                  %v511 = vld [vmem:[%s507 + $0x10] sm:$0xff]
                  %512 = vst [vmem:[%s508 + $0x8] sm:$0xff] %v511
                  %v513 = vld [vmem:[%s507 + $0x20] sm:$0xff]
                  %514 = vst [vmem:[%s508 + $0x10] sm:$0xff] %v513
                  %v515 = vld [vmem:[%s507 + $0x30] sm:$0xff]
                  %516 = vst [vmem:[%s508 + $0x18] sm:$0xff] %v515
                  %v517 = vld [vmem:[%s507 + $0x40] sm:$0xff]
                  %518 = vst [vmem:[%s508 + $0x20] sm:$0xff] %v517
                  %v519 = vld [vmem:[%s507 + $0x50] sm:$0xff]
                  %520 = vst [vmem:[%s508 + $0x28] sm:$0xff] %v519
                  %v521 = vld [vmem:[%s507 + $0x60] sm:$0xff]
                  %522 = vst [vmem:[%s508 + $0x30] sm:$0xff] %v521
                  %v523 = vld [vmem:[%s507 + $0x70] sm:$0xff]
                  %524 = vst [vmem:[%s508 + $0x38] sm:$0xff] %v523
                $region104: #{deeper_lstm_forward.1} parent=98 // loop_footer
                  %s506 = sadd.s32 1, %s502
                $region105: #{deeper_lstm_forward.1} parent=98 // loop_footer_branch
                  %501 = sbr.rel target = $region101
                $region106: #{deeper_lstm_forward.1} parent=98 // loop_exit
                  _
              $region99: #{deeper_lstm_forward.1} parent=83 // pred_fallthru
                _
              // Predicated region
              $region107: #{deeper_lstm_forward.1} parent=83 // pred_check
                _
              $region108: #{deeper_lstm_forward.1} parent=83 // pred_check_branch
                %526 = sbr.rel target = $region110
              $region109: #{deeper_lstm_forward.1} parent=83 // pred_region
                _
              $region110: #{deeper_lstm_forward.1} parent=83 // pred_fallthru
                _
            $region84: #{deeper_lstm_forward.1} parent=79 // pred_fallthru
              _
            // Predicated region
            $region85: #{deeper_lstm_forward.1} parent=79 // pred_check
              _
            $region86: #{deeper_lstm_forward.1} parent=79 // pred_check_branch
              %473 = sbr.rel target = $region88
            $region87: #{deeper_lstm_forward.1} parent=79 // pred_region
              loop: start=0, step=1, limit=1
              $region89: #{deeper_lstm_forward.1} parent=87 // loop_pre_header
                _
              $region90: #{deeper_lstm_forward.1} parent=87 // loop_header
                %s476 = sphi 0, %s480
                %p477 = scmp.ge.s32.totalorder %s476, 1
                %s481 = sphi %s467, %s467
                %s482 = sphi %s465, %s465
              $region91: #{deeper_lstm_forward.1} parent=87 // loop_header_branch
                %479 = sbr.rel (%p477) target = $region95
              $region92: #{deeper_lstm_forward.1} parent=87 // loop_body
                %v483 = vld [vmem:[%s481] sm:$0xff]
                %484 = vst [vmem:[%s482] sm:$0xff] %v483
                %v485 = vld [vmem:[%s481 + $0x10] sm:$0xff]
                %486 = vst [vmem:[%s482 + $0x8] sm:$0xff] %v485
                %v487 = vld [vmem:[%s481 + $0x20] sm:$0xff]
                %488 = vst [vmem:[%s482 + $0x10] sm:$0xff] %v487
                %v489 = vld [vmem:[%s481 + $0x30] sm:$0xff]
                %490 = vst [vmem:[%s482 + $0x18] sm:$0xff] %v489
                %v491 = vld [vmem:[%s481 + $0x40] sm:$0xff]
                %492 = vst [vmem:[%s482 + $0x20] sm:$0xff] %v491
                %v493 = vld [vmem:[%s481 + $0x50] sm:$0xff]
                %494 = vst [vmem:[%s482 + $0x28] sm:$0xff] %v493
                %v495 = vld [vmem:[%s481 + $0x60] sm:$0xff]
                %496 = vst [vmem:[%s482 + $0x30] sm:$0xff] %v495
                %v497 = vld [vmem:[%s481 + $0x70] sm:$0xff]
                %498 = vst [vmem:[%s482 + $0x38] sm:$0xff] %v497
              $region93: #{deeper_lstm_forward.1} parent=87 // loop_footer
                %s480 = sadd.s32 1, %s476
              $region94: #{deeper_lstm_forward.1} parent=87 // loop_footer_branch
                %475 = sbr.rel target = $region90
              $region95: #{deeper_lstm_forward.1} parent=87 // loop_exit
                _
            $region88: #{deeper_lstm_forward.1} parent=79 // pred_fallthru
              _
          $region80: #{deeper_lstm_forward.1} parent=75 // pred_fallthru
            _
          %527 = vnop
        $region76: #{deeper_lstm_forward.1} parent=71 // pred_fallthru
          _
        // Predicated region
        $region111: #{deeper_lstm_forward.1} parent=71 // pred_check
          %p528 = pneg %p93
        $region112: #{deeper_lstm_forward.1} parent=71 // pred_check_branch
          %530 = sbr.rel (%p528) target = $region114
        $region113: #{deeper_lstm_forward.1} parent=71 // pred_region
          %p531 = scmp.lt.s32.totalorder %s26, 1
          %s532 = scalar_select %p531, %s26, 1
          %s533 = smul.addr %s532, 2
          %s534 = smul.addr %s533, 8
          %s535 = scalar_lea.vmem %s2, %s534
        $region114: #{deeper_lstm_forward.1} parent=71 // pred_fallthru
          _
      $region72: #{deeper_lstm_forward.1} parent=5 // pred_fallthru
        _
      %p536 = scmp.le.s32.totalorder 1, %s26
      %p537 = scmp.lt.s32.totalorder %s26, 3
      %p538 = pnand %p536, %p537
      %p539 = pneg %p538
      // Predicated region
      $region115: #{deeper_lstm_forward.1} parent=5 // pred_check
        _
      $region116: #{deeper_lstm_forward.1} parent=5 // pred_check_branch
        %541 = sbr.rel (%p538) target = $region118
      $region117: #{deeper_lstm_forward.1} parent=5 // pred_region
        %s542 = ssub.s32 %s26, 1
        %s543 = sand.u32 %s60, 1
        %s544 = sand.u32 %s60, 1
        %s545 = smul.addr %s544, 64
        %s546 = scalar_lea.vmem [#allocation3], %s545
        // Predicated region
        $region119: #{deeper_lstm_forward.1} parent=117 // pred_check
          %p547 = pneg %p73
        $region120: #{deeper_lstm_forward.1} parent=117 // pred_check_branch
          %549 = sbr.rel (%p547) target = $region122
        $region121: #{deeper_lstm_forward.1} parent=117 // pred_region
          _
        $region122: #{deeper_lstm_forward.1} parent=117 // pred_fallthru
          _
        %p550 = pneg %p47
        %p551 = pneg %p44
        %s552 = sand.u32 %s60, 1
        %s553 = sand.u32 %s60, 1
        %s554 = smul.addr %s553, 64
        %s555 = scalar_lea.vmem [#allocation3], %s554
        %p556 = pneg %p73
        %p557 = pneg %p70
        %p558 = scmp.lt.s32.totalorder %s31, 1
        %s559 = scalar_select %p558, %s31, 1
        %s560 = smul.addr %s559, 2
        %s561 = smul.addr %s560, 8
        %s562 = scalar_lea.vmem %s2, %s561
        %p563 = pneg %p99
        %p564 = pneg %p96
        %p565 = pneg %p120
        %p566 = pneg %p117
        %p567 = pneg %p141
        %p568 = pneg %p138
        %p569 = pneg %p162
        %p570 = pneg %p159
        %p571 = pneg %p183
        %p572 = pneg %p180
        %p573 = pneg %p204
        %p574 = pneg %p201
        %p575 = pneg %p225
        %p576 = pneg %p222
        %p577 = pneg %p246
        %p578 = pneg %p243
        %p579 = pneg %p267
        %p580 = pneg %p264
        %p581 = pneg %p288
        %p582 = pneg %p285
        %p583 = pneg %p309
        %p584 = pneg %p306
        %p585 = pneg %p330
        %p586 = pneg %p327
        %p587 = pneg %p351
        %p588 = pneg %p348
        %p589 = pneg %p372
        %p590 = pneg %p369
        %p591 = pneg %p398
        %p592 = pneg %p395
        %s593 = sand.u32 %s385, 1
        %s594 = scalar_lea.sflag [#allocation5], %s593
        %s595 = sand.u32 %s385, 1
        %s596 = smul.addr %s595, 8
        %s597 = scalar_lea.vmem [#allocation4], %s596
        %p598 = scmp.lt.s32.totalorder %s31, 1
        %s599 = scalar_select %p598, %s31, 1
        %s600 = smul.addr %s599, 2
        %s601 = smul.addr %s600, 8
        %s602 = scalar_lea.vmem %s2, %s601
        %v604 = vld [vmem:[%s602] sm:$0xff]
        %v605 = vld [vmem:[%s602 + $0x8] sm:$0xff]
        %s606 = sld [smem:[#allocation2]]
        %v607 = vstv %s606
        %v608 = vmul.f32 %v604, %v607
        %v609 = vmul.f32 %v605, %v607
        %v610 = vld [vmem:[%s10] sm:$0xf]
        %v611 = vld [vmem:[%s10 + $0x4] sm:$0xf]
        %v612 = vld [vmem:[%s10 + $0x8] sm:$0xf]
        %v613 = vld [vmem:[%s10 + $0xc] sm:$0xf]
        %v614 = vld [vmem:[%s10 + $0x10] sm:$0xf]
        %v615 = vld [vmem:[%s10 + $0x14] sm:$0xf]
        %v616 = vld [vmem:[%s10 + $0x18] sm:$0xf]
        %v617 = vld [vmem:[%s10 + $0x1c] sm:$0xf]
        %v618 = vld [vmem:[%s10 + $0x20] sm:$0xf]
        %v619 = vld [vmem:[%s10 + $0x24] sm:$0xf]
        %v620 = vld [vmem:[%s10 + $0x28] sm:$0xf]
        %v621 = vld [vmem:[%s10 + $0x2c] sm:$0xf]
        %v622 = vld [vmem:[%s10 + $0x30] sm:$0xf]
        %v623 = vld [vmem:[%s10 + $0x34] sm:$0xf]
        %v624 = vld [vmem:[%s10 + $0x38] sm:$0xf]
        %v625 = vld [vmem:[%s10 + $0x3c] sm:$0xf]
        %v626 = vld [vmem:[%s10 + $0x40] sm:$0xf]
        %v627 = vld [vmem:[%s10 + $0x44] sm:$0xf]
        %v628 = vld [vmem:[%s10 + $0x48] sm:$0xf]
        %v629 = vld [vmem:[%s10 + $0x4c] sm:$0xf]
        %v630 = vld [vmem:[%s10 + $0x50] sm:$0xf]
        %v631 = vld [vmem:[%s10 + $0x54] sm:$0xf]
        %v632 = vld [vmem:[%s10 + $0x58] sm:$0xf]
        %v633 = vld [vmem:[%s10 + $0x5c] sm:$0xf]
        %v634 = vld [vmem:[%s10 + $0x60] sm:$0xf]
        %v635 = vld [vmem:[%s10 + $0x64] sm:$0xf]
        %v636 = vld [vmem:[%s10 + $0x68] sm:$0xf]
        %v637 = vld [vmem:[%s10 + $0x6c] sm:$0xf]
        %v638 = vld [vmem:[%s10 + $0x70] sm:$0xf]
        %v639 = vld [vmem:[%s10 + $0x74] sm:$0xf]
        %v640 = vld [vmem:[%s10 + $0x78] sm:$0xf]
        %v641 = vld [vmem:[%s10 + $0x7c] sm:$0xf]
        %v642 = vpack.c.bf16 %v608, %v608
        %v643 = vpack.c.bf16 %v609, %v609
        %v644 = vld [vmem:[%s11] sm:$0x1]
        %v646 = vlaneseq
        %v647 = vshrl.u32 %v646, 7
        %v648 = vsub.s32 0, %v647
        %v649 = vrot.slane %v644, %v648
        %v683 = vunpack.c.l.b16 %v610
        %v684 = vunpack.c.l.b16 %v611
        %v685 = vunpack.c.l.b16 %v612
        %v686 = vunpack.c.l.b16 %v613
        %v687 = vunpack.c.l.b16 %v614
        %v688 = vunpack.c.l.b16 %v615
        %v689 = vunpack.c.l.b16 %v616
        %v690 = vunpack.c.l.b16 %v617
        %v691 = vunpack.c.l.b16 %v618
        %v692 = vunpack.c.l.b16 %v619
        %v693 = vunpack.c.l.b16 %v620
        %v694 = vunpack.c.l.b16 %v621
        %v695 = vunpack.c.l.b16 %v622
        %v696 = vunpack.c.l.b16 %v623
        %v697 = vunpack.c.l.b16 %v624
        %v698 = vunpack.c.l.b16 %v625
        %v699 = vunpack.c.l.b16 %v626
        %v700 = vunpack.c.l.b16 %v627
        %v701 = vunpack.c.l.b16 %v628
        %v702 = vunpack.c.l.b16 %v629
        %v703 = vunpack.c.l.b16 %v630
        %v704 = vunpack.c.l.b16 %v631
        %v705 = vunpack.c.l.b16 %v632
        %v706 = vunpack.c.l.b16 %v633
        %v707 = vunpack.c.l.b16 %v634
        %v708 = vunpack.c.l.b16 %v635
        %v709 = vunpack.c.l.b16 %v636
        %v710 = vunpack.c.l.b16 %v637
        %v711 = vunpack.c.l.b16 %v638
        %v712 = vunpack.c.l.b16 %v639
        %v713 = vunpack.c.l.b16 %v640
        %v714 = vunpack.c.l.b16 %v641
        %v715 = vpack.c.b16 %v684, %v683
        %v716 = vpack.c.b16 %v686, %v685
        %v717 = vpack.c.b16 %v688, %v687
        %v718 = vpack.c.b16 %v690, %v689
        %v719 = vpack.c.b16 %v692, %v691
        %v720 = vpack.c.b16 %v694, %v693
        %v721 = vpack.c.b16 %v696, %v695
        %v722 = vpack.c.b16 %v698, %v697
        %v723 = vpack.c.b16 %v700, %v699
        %v724 = vpack.c.b16 %v702, %v701
        %v725 = vpack.c.b16 %v704, %v703
        %v726 = vpack.c.b16 %v706, %v705
        %v727 = vpack.c.b16 %v708, %v707
        %v728 = vpack.c.b16 %v710, %v709
        %v729 = vpack.c.b16 %v712, %v711
        %v730 = vpack.c.b16 %v714, %v713
        %747 = vmatprep.subr.bf16.mxu0 0
        %748 = vmatpush1.bf16.msra.mxu0 %v715
        %749 = vmatprep.subr.bf16.mxu0 0
        %750 = vmatpush1.bf16.msra.mxu0 %v716
        %751 = vmatprep.subr.bf16.mxu0 0
        %752 = vmatpush1.bf16.msra.mxu0 %v717
        %753 = vmatprep.subr.bf16.mxu0 0
        %754 = vmatpush1.bf16.msra.mxu0 %v718
        %755 = vmatprep.subr.bf16.mxu0 0
        %756 = vmatpush1.bf16.msra.mxu0 %v719
        %757 = vmatprep.subr.bf16.mxu0 0
        %758 = vmatpush1.bf16.msra.mxu0 %v720
        %759 = vmatprep.subr.bf16.mxu0 0
        %760 = vmatpush1.bf16.msra.mxu0 %v721
        %761 = vmatprep.subr.bf16.mxu0 0
        %762 = vmatpush1.bf16.msra.mxu0 %v722
        %763 = vmatprep.subr.bf16.mxu0 0
        %764 = vmatpush1.bf16.msra.mxu0 %v723
        %765 = vmatprep.subr.bf16.mxu0 0
        %766 = vmatpush1.bf16.msra.mxu0 %v724
        %767 = vmatprep.subr.bf16.mxu0 0
        %768 = vmatpush1.bf16.msra.mxu0 %v725
        %769 = vmatprep.subr.bf16.mxu0 0
        %770 = vmatpush1.bf16.msra.mxu0 %v726
        %771 = vmatprep.subr.bf16.mxu0 0
        %772 = vmatpush1.bf16.msra.mxu0 %v727
        %773 = vmatprep.subr.bf16.mxu0 0
        %774 = vmatpush1.bf16.msra.mxu0 %v728
        %775 = vmatprep.subr.bf16.mxu0 0
        %776 = vmatpush1.bf16.msra.mxu0 %v729
        %777 = vmatprep.subr.bf16.mxu0 0
        %778 = vmatpush1.bf16.msra.mxu0 %v730
        %779 = vmatprep.mubr.bf16.mxu0 %v643
        %780 = vmatmul.mubr.bf16.gmra.mrb[0].mxu0 %v642
        %v781 = vpop.f32.mrb[0].mxu0
        %v782 = vadd.f32 %v649, %v781
        %v783 = vpop.f32.mrb[0].mxu0
        %v784 = vpop.f32.mrb[0].mxu0
        %v785 = vpop.f32.mrb[0].mxu0
        %786 = vdwg.mxu0
        %v787 = vtanh.pop %v782
        %v788 = vld [vmem:[%s546] sm:$0xff]
        %v789 = vld [vmem:[%s546 + $0x8] sm:$0xff]
        %v790 = vld [vmem:[%s546 + $0x10] sm:$0xff]
        %v791 = vld [vmem:[%s546 + $0x18] sm:$0xff]
        %v792 = vld [vmem:[%s546 + $0x20] sm:$0xff]
        %v793 = vld [vmem:[%s546 + $0x28] sm:$0xff]
        %v794 = vld [vmem:[%s546 + $0x30] sm:$0xff]
        %v795 = vld [vmem:[%s546 + $0x38] sm:$0xff]
        %v796 = vld [vmem:[%s3] sm:$0x1]
        %v798 = vlaneseq
        %v799 = vshrl.u32 %v798, 7
        %v800 = vsub.s32 0, %v799
        %v801 = vrot.slane %v796, %v800
        %v803 = vadd.f32 %v788, %v801
        %v804 = vadd.f32 %v789, %v801
        %v805 = vadd.f32 %v790, %v801
        %v806 = vadd.f32 %v791, %v801
        %v807 = vadd.f32 %v792, %v801
        %v808 = vadd.f32 %v793, %v801
        %v809 = vadd.f32 %v794, %v801
        %v810 = vadd.f32 %v795, %v801
        %v811 = vtanh.pop %v803
        %v812 = vtanh.pop %v804
        %v813 = vtanh.pop %v805
        %v814 = vtanh.pop %v806
        %v815 = vtanh.pop %v807
        %v816 = vtanh.pop %v808
        %v817 = vtanh.pop %v809
        %v818 = vtanh.pop %v810
        %v819 = vld [vmem:[%s4] sm:$0xff]
        %v820 = vld [vmem:[%s4 + $0x8] sm:$0xff]
        %v821 = vld [vmem:[%s4 + $0x10] sm:$0xff]
        %v822 = vld [vmem:[%s4 + $0x18] sm:$0xff]
        %v823 = vld [vmem:[%s4 + $0x20] sm:$0xff]
        %v824 = vld [vmem:[%s4 + $0x28] sm:$0xff]
        %v825 = vld [vmem:[%s4 + $0x30] sm:$0xff]
        %v826 = vld [vmem:[%s4 + $0x38] sm:$0xff]
        %v827 = vld [vmem:[%s4 + $0x40] sm:$0xff]
        %v828 = vld [vmem:[%s4 + $0x48] sm:$0xff]
        %v829 = vld [vmem:[%s4 + $0x50] sm:$0xff]
        %v830 = vld [vmem:[%s4 + $0x58] sm:$0xff]
        %v831 = vld [vmem:[%s4 + $0x60] sm:$0xff]
        %v832 = vld [vmem:[%s4 + $0x68] sm:$0xff]
        %v833 = vld [vmem:[%s4 + $0x70] sm:$0xff]
        %v834 = vld [vmem:[%s4 + $0x78] sm:$0xff]
        %v835 = vld [vmem:[%s4 + $0x80] sm:$0xff]
        %v836 = vld [vmem:[%s4 + $0x88] sm:$0xff]
        %v837 = vld [vmem:[%s4 + $0x90] sm:$0xff]
        %v838 = vld [vmem:[%s4 + $0x98] sm:$0xff]
        %v839 = vld [vmem:[%s4 + $0xa0] sm:$0xff]
        %v840 = vld [vmem:[%s4 + $0xa8] sm:$0xff]
        %v841 = vld [vmem:[%s4 + $0xb0] sm:$0xff]
        %v842 = vld [vmem:[%s4 + $0xb8] sm:$0xff]
        %v843 = vld [vmem:[%s4 + $0xc0] sm:$0xff]
        %v844 = vld [vmem:[%s4 + $0xc8] sm:$0xff]
        %v845 = vld [vmem:[%s4 + $0xd0] sm:$0xff]
        %v846 = vld [vmem:[%s4 + $0xd8] sm:$0xff]
        %v847 = vld [vmem:[%s4 + $0xe0] sm:$0xff]
        %v848 = vld [vmem:[%s4 + $0xe8] sm:$0xff]
        %v849 = vld [vmem:[%s4 + $0xf0] sm:$0xff]
        %v850 = vld [vmem:[%s4 + $0xf8] sm:$0xff]
        %v851 = vpack.c.bf16 %v812, %v811
        %v852 = vpack.c.bf16 %v814, %v813
        %v853 = vpack.c.bf16 %v816, %v815
        %v854 = vpack.c.bf16 %v818, %v817
        %v855 = vld [vmem:[%s6] sm:$0xf]
        %v857 = vlaneseq
        %v858 = vshrl.u32 %v857, 7
        %v859 = vsub.s32 0, %v858
        %v860 = vrot.slane %v855, %v859
        %v861 = vlaneseq
        %v862 = vshrl.u32 %v861, 7
        %v863 = vsub.s32 1, %v862
        %v864 = vrot.slane %v855, %v863
        %v865 = vlaneseq
        %v866 = vshrl.u32 %v865, 7
        %v867 = vsub.s32 2, %v866
        %v868 = vrot.slane %v855, %v867
        %v869 = vlaneseq
        %v870 = vshrl.u32 %v869, 7
        %v871 = vsub.s32 3, %v870
        %v872 = vrot.slane %v855, %v871
        %v909 = vunpack.c.l.b16 %v819
        %v910 = vunpack.c.h.b16 %v819
        %v911 = vunpack.c.l.b16 %v820
        %v912 = vunpack.c.h.b16 %v820
        %v913 = vunpack.c.l.b16 %v821
        %v914 = vunpack.c.h.b16 %v821
        %v915 = vunpack.c.l.b16 %v822
        %v916 = vunpack.c.h.b16 %v822
        %v917 = vunpack.c.l.b16 %v823
        %v918 = vunpack.c.h.b16 %v823
        %v919 = vunpack.c.l.b16 %v824
        %v920 = vunpack.c.h.b16 %v824
        %v921 = vunpack.c.l.b16 %v825
        %v922 = vunpack.c.h.b16 %v825
        %v923 = vunpack.c.l.b16 %v826
        %v924 = vunpack.c.h.b16 %v826
        %v925 = vunpack.c.l.b16 %v827
        %v926 = vunpack.c.h.b16 %v827
        %v927 = vunpack.c.l.b16 %v828
        %v928 = vunpack.c.h.b16 %v828
        %v929 = vunpack.c.l.b16 %v829
        %v930 = vunpack.c.h.b16 %v829
        %v931 = vunpack.c.l.b16 %v830
        %v932 = vunpack.c.h.b16 %v830
        %v933 = vunpack.c.l.b16 %v831
        %v934 = vunpack.c.h.b16 %v831
        %v935 = vunpack.c.l.b16 %v832
        %v936 = vunpack.c.h.b16 %v832
        %v937 = vunpack.c.l.b16 %v833
        %v938 = vunpack.c.h.b16 %v833
        %v939 = vunpack.c.l.b16 %v834
        %v940 = vunpack.c.h.b16 %v834
        %v941 = vunpack.c.l.b16 %v835
        %v942 = vunpack.c.h.b16 %v835
        %v943 = vunpack.c.l.b16 %v836
        %v944 = vunpack.c.h.b16 %v836
        %v945 = vunpack.c.l.b16 %v837
        %v946 = vunpack.c.h.b16 %v837
        %v947 = vunpack.c.l.b16 %v838
        %v948 = vunpack.c.h.b16 %v838
        %v949 = vunpack.c.l.b16 %v839
        %v950 = vunpack.c.h.b16 %v839
        %v951 = vunpack.c.l.b16 %v840
        %v952 = vunpack.c.h.b16 %v840
        %v953 = vunpack.c.l.b16 %v841
        %v954 = vunpack.c.h.b16 %v841
        %v955 = vunpack.c.l.b16 %v842
        %v956 = vunpack.c.h.b16 %v842
        %v957 = vunpack.c.l.b16 %v843
        %v958 = vunpack.c.h.b16 %v843
        %v959 = vunpack.c.l.b16 %v844
        %v960 = vunpack.c.h.b16 %v844
        %v961 = vunpack.c.l.b16 %v845
        %v962 = vunpack.c.h.b16 %v845
        %v963 = vunpack.c.l.b16 %v846
        %v964 = vunpack.c.h.b16 %v846
        %v965 = vunpack.c.l.b16 %v847
        %v966 = vunpack.c.h.b16 %v847
        %v967 = vunpack.c.l.b16 %v848
        %v968 = vunpack.c.h.b16 %v848
        %v969 = vunpack.c.l.b16 %v849
        %v970 = vunpack.c.h.b16 %v849
        %v971 = vunpack.c.l.b16 %v850
        %v972 = vunpack.c.h.b16 %v850
        %v973 = vpack.c.b16 %v913, %v909
        %v974 = vpack.c.b16 %v914, %v910
        %v975 = vpack.c.b16 %v915, %v911
        %v976 = vpack.c.b16 %v916, %v912
        %v977 = vpack.c.b16 %v921, %v917
        %v978 = vpack.c.b16 %v922, %v918
        %v979 = vpack.c.b16 %v923, %v919
        %v980 = vpack.c.b16 %v924, %v920
        %v981 = vpack.c.b16 %v929, %v925
        %v982 = vpack.c.b16 %v930, %v926
        %v983 = vpack.c.b16 %v931, %v927
        %v984 = vpack.c.b16 %v932, %v928
        %v985 = vpack.c.b16 %v937, %v933
        %v986 = vpack.c.b16 %v938, %v934
        %v987 = vpack.c.b16 %v939, %v935
        %v988 = vpack.c.b16 %v940, %v936
        %v989 = vpack.c.b16 %v945, %v941
        %v990 = vpack.c.b16 %v946, %v942
        %v991 = vpack.c.b16 %v947, %v943
        %v992 = vpack.c.b16 %v948, %v944
        %v993 = vpack.c.b16 %v953, %v949
        %v994 = vpack.c.b16 %v954, %v950
        %v995 = vpack.c.b16 %v955, %v951
        %v996 = vpack.c.b16 %v956, %v952
        %v997 = vpack.c.b16 %v961, %v957
        %v998 = vpack.c.b16 %v962, %v958
        %v999 = vpack.c.b16 %v963, %v959
        %v1000 = vpack.c.b16 %v964, %v960
        %v1001 = vpack.c.b16 %v969, %v965
        %v1002 = vpack.c.b16 %v970, %v966
        %v1003 = vpack.c.b16 %v971, %v967
        %v1004 = vpack.c.b16 %v972, %v968
        %1037 = vmatprep.subr.bf16.mxu0 %v974
        %1038 = vmatpush1.bf16.msra.mxu0 %v973
        %1039 = vmatprep.subr.bf16.mxu0 %v978
        %1040 = vmatpush1.bf16.msra.mxu0 %v977
        %1041 = vmatprep.subr.bf16.mxu0 %v982
        %1042 = vmatpush1.bf16.msra.mxu0 %v981
        %1043 = vmatprep.subr.bf16.mxu0 %v986
        %1044 = vmatpush1.bf16.msra.mxu0 %v985
        %1045 = vmatprep.subr.bf16.mxu0 %v990
        %1046 = vmatpush1.bf16.msra.mxu0 %v989
        %1047 = vmatprep.subr.bf16.mxu0 %v994
        %1048 = vmatpush1.bf16.msra.mxu0 %v993
        %1049 = vmatprep.subr.bf16.mxu0 %v998
        %1050 = vmatpush1.bf16.msra.mxu0 %v997
        %1051 = vmatprep.subr.bf16.mxu0 %v1002
        %1052 = vmatpush1.bf16.msra.mxu0 %v1001
        %1053 = vmatprep.subr.bf16.mxu0 0
        %1054 = vmatpush1.bf16.msra.mxu0 0
        %1055 = vmatprep.subr.bf16.mxu0 0
        %1056 = vmatpush1.bf16.msra.mxu0 0
        %1057 = vmatprep.subr.bf16.mxu0 0
        %1058 = vmatpush1.bf16.msra.mxu0 0
        %1059 = vmatprep.subr.bf16.mxu0 0
        %1060 = vmatpush1.bf16.msra.mxu0 0
        %1061 = vmatprep.subr.bf16.mxu0 0
        %1062 = vmatpush1.bf16.msra.mxu0 0
        %1063 = vmatprep.subr.bf16.mxu0 0
        %1064 = vmatpush1.bf16.msra.mxu0 0
        %1065 = vmatprep.subr.bf16.mxu0 0
        %1066 = vmatpush1.bf16.msra.mxu0 0
        %1067 = vmatprep.subr.bf16.mxu0 0
        %1068 = vmatpush1.bf16.msra.mxu0 0
        %1069 = vmatprep.mubr.bf16.mxu0 0
        %1070 = vmatmul.mubr.bf16.gmra.mrb[0].mxu0 %v851
        %v1071 = vpop.f32.mrb[0].mxu0
        %v1072 = vadd.f32 %v860, %v1071
        %v1073 = vpop.f32.mrb[0].mxu0
        %v1074 = vadd.f32 %v864, %v1073
        %v1075 = vpop.f32.mrb[0].mxu0
        %v1076 = vadd.f32 %v860, %v1075
        %v1077 = vpop.f32.mrb[0].mxu0
        %v1078 = vadd.f32 %v864, %v1077
        %1079 = vmatprep.mubr.bf16.mxu0 0
        %1080 = vmatmul.mubr.bf16.gmra.mrb[0].mxu0 %v852
        %v1081 = vpop.f32.mrb[0].mxu0
        %v1082 = vadd.f32 %v860, %v1081
        %v1083 = vpop.f32.mrb[0].mxu0
        %v1084 = vadd.f32 %v864, %v1083
        %v1085 = vpop.f32.mrb[0].mxu0
        %v1086 = vadd.f32 %v860, %v1085
        %v1087 = vpop.f32.mrb[0].mxu0
        %v1088 = vadd.f32 %v864, %v1087
        %1089 = vmatprep.mubr.bf16.mxu0 0
        %1090 = vmatmul.mubr.bf16.gmra.mrb[0].mxu0 %v853
        %v1091 = vpop.f32.mrb[0].mxu0
        %v1092 = vadd.f32 %v860, %v1091
        %v1093 = vpop.f32.mrb[0].mxu0
        %v1094 = vadd.f32 %v864, %v1093
        %v1095 = vpop.f32.mrb[0].mxu0
        %v1096 = vadd.f32 %v860, %v1095
        %v1097 = vpop.f32.mrb[0].mxu0
        %v1098 = vadd.f32 %v864, %v1097
        %1099 = vmatprep.mubr.bf16.mxu0 0
        %1100 = vmatmul.mubr.bf16.gmra.mrb[0].mxu0 %v854
        %v1101 = vpop.f32.mrb[0].mxu0
        %v1102 = vadd.f32 %v860, %v1101
        %v1103 = vpop.f32.mrb[0].mxu0
        %v1104 = vadd.f32 %v864, %v1103
        %v1105 = vpop.f32.mrb[0].mxu0
        %v1106 = vadd.f32 %v860, %v1105
        %v1107 = vpop.f32.mrb[0].mxu0
        %v1108 = vadd.f32 %v864, %v1107
        %1109 = vdwg.mxu0
        %1110 = vmatprep.subr.bf16.mxu0 %v976
        %1111 = vmatpush1.bf16.msra.mxu0 %v975
        %1112 = vmatprep.subr.bf16.mxu0 %v980
        %1113 = vmatpush1.bf16.msra.mxu0 %v979
        %1114 = vmatprep.subr.bf16.mxu0 %v984
        %1115 = vmatpush1.bf16.msra.mxu0 %v983
        %1116 = vmatprep.subr.bf16.mxu0 %v988
        %1117 = vmatpush1.bf16.msra.mxu0 %v987
        %1118 = vmatprep.subr.bf16.mxu0 %v992
        %1119 = vmatpush1.bf16.msra.mxu0 %v991
        %1120 = vmatprep.subr.bf16.mxu0 %v996
        %1121 = vmatpush1.bf16.msra.mxu0 %v995
        %1122 = vmatprep.subr.bf16.mxu0 %v1000
        %1123 = vmatpush1.bf16.msra.mxu0 %v999
        %1124 = vmatprep.subr.bf16.mxu0 %v1004
        %1125 = vmatpush1.bf16.msra.mxu0 %v1003
        %1126 = vmatprep.subr.bf16.mxu0 0
        %1127 = vmatpush1.bf16.msra.mxu0 0
        %1128 = vmatprep.subr.bf16.mxu0 0
        %1129 = vmatpush1.bf16.msra.mxu0 0
        %1130 = vmatprep.subr.bf16.mxu0 0
        %1131 = vmatpush1.bf16.msra.mxu0 0
        %1132 = vmatprep.subr.bf16.mxu0 0
        %1133 = vmatpush1.bf16.msra.mxu0 0
        %1134 = vmatprep.subr.bf16.mxu0 0
        %1135 = vmatpush1.bf16.msra.mxu0 0
        %1136 = vmatprep.subr.bf16.mxu0 0
        %1137 = vmatpush1.bf16.msra.mxu0 0
        %1138 = vmatprep.subr.bf16.mxu0 0
        %1139 = vmatpush1.bf16.msra.mxu0 0
        %1140 = vmatprep.subr.bf16.mxu0 0
        %1141 = vmatpush1.bf16.msra.mxu0 0
        %1142 = vmatprep.mubr.bf16.mxu0 0
        %1143 = vmatmul.mubr.bf16.gmra.mrb[0].mxu0 %v851
        %v1144 = vpop.f32.mrb[0].mxu0
        %v1145 = vadd.f32 %v868, %v1144
        %v1146 = vpop.f32.mrb[0].mxu0
        %v1147 = vadd.f32 %v872, %v1146
        %v1148 = vpop.f32.mrb[0].mxu0
        %v1149 = vadd.f32 %v868, %v1148
        %v1150 = vpop.f32.mrb[0].mxu0
        %v1151 = vadd.f32 %v872, %v1150
        %1152 = vmatprep.mubr.bf16.mxu0 0
        %1153 = vmatmul.mubr.bf16.gmra.mrb[0].mxu0 %v852
        %v1154 = vpop.f32.mrb[0].mxu0
        %v1155 = vadd.f32 %v868, %v1154
        %v1156 = vpop.f32.mrb[0].mxu0
        %v1157 = vadd.f32 %v872, %v1156
        %v1158 = vpop.f32.mrb[0].mxu0
        %v1159 = vadd.f32 %v868, %v1158
        %v1160 = vpop.f32.mrb[0].mxu0
        %v1161 = vadd.f32 %v872, %v1160
        %1162 = vmatprep.mubr.bf16.mxu0 0
        %1163 = vmatmul.mubr.bf16.gmra.mrb[0].mxu0 %v853
        %v1164 = vpop.f32.mrb[0].mxu0
        %v1165 = vadd.f32 %v868, %v1164
        %v1166 = vpop.f32.mrb[0].mxu0
        %v1167 = vadd.f32 %v872, %v1166
        %v1168 = vpop.f32.mrb[0].mxu0
        %v1169 = vadd.f32 %v868, %v1168
        %v1170 = vpop.f32.mrb[0].mxu0
        %v1171 = vadd.f32 %v872, %v1170
        %1172 = vmatprep.mubr.bf16.mxu0 0
        %1173 = vmatmul.mubr.bf16.gmra.mrb[0].mxu0 %v854
        %v1174 = vpop.f32.mrb[0].mxu0
        %v1175 = vadd.f32 %v868, %v1174
        %v1176 = vpop.f32.mrb[0].mxu0
        %v1177 = vadd.f32 %v872, %v1176
        %v1178 = vpop.f32.mrb[0].mxu0
        %v1179 = vadd.f32 %v868, %v1178
        %v1180 = vpop.f32.mrb[0].mxu0
        %v1181 = vadd.f32 %v872, %v1180
        %1182 = vdwg.mxu0
        %v1183 = vld [vmem:[%s5] sm:$0xff]
        %v1184 = vld [vmem:[%s5 + $0x8] sm:$0xff]
        %v1185 = vld [vmem:[%s5 + $0x10] sm:$0xff]
        %v1186 = vld [vmem:[%s5 + $0x18] sm:$0xff]
        %v1187 = vld [vmem:[%s5 + $0x20] sm:$0xff]
        %v1188 = vld [vmem:[%s5 + $0x28] sm:$0xff]
        %v1189 = vld [vmem:[%s5 + $0x30] sm:$0xff]
        %v1190 = vld [vmem:[%s5 + $0x38] sm:$0xff]
        %v1191 = vld [vmem:[%s5 + $0x40] sm:$0xff]
        %v1192 = vld [vmem:[%s5 + $0x48] sm:$0xff]
        %v1193 = vld [vmem:[%s5 + $0x50] sm:$0xff]
        %v1194 = vld [vmem:[%s5 + $0x58] sm:$0xff]
        %v1195 = vld [vmem:[%s5 + $0x60] sm:$0xff]
        %v1196 = vld [vmem:[%s5 + $0x68] sm:$0xff]
        %v1197 = vld [vmem:[%s5 + $0x70] sm:$0xff]
        %v1198 = vld [vmem:[%s5 + $0x78] sm:$0xff]
        %v1199 = vld [vmem:[%s5 + $0x80] sm:$0xff]
        %v1200 = vld [vmem:[%s5 + $0x88] sm:$0xff]
        %v1201 = vld [vmem:[%s5 + $0x90] sm:$0xff]
        %v1202 = vld [vmem:[%s5 + $0x98] sm:$0xff]
        %v1203 = vld [vmem:[%s5 + $0xa0] sm:$0xff]
        %v1204 = vld [vmem:[%s5 + $0xa8] sm:$0xff]
        %v1205 = vld [vmem:[%s5 + $0xb0] sm:$0xff]
        %v1206 = vld [vmem:[%s5 + $0xb8] sm:$0xff]
        %v1207 = vld [vmem:[%s5 + $0xc0] sm:$0xff]
        %v1208 = vld [vmem:[%s5 + $0xc8] sm:$0xff]
        %v1209 = vld [vmem:[%s5 + $0xd0] sm:$0xff]
        %v1210 = vld [vmem:[%s5 + $0xd8] sm:$0xff]
        %v1211 = vld [vmem:[%s5 + $0xe0] sm:$0xff]
        %v1212 = vld [vmem:[%s5 + $0xe8] sm:$0xff]
        %v1213 = vld [vmem:[%s5 + $0xf0] sm:$0xff]
        %v1214 = vld [vmem:[%s5 + $0xf8] sm:$0xff]
        %v1215 = vld [vmem:[%s7] sm:$0xff]
        %v1216 = vld [vmem:[%s7 + $0x8] sm:$0xff]
        %v1217 = vld [vmem:[%s7 + $0x10] sm:$0xff]
        %v1218 = vld [vmem:[%s7 + $0x18] sm:$0xff]
        %v1219 = vld [vmem:[%s7 + $0x20] sm:$0xff]
        %v1220 = vld [vmem:[%s7 + $0x28] sm:$0xff]
        %v1221 = vld [vmem:[%s7 + $0x30] sm:$0xff]
        %v1222 = vld [vmem:[%s7 + $0x38] sm:$0xff]
        %v1223 = vld [vmem:[%s7 + $0x40] sm:$0xff]
        %v1224 = vld [vmem:[%s7 + $0x48] sm:$0xff]
        %v1225 = vld [vmem:[%s7 + $0x50] sm:$0xff]
        %v1226 = vld [vmem:[%s7 + $0x58] sm:$0xff]
        %v1227 = vld [vmem:[%s7 + $0x60] sm:$0xff]
        %v1228 = vld [vmem:[%s7 + $0x68] sm:$0xff]
        %v1229 = vld [vmem:[%s7 + $0x70] sm:$0xff]
        %v1230 = vld [vmem:[%s7 + $0x78] sm:$0xff]
        %v1231 = vld [vmem:[%s7 + $0x80] sm:$0xff]
        %v1232 = vld [vmem:[%s7 + $0x88] sm:$0xff]
        %v1233 = vld [vmem:[%s7 + $0x90] sm:$0xff]
        %v1234 = vld [vmem:[%s7 + $0x98] sm:$0xff]
        %v1235 = vld [vmem:[%s7 + $0xa0] sm:$0xff]
        %v1236 = vld [vmem:[%s7 + $0xa8] sm:$0xff]
        %v1237 = vld [vmem:[%s7 + $0xb0] sm:$0xff]
        %v1238 = vld [vmem:[%s7 + $0xb8] sm:$0xff]
        %v1239 = vld [vmem:[%s7 + $0xc0] sm:$0xff]
        %v1240 = vld [vmem:[%s7 + $0xc8] sm:$0xff]
        %v1241 = vld [vmem:[%s7 + $0xd0] sm:$0xff]
        %v1242 = vld [vmem:[%s7 + $0xd8] sm:$0xff]
        %v1243 = vld [vmem:[%s7 + $0xe0] sm:$0xff]
        %v1244 = vld [vmem:[%s7 + $0xe8] sm:$0xff]
        %v1245 = vld [vmem:[%s7 + $0xf0] sm:$0xff]
        %v1246 = vld [vmem:[%s7 + $0xf8] sm:$0xff]
        %v1247 = vld [vmem:[%s8] sm:$0xff]
        %v1248 = vld [vmem:[%s8 + $0x8] sm:$0xff]
        %v1249 = vld [vmem:[%s8 + $0x10] sm:$0xff]
        %v1250 = vld [vmem:[%s8 + $0x18] sm:$0xff]
        %v1251 = vld [vmem:[%s8 + $0x20] sm:$0xff]
        %v1252 = vld [vmem:[%s8 + $0x28] sm:$0xff]
        %v1253 = vld [vmem:[%s8 + $0x30] sm:$0xff]
        %v1254 = vld [vmem:[%s8 + $0x38] sm:$0xff]
        %v1255 = vld [vmem:[%s8 + $0x40] sm:$0xff]
        %v1256 = vld [vmem:[%s8 + $0x48] sm:$0xff]
        %v1257 = vld [vmem:[%s8 + $0x50] sm:$0xff]
        %v1258 = vld [vmem:[%s8 + $0x58] sm:$0xff]
        %v1259 = vld [vmem:[%s8 + $0x60] sm:$0xff]
        %v1260 = vld [vmem:[%s8 + $0x68] sm:$0xff]
        %v1261 = vld [vmem:[%s8 + $0x70] sm:$0xff]
        %v1262 = vld [vmem:[%s8 + $0x78] sm:$0xff]
        %v1263 = vld [vmem:[%s8 + $0x80] sm:$0xff]
        %v1264 = vld [vmem:[%s8 + $0x88] sm:$0xff]
        %v1265 = vld [vmem:[%s8 + $0x90] sm:$0xff]
        %v1266 = vld [vmem:[%s8 + $0x98] sm:$0xff]
        %v1267 = vld [vmem:[%s8 + $0xa0] sm:$0xff]
        %v1268 = vld [vmem:[%s8 + $0xa8] sm:$0xff]
        %v1269 = vld [vmem:[%s8 + $0xb0] sm:$0xff]
        %v1270 = vld [vmem:[%s8 + $0xb8] sm:$0xff]
        %v1271 = vld [vmem:[%s8 + $0xc0] sm:$0xff]
        %v1272 = vld [vmem:[%s8 + $0xc8] sm:$0xff]
        %v1273 = vld [vmem:[%s8 + $0xd0] sm:$0xff]
        %v1274 = vld [vmem:[%s8 + $0xd8] sm:$0xff]
        %v1275 = vld [vmem:[%s8 + $0xe0] sm:$0xff]
        %v1276 = vld [vmem:[%s8 + $0xe8] sm:$0xff]
        %v1277 = vld [vmem:[%s8 + $0xf0] sm:$0xff]
        %v1278 = vld [vmem:[%s8 + $0xf8] sm:$0xff]
        %v1279 = vld [vmem:[%s9] sm:$0xf]
        %v1281 = vlaneseq
        %v1282 = vshrl.u32 %v1281, 7
        %v1283 = vsub.s32 0, %v1282
        %v1284 = vrot.slane %v1279, %v1283
        %v1285 = vlaneseq
        %v1286 = vshrl.u32 %v1285, 7
        %v1287 = vsub.s32 1, %v1286
        %v1288 = vrot.slane %v1279, %v1287
        %v1289 = vlaneseq
        %v1290 = vshrl.u32 %v1289, 7
        %v1291 = vsub.s32 2, %v1290
        %v1292 = vrot.slane %v1279, %v1291
        %v1293 = vlaneseq
        %v1294 = vshrl.u32 %v1293, 7
        %v1295 = vsub.s32 3, %v1294
        %v1296 = vrot.slane %v1279, %v1295
        %v1333 = vunpack.c.l.b16 %v1183
        %v1334 = vunpack.c.h.b16 %v1183
        %v1335 = vunpack.c.l.b16 %v1184
        %v1336 = vunpack.c.h.b16 %v1184
        %v1337 = vunpack.c.l.b16 %v1185
        %v1338 = vunpack.c.h.b16 %v1185
        %v1339 = vunpack.c.l.b16 %v1186
        %v1340 = vunpack.c.h.b16 %v1186
        %v1341 = vunpack.c.l.b16 %v1187
        %v1342 = vunpack.c.h.b16 %v1187
        %v1343 = vunpack.c.l.b16 %v1188
        %v1344 = vunpack.c.h.b16 %v1188
        %v1345 = vunpack.c.l.b16 %v1189
        %v1346 = vunpack.c.h.b16 %v1189
        %v1347 = vunpack.c.l.b16 %v1190
        %v1348 = vunpack.c.h.b16 %v1190
        %v1349 = vunpack.c.l.b16 %v1191
        %v1350 = vunpack.c.h.b16 %v1191
        %v1351 = vunpack.c.l.b16 %v1192
        %v1352 = vunpack.c.h.b16 %v1192
        %v1353 = vunpack.c.l.b16 %v1193
        %v1354 = vunpack.c.h.b16 %v1193
        %v1355 = vunpack.c.l.b16 %v1194
        %v1356 = vunpack.c.h.b16 %v1194
        %v1357 = vunpack.c.l.b16 %v1195
        %v1358 = vunpack.c.h.b16 %v1195
        %v1359 = vunpack.c.l.b16 %v1196
        %v1360 = vunpack.c.h.b16 %v1196
        %v1361 = vunpack.c.l.b16 %v1197
        %v1362 = vunpack.c.h.b16 %v1197
        %v1363 = vunpack.c.l.b16 %v1198
        %v1364 = vunpack.c.h.b16 %v1198
        %v1365 = vunpack.c.l.b16 %v1199
        %v1366 = vunpack.c.h.b16 %v1199
        %v1367 = vunpack.c.l.b16 %v1200
        %v1368 = vunpack.c.h.b16 %v1200
        %v1369 = vunpack.c.l.b16 %v1201
        %v1370 = vunpack.c.h.b16 %v1201
        %v1371 = vunpack.c.l.b16 %v1202
        %v1372 = vunpack.c.h.b16 %v1202
        %v1373 = vunpack.c.l.b16 %v1203
        %v1374 = vunpack.c.h.b16 %v1203
        %v1375 = vunpack.c.l.b16 %v1204
        %v1376 = vunpack.c.h.b16 %v1204
        %v1377 = vunpack.c.l.b16 %v1205
        %v1378 = vunpack.c.h.b16 %v1205
        %v1379 = vunpack.c.l.b16 %v1206
        %v1380 = vunpack.c.h.b16 %v1206
        %v1381 = vunpack.c.l.b16 %v1207
        %v1382 = vunpack.c.h.b16 %v1207
        %v1383 = vunpack.c.l.b16 %v1208
        %v1384 = vunpack.c.h.b16 %v1208
        %v1385 = vunpack.c.l.b16 %v1209
        %v1386 = vunpack.c.h.b16 %v1209
        %v1387 = vunpack.c.l.b16 %v1210
        %v1388 = vunpack.c.h.b16 %v1210
        %v1389 = vunpack.c.l.b16 %v1211
        %v1390 = vunpack.c.h.b16 %v1211
        %v1391 = vunpack.c.l.b16 %v1212
        %v1392 = vunpack.c.h.b16 %v1212
        %v1393 = vunpack.c.l.b16 %v1213
        %v1394 = vunpack.c.h.b16 %v1213
        %v1395 = vunpack.c.l.b16 %v1214
        %v1396 = vunpack.c.h.b16 %v1214
        %v1397 = vpack.c.b16 %v1337, %v1333
        %v1398 = vpack.c.b16 %v1338, %v1334
        %v1399 = vpack.c.b16 %v1339, %v1335
        %v1400 = vpack.c.b16 %v1340, %v1336
        %v1401 = vpack.c.b16 %v1345, %v1341
        %v1402 = vpack.c.b16 %v1346, %v1342
        %v1403 = vpack.c.b16 %v1347, %v1343
        %v1404 = vpack.c.b16 %v1348, %v1344
        %v1405 = vpack.c.b16 %v1353, %v1349
        %v1406 = vpack.c.b16 %v1354, %v1350
        %v1407 = vpack.c.b16 %v1355, %v1351
        %v1408 = vpack.c.b16 %v1356, %v1352
        %v1409 = vpack.c.b16 %v1361, %v1357
        %v1410 = vpack.c.b16 %v1362, %v1358
        %v1411 = vpack.c.b16 %v1363, %v1359
        %v1412 = vpack.c.b16 %v1364, %v1360
        %v1413 = vpack.c.b16 %v1369, %v1365
        %v1414 = vpack.c.b16 %v1370, %v1366
        %v1415 = vpack.c.b16 %v1371, %v1367
        %v1416 = vpack.c.b16 %v1372, %v1368
        %v1417 = vpack.c.b16 %v1377, %v1373
        %v1418 = vpack.c.b16 %v1378, %v1374
        %v1419 = vpack.c.b16 %v1379, %v1375
        %v1420 = vpack.c.b16 %v1380, %v1376
        %v1421 = vpack.c.b16 %v1385, %v1381
        %v1422 = vpack.c.b16 %v1386, %v1382
        %v1423 = vpack.c.b16 %v1387, %v1383
        %v1424 = vpack.c.b16 %v1388, %v1384
        %v1425 = vpack.c.b16 %v1393, %v1389
        %v1426 = vpack.c.b16 %v1394, %v1390
        %v1427 = vpack.c.b16 %v1395, %v1391
        %v1428 = vpack.c.b16 %v1396, %v1392
        %1461 = vmatprep.subr.bf16.mxu0 %v1398
        %1462 = vmatpush1.bf16.msra.mxu0 %v1397
        %1463 = vmatprep.subr.bf16.mxu0 %v1402
        %1464 = vmatpush1.bf16.msra.mxu0 %v1401
        %1465 = vmatprep.subr.bf16.mxu0 %v1406
        %1466 = vmatpush1.bf16.msra.mxu0 %v1405
        %1467 = vmatprep.subr.bf16.mxu0 %v1410
        %1468 = vmatpush1.bf16.msra.mxu0 %v1409
        %1469 = vmatprep.subr.bf16.mxu0 %v1414
        %1470 = vmatpush1.bf16.msra.mxu0 %v1413
        %1471 = vmatprep.subr.bf16.mxu0 %v1418
        %1472 = vmatpush1.bf16.msra.mxu0 %v1417
        %1473 = vmatprep.subr.bf16.mxu0 %v1422
        %1474 = vmatpush1.bf16.msra.mxu0 %v1421
        %1475 = vmatprep.subr.bf16.mxu0 %v1426
        %1476 = vmatpush1.bf16.msra.mxu0 %v1425
        %1477 = vmatprep.subr.bf16.mxu0 0
        %1478 = vmatpush1.bf16.msra.mxu0 0
        %1479 = vmatprep.subr.bf16.mxu0 0
        %1480 = vmatpush1.bf16.msra.mxu0 0
        %1481 = vmatprep.subr.bf16.mxu0 0
        %1482 = vmatpush1.bf16.msra.mxu0 0
        %1483 = vmatprep.subr.bf16.mxu0 0
        %1484 = vmatpush1.bf16.msra.mxu0 0
        %1485 = vmatprep.subr.bf16.mxu0 0
        %1486 = vmatpush1.bf16.msra.mxu0 0
        %1487 = vmatprep.subr.bf16.mxu0 0
        %1488 = vmatpush1.bf16.msra.mxu0 0
        %1489 = vmatprep.subr.bf16.mxu0 0
        %1490 = vmatpush1.bf16.msra.mxu0 0
        %1491 = vmatprep.subr.bf16.mxu0 0
        %1492 = vmatpush1.bf16.msra.mxu0 0
        %1493 = vmatprep.mubr.bf16.mxu0 0
        %1494 = vmatmul.mubr.bf16.gmra.mrb[0].mxu0 0
        %v1495 = vpop.f32.mrb[0].mxu0
        %v1496 = vadd.f32 0.0, %v1495
        %v1497 = vpop.f32.mrb[0].mxu0
        %v1498 = vadd.f32 0.0, %v1497
        %v1499 = vpop.f32.mrb[0].mxu0
        %v1500 = vpop.f32.mrb[0].mxu0
        %1501 = vdwg.mxu0
        %1502 = vmatprep.subr.bf16.mxu0 %v1400
        %1503 = vmatpush1.bf16.msra.mxu0 %v1399
        %1504 = vmatprep.subr.bf16.mxu0 %v1404
        %1505 = vmatpush1.bf16.msra.mxu0 %v1403
        %1506 = vmatprep.subr.bf16.mxu0 %v1408
        %1507 = vmatpush1.bf16.msra.mxu0 %v1407
        %1508 = vmatprep.subr.bf16.mxu0 %v1412
        %1509 = vmatpush1.bf16.msra.mxu0 %v1411
        %1510 = vmatprep.subr.bf16.mxu0 %v1416
        %1511 = vmatpush1.bf16.msra.mxu0 %v1415
        %1512 = vmatprep.subr.bf16.mxu0 %v1420
        %1513 = vmatpush1.bf16.msra.mxu0 %v1419
        %1514 = vmatprep.subr.bf16.mxu0 %v1424
        %1515 = vmatpush1.bf16.msra.mxu0 %v1423
        %1516 = vmatprep.subr.bf16.mxu0 %v1428
        %1517 = vmatpush1.bf16.msra.mxu0 %v1427
        %1518 = vmatprep.subr.bf16.mxu0 0
        %1519 = vmatpush1.bf16.msra.mxu0 0
        %1520 = vmatprep.subr.bf16.mxu0 0
        %1521 = vmatpush1.bf16.msra.mxu0 0
        %1522 = vmatprep.subr.bf16.mxu0 0
        %1523 = vmatpush1.bf16.msra.mxu0 0
        %1524 = vmatprep.subr.bf16.mxu0 0
        %1525 = vmatpush1.bf16.msra.mxu0 0
        %1526 = vmatprep.subr.bf16.mxu0 0
        %1527 = vmatpush1.bf16.msra.mxu0 0
        %1528 = vmatprep.subr.bf16.mxu0 0
        %1529 = vmatpush1.bf16.msra.mxu0 0
        %1530 = vmatprep.subr.bf16.mxu0 0
        %1531 = vmatpush1.bf16.msra.mxu0 0
        %1532 = vmatprep.subr.bf16.mxu0 0
        %1533 = vmatpush1.bf16.msra.mxu0 0
        %1534 = vmatprep.mubr.bf16.mxu0 0
        %1535 = vmatmul.mubr.bf16.gmra.mrb[0].mxu0 0
        %v1536 = vpop.f32.mrb[0].mxu0
        %v1537 = vadd.f32 0.0, %v1536
        %v1538 = vpop.f32.mrb[0].mxu0
        %v1539 = vadd.f32 0.0, %v1538
        %v1540 = vpop.f32.mrb[0].mxu0
        %v1541 = vpop.f32.mrb[0].mxu0
        %1542 = vdwg.mxu0
        %v1543 = vadd.f32 %v1072, %v1496
        %v1544 = vadd.f32 %v1074, %v1498
        %v1545 = vadd.f32 %v1145, %v1537
        %v1546 = vadd.f32 %v1147, %v1539
        %v1547 = vxor.u32 %v1543, 2147483648
        %v1548 = vmul.f32 %v1547, 1.442695
        %v1549 = vpow.pop %v1548
        %v1550 = vadd.f32 %v1549, 1.0
        %v1551 = vrcp.pop %v1550
        %v1552 = vmul.f32 1.0, %v1551
        %v1553 = vxor.u32 %v1544, 2147483648
        %v1554 = vmul.f32 %v1553, 1.442695
        %v1555 = vpow.pop %v1554
        %v1556 = vadd.f32 %v1555, 1.0
        %v1557 = vrcp.pop %v1556
        %v1558 = vmul.f32 1.0, %v1557
        %v1559 = vtanh.pop %v1545
        %v1560 = vxor.u32 %v1546, 2147483648
        %v1561 = vmul.f32 %v1560, 1.442695
        %v1562 = vpow.pop %v1561
        %v1563 = vadd.f32 %v1562, 1.0
        %v1564 = vrcp.pop %v1563
        %v1565 = vmul.f32 1.0, %v1564
        %v1566 = vmul.f32 %v1558, 0.0
        %v1567 = vmul.f32 %v1552, %v1559
        %v1568 = vadd.f32 %v1566, %v1567
        %v1569 = vtanh.pop %v1568
        %v1570 = vmul.f32 %v1565, %v1569
        %v1571 = vpack.c.bf16 %v1570, %v1570
        %v1604 = vunpack.c.l.b16 %v1247
        %v1605 = vunpack.c.h.b16 %v1247
        %v1606 = vunpack.c.l.b16 %v1248
        %v1607 = vunpack.c.h.b16 %v1248
        %v1608 = vunpack.c.l.b16 %v1249
        %v1609 = vunpack.c.h.b16 %v1249
        %v1610 = vunpack.c.l.b16 %v1250
        %v1611 = vunpack.c.h.b16 %v1250
        %v1612 = vunpack.c.l.b16 %v1251
        %v1613 = vunpack.c.h.b16 %v1251
        %v1614 = vunpack.c.l.b16 %v1252
        %v1615 = vunpack.c.h.b16 %v1252
        %v1616 = vunpack.c.l.b16 %v1253
        %v1617 = vunpack.c.h.b16 %v1253
        %v1618 = vunpack.c.l.b16 %v1254
        %v1619 = vunpack.c.h.b16 %v1254
        %v1620 = vunpack.c.l.b16 %v1255
        %v1621 = vunpack.c.h.b16 %v1255
        %v1622 = vunpack.c.l.b16 %v1256
        %v1623 = vunpack.c.h.b16 %v1256
        %v1624 = vunpack.c.l.b16 %v1257
        %v1625 = vunpack.c.h.b16 %v1257
        %v1626 = vunpack.c.l.b16 %v1258
        %v1627 = vunpack.c.h.b16 %v1258
        %v1628 = vunpack.c.l.b16 %v1259
        %v1629 = vunpack.c.h.b16 %v1259
        %v1630 = vunpack.c.l.b16 %v1260
        %v1631 = vunpack.c.h.b16 %v1260
        %v1632 = vunpack.c.l.b16 %v1261
        %v1633 = vunpack.c.h.b16 %v1261
        %v1634 = vunpack.c.l.b16 %v1262
        %v1635 = vunpack.c.h.b16 %v1262
        %v1636 = vunpack.c.l.b16 %v1263
        %v1637 = vunpack.c.h.b16 %v1263
        %v1638 = vunpack.c.l.b16 %v1264
        %v1639 = vunpack.c.h.b16 %v1264
        %v1640 = vunpack.c.l.b16 %v1265
        %v1641 = vunpack.c.h.b16 %v1265
        %v1642 = vunpack.c.l.b16 %v1266
        %v1643 = vunpack.c.h.b16 %v1266
        %v1644 = vunpack.c.l.b16 %v1267
        %v1645 = vunpack.c.h.b16 %v1267
        %v1646 = vunpack.c.l.b16 %v1268
        %v1647 = vunpack.c.h.b16 %v1268
        %v1648 = vunpack.c.l.b16 %v1269
        %v1649 = vunpack.c.h.b16 %v1269
        %v1650 = vunpack.c.l.b16 %v1270
        %v1651 = vunpack.c.h.b16 %v1270
        %v1652 = vunpack.c.l.b16 %v1271
        %v1653 = vunpack.c.h.b16 %v1271
        %v1654 = vunpack.c.l.b16 %v1272
        %v1655 = vunpack.c.h.b16 %v1272
        %v1656 = vunpack.c.l.b16 %v1273
        %v1657 = vunpack.c.h.b16 %v1273
        %v1658 = vunpack.c.l.b16 %v1274
        %v1659 = vunpack.c.h.b16 %v1274
        %v1660 = vunpack.c.l.b16 %v1275
        %v1661 = vunpack.c.h.b16 %v1275
        %v1662 = vunpack.c.l.b16 %v1276
        %v1663 = vunpack.c.h.b16 %v1276
        %v1664 = vunpack.c.l.b16 %v1277
        %v1665 = vunpack.c.h.b16 %v1277
        %v1666 = vunpack.c.l.b16 %v1278
        %v1667 = vunpack.c.h.b16 %v1278
        %v1668 = vpack.c.b16 %v1608, %v1604
        %v1669 = vpack.c.b16 %v1609, %v1605
        %v1670 = vpack.c.b16 %v1610, %v1606
        %v1671 = vpack.c.b16 %v1611, %v1607
        %v1672 = vpack.c.b16 %v1616, %v1612
        %v1673 = vpack.c.b16 %v1617, %v1613
        %v1674 = vpack.c.b16 %v1618, %v1614
        %v1675 = vpack.c.b16 %v1619, %v1615
        %v1676 = vpack.c.b16 %v1624, %v1620
        %v1677 = vpack.c.b16 %v1625, %v1621
        %v1678 = vpack.c.b16 %v1626, %v1622
        %v1679 = vpack.c.b16 %v1627, %v1623
        %v1680 = vpack.c.b16 %v1632, %v1628
        %v1681 = vpack.c.b16 %v1633, %v1629
        %v1682 = vpack.c.b16 %v1634, %v1630
        %v1683 = vpack.c.b16 %v1635, %v1631
        %v1684 = vpack.c.b16 %v1640, %v1636
        %v1685 = vpack.c.b16 %v1641, %v1637
        %v1686 = vpack.c.b16 %v1642, %v1638
        %v1687 = vpack.c.b16 %v1643, %v1639
        %v1688 = vpack.c.b16 %v1648, %v1644
        %v1689 = vpack.c.b16 %v1649, %v1645
        %v1690 = vpack.c.b16 %v1650, %v1646
        %v1691 = vpack.c.b16 %v1651, %v1647
        %v1692 = vpack.c.b16 %v1656, %v1652
        %v1693 = vpack.c.b16 %v1657, %v1653
        %v1694 = vpack.c.b16 %v1658, %v1654
        %v1695 = vpack.c.b16 %v1659, %v1655
        %v1696 = vpack.c.b16 %v1664, %v1660
        %v1697 = vpack.c.b16 %v1665, %v1661
        %v1698 = vpack.c.b16 %v1666, %v1662
        %v1699 = vpack.c.b16 %v1667, %v1663
        %1732 = vmatprep.subr.bf16.mxu0 %v1669
        %1733 = vmatpush1.bf16.msra.mxu0 %v1668
        %1734 = vmatprep.subr.bf16.mxu0 %v1673
        %1735 = vmatpush1.bf16.msra.mxu0 %v1672
        %1736 = vmatprep.subr.bf16.mxu0 %v1677
        %1737 = vmatpush1.bf16.msra.mxu0 %v1676
        %1738 = vmatprep.subr.bf16.mxu0 %v1681
        %1739 = vmatpush1.bf16.msra.mxu0 %v1680
        %1740 = vmatprep.subr.bf16.mxu0 %v1685
        %1741 = vmatpush1.bf16.msra.mxu0 %v1684
        %1742 = vmatprep.subr.bf16.mxu0 %v1689
        %1743 = vmatpush1.bf16.msra.mxu0 %v1688
        %1744 = vmatprep.subr.bf16.mxu0 %v1693
        %1745 = vmatpush1.bf16.msra.mxu0 %v1692
        %1746 = vmatprep.subr.bf16.mxu0 %v1697
        %1747 = vmatpush1.bf16.msra.mxu0 %v1696
        %1748 = vmatprep.subr.bf16.mxu0 0
        %1749 = vmatpush1.bf16.msra.mxu0 0
        %1750 = vmatprep.subr.bf16.mxu0 0
        %1751 = vmatpush1.bf16.msra.mxu0 0
        %1752 = vmatprep.subr.bf16.mxu0 0
        %1753 = vmatpush1.bf16.msra.mxu0 0
        %1754 = vmatprep.subr.bf16.mxu0 0
        %1755 = vmatpush1.bf16.msra.mxu0 0
        %1756 = vmatprep.subr.bf16.mxu0 0
        %1757 = vmatpush1.bf16.msra.mxu0 0
        %1758 = vmatprep.subr.bf16.mxu0 0
        %1759 = vmatpush1.bf16.msra.mxu0 0
        %1760 = vmatprep.subr.bf16.mxu0 0
        %1761 = vmatpush1.bf16.msra.mxu0 0
        %1762 = vmatprep.subr.bf16.mxu0 0
        %1763 = vmatpush1.bf16.msra.mxu0 0
        %1764 = vmatprep.mubr.bf16.mxu0 0
        %1765 = vmatmul.mubr.bf16.gmra.mrb[0].mxu0 0
        %v1766 = vpop.f32.mrb[0].mxu0
        %v1767 = vadd.f32 0.0, %v1766
        %v1768 = vpop.f32.mrb[0].mxu0
        %v1769 = vadd.f32 0.0, %v1768
        %v1770 = vpop.f32.mrb[0].mxu0
        %v1771 = vpop.f32.mrb[0].mxu0
        %1772 = vdwg.mxu0
        %1773 = vmatprep.subr.bf16.mxu0 %v1671
        %1774 = vmatpush1.bf16.msra.mxu0 %v1670
        %1775 = vmatprep.subr.bf16.mxu0 %v1675
        %1776 = vmatpush1.bf16.msra.mxu0 %v1674
        %1777 = vmatprep.subr.bf16.mxu0 %v1679
        %1778 = vmatpush1.bf16.msra.mxu0 %v1678
        %1779 = vmatprep.subr.bf16.mxu0 %v1683
        %1780 = vmatpush1.bf16.msra.mxu0 %v1682
        %1781 = vmatprep.subr.bf16.mxu0 %v1687
        %1782 = vmatpush1.bf16.msra.mxu0 %v1686
        %1783 = vmatprep.subr.bf16.mxu0 %v1691
        %1784 = vmatpush1.bf16.msra.mxu0 %v1690
        %1785 = vmatprep.subr.bf16.mxu0 %v1695
        %1786 = vmatpush1.bf16.msra.mxu0 %v1694
        %1787 = vmatprep.subr.bf16.mxu0 %v1699
        %1788 = vmatpush1.bf16.msra.mxu0 %v1698
        %1789 = vmatprep.subr.bf16.mxu0 0
        %1790 = vmatpush1.bf16.msra.mxu0 0
        %1791 = vmatprep.subr.bf16.mxu0 0
        %1792 = vmatpush1.bf16.msra.mxu0 0
        %1793 = vmatprep.subr.bf16.mxu0 0
        %1794 = vmatpush1.bf16.msra.mxu0 0
        %1795 = vmatprep.subr.bf16.mxu0 0
        %1796 = vmatpush1.bf16.msra.mxu0 0
        %1797 = vmatprep.subr.bf16.mxu0 0
        %1798 = vmatpush1.bf16.msra.mxu0 0
        %1799 = vmatprep.subr.bf16.mxu0 0
        %1800 = vmatpush1.bf16.msra.mxu0 0
        %1801 = vmatprep.subr.bf16.mxu0 0
        %1802 = vmatpush1.bf16.msra.mxu0 0
        %1803 = vmatprep.subr.bf16.mxu0 0
        %1804 = vmatpush1.bf16.msra.mxu0 0
        %1805 = vmatprep.mubr.bf16.mxu0 0
        %1806 = vmatmul.mubr.bf16.gmra.mrb[0].mxu0 0
        %v1807 = vpop.f32.mrb[0].mxu0
        %v1808 = vadd.f32 0.0, %v1807
        %v1809 = vpop.f32.mrb[0].mxu0
        %v1810 = vadd.f32 0.0, %v1809
        %v1811 = vpop.f32.mrb[0].mxu0
        %v1812 = vpop.f32.mrb[0].mxu0
        %1813 = vdwg.mxu0
        %v1846 = vunpack.c.l.b16 %v1215
        %v1847 = vunpack.c.h.b16 %v1215
        %v1848 = vunpack.c.l.b16 %v1216
        %v1849 = vunpack.c.h.b16 %v1216
        %v1850 = vunpack.c.l.b16 %v1217
        %v1851 = vunpack.c.h.b16 %v1217
        %v1852 = vunpack.c.l.b16 %v1218
        %v1853 = vunpack.c.h.b16 %v1218
        %v1854 = vunpack.c.l.b16 %v1219
        %v1855 = vunpack.c.h.b16 %v1219
        %v1856 = vunpack.c.l.b16 %v1220
        %v1857 = vunpack.c.h.b16 %v1220
        %v1858 = vunpack.c.l.b16 %v1221
        %v1859 = vunpack.c.h.b16 %v1221
        %v1860 = vunpack.c.l.b16 %v1222
        %v1861 = vunpack.c.h.b16 %v1222
        %v1862 = vunpack.c.l.b16 %v1223
        %v1863 = vunpack.c.h.b16 %v1223
        %v1864 = vunpack.c.l.b16 %v1224
        %v1865 = vunpack.c.h.b16 %v1224
        %v1866 = vunpack.c.l.b16 %v1225
        %v1867 = vunpack.c.h.b16 %v1225
        %v1868 = vunpack.c.l.b16 %v1226
        %v1869 = vunpack.c.h.b16 %v1226
        %v1870 = vunpack.c.l.b16 %v1227
        %v1871 = vunpack.c.h.b16 %v1227
        %v1872 = vunpack.c.l.b16 %v1228
        %v1873 = vunpack.c.h.b16 %v1228
        %v1874 = vunpack.c.l.b16 %v1229
        %v1875 = vunpack.c.h.b16 %v1229
        %v1876 = vunpack.c.l.b16 %v1230
        %v1877 = vunpack.c.h.b16 %v1230
        %v1878 = vunpack.c.l.b16 %v1231
        %v1879 = vunpack.c.h.b16 %v1231
        %v1880 = vunpack.c.l.b16 %v1232
        %v1881 = vunpack.c.h.b16 %v1232
        %v1882 = vunpack.c.l.b16 %v1233
        %v1883 = vunpack.c.h.b16 %v1233
        %v1884 = vunpack.c.l.b16 %v1234
        %v1885 = vunpack.c.h.b16 %v1234
        %v1886 = vunpack.c.l.b16 %v1235
        %v1887 = vunpack.c.h.b16 %v1235
        %v1888 = vunpack.c.l.b16 %v1236
        %v1889 = vunpack.c.h.b16 %v1236
        %v1890 = vunpack.c.l.b16 %v1237
        %v1891 = vunpack.c.h.b16 %v1237
        %v1892 = vunpack.c.l.b16 %v1238
        %v1893 = vunpack.c.h.b16 %v1238
        %v1894 = vunpack.c.l.b16 %v1239
        %v1895 = vunpack.c.h.b16 %v1239
        %v1896 = vunpack.c.l.b16 %v1240
        %v1897 = vunpack.c.h.b16 %v1240
        %v1898 = vunpack.c.l.b16 %v1241
        %v1899 = vunpack.c.h.b16 %v1241
        %v1900 = vunpack.c.l.b16 %v1242
        %v1901 = vunpack.c.h.b16 %v1242
        %v1902 = vunpack.c.l.b16 %v1243
        %v1903 = vunpack.c.h.b16 %v1243
        %v1904 = vunpack.c.l.b16 %v1244
        %v1905 = vunpack.c.h.b16 %v1244
        %v1906 = vunpack.c.l.b16 %v1245
        %v1907 = vunpack.c.h.b16 %v1245
        %v1908 = vunpack.c.l.b16 %v1246
        %v1909 = vunpack.c.h.b16 %v1246
        %v1910 = vpack.c.b16 %v1850, %v1846
        %v1911 = vpack.c.b16 %v1851, %v1847
        %v1912 = vpack.c.b16 %v1852, %v1848
        %v1913 = vpack.c.b16 %v1853, %v1849
        %v1914 = vpack.c.b16 %v1858, %v1854
        %v1915 = vpack.c.b16 %v1859, %v1855
        %v1916 = vpack.c.b16 %v1860, %v1856
        %v1917 = vpack.c.b16 %v1861, %v1857
        %v1918 = vpack.c.b16 %v1866, %v1862
        %v1919 = vpack.c.b16 %v1867, %v1863
        %v1920 = vpack.c.b16 %v1868, %v1864
        %v1921 = vpack.c.b16 %v1869, %v1865
        %v1922 = vpack.c.b16 %v1874, %v1870
        %v1923 = vpack.c.b16 %v1875, %v1871
        %v1924 = vpack.c.b16 %v1876, %v1872
        %v1925 = vpack.c.b16 %v1877, %v1873
        %v1926 = vpack.c.b16 %v1882, %v1878
        %v1927 = vpack.c.b16 %v1883, %v1879
        %v1928 = vpack.c.b16 %v1884, %v1880
        %v1929 = vpack.c.b16 %v1885, %v1881
        %v1930 = vpack.c.b16 %v1890, %v1886
        %v1931 = vpack.c.b16 %v1891, %v1887
        %v1932 = vpack.c.b16 %v1892, %v1888
        %v1933 = vpack.c.b16 %v1893, %v1889
        %v1934 = vpack.c.b16 %v1898, %v1894
        %v1935 = vpack.c.b16 %v1899, %v1895
        %v1936 = vpack.c.b16 %v1900, %v1896
        %v1937 = vpack.c.b16 %v1901, %v1897
        %v1938 = vpack.c.b16 %v1906, %v1902
        %v1939 = vpack.c.b16 %v1907, %v1903
        %v1940 = vpack.c.b16 %v1908, %v1904
        %v1941 = vpack.c.b16 %v1909, %v1905
        %1974 = vmatprep.subr.bf16.mxu0 %v1911
        %1975 = vmatpush1.bf16.msra.mxu0 %v1910
        %1976 = vmatprep.subr.bf16.mxu0 %v1915
        %1977 = vmatpush1.bf16.msra.mxu0 %v1914
        %1978 = vmatprep.subr.bf16.mxu0 %v1919
        %1979 = vmatpush1.bf16.msra.mxu0 %v1918
        %1980 = vmatprep.subr.bf16.mxu0 %v1923
        %1981 = vmatpush1.bf16.msra.mxu0 %v1922
        %1982 = vmatprep.subr.bf16.mxu0 %v1927
        %1983 = vmatpush1.bf16.msra.mxu0 %v1926
        %1984 = vmatprep.subr.bf16.mxu0 %v1931
        %1985 = vmatpush1.bf16.msra.mxu0 %v1930
        %1986 = vmatprep.subr.bf16.mxu0 %v1935
        %1987 = vmatpush1.bf16.msra.mxu0 %v1934
        %1988 = vmatprep.subr.bf16.mxu0 %v1939
        %1989 = vmatpush1.bf16.msra.mxu0 %v1938
        %1990 = vmatprep.subr.bf16.mxu0 0
        %1991 = vmatpush1.bf16.msra.mxu0 0
        %1992 = vmatprep.subr.bf16.mxu0 0
        %1993 = vmatpush1.bf16.msra.mxu0 0
        %1994 = vmatprep.subr.bf16.mxu0 0
        %1995 = vmatpush1.bf16.msra.mxu0 0
        %1996 = vmatprep.subr.bf16.mxu0 0
        %1997 = vmatpush1.bf16.msra.mxu0 0
        %1998 = vmatprep.subr.bf16.mxu0 0
        %1999 = vmatpush1.bf16.msra.mxu0 0
        %2000 = vmatprep.subr.bf16.mxu0 0
        %2001 = vmatpush1.bf16.msra.mxu0 0
        %2002 = vmatprep.subr.bf16.mxu0 0
        %2003 = vmatpush1.bf16.msra.mxu0 0
        %2004 = vmatprep.subr.bf16.mxu0 0
        %2005 = vmatpush1.bf16.msra.mxu0 0
        %2006 = vmatprep.mubr.bf16.mxu0 0
        %2007 = vmatmul.mubr.bf16.gmra.mrb[0].mxu0 %v1571
        %v2008 = vpop.f32.mrb[0].mxu0
        %v2009 = vadd.f32 %v1767, %v2008
        %v2010 = vpop.f32.mrb[0].mxu0
        %v2011 = vadd.f32 %v1769, %v2010
        %v2012 = vpop.f32.mrb[0].mxu0
        %v2013 = vpop.f32.mrb[0].mxu0
        %2014 = vdwg.mxu0
        %2015 = vmatprep.subr.bf16.mxu0 %v1913
        %2016 = vmatpush1.bf16.msra.mxu0 %v1912
        %2017 = vmatprep.subr.bf16.mxu0 %v1917
        %2018 = vmatpush1.bf16.msra.mxu0 %v1916
        %2019 = vmatprep.subr.bf16.mxu0 %v1921
        %2020 = vmatpush1.bf16.msra.mxu0 %v1920
        %2021 = vmatprep.subr.bf16.mxu0 %v1925
        %2022 = vmatpush1.bf16.msra.mxu0 %v1924
        %2023 = vmatprep.subr.bf16.mxu0 %v1929
        %2024 = vmatpush1.bf16.msra.mxu0 %v1928
        %2025 = vmatprep.subr.bf16.mxu0 %v1933
        %2026 = vmatpush1.bf16.msra.mxu0 %v1932
        %2027 = vmatprep.subr.bf16.mxu0 %v1937
        %2028 = vmatpush1.bf16.msra.mxu0 %v1936
        %2029 = vmatprep.subr.bf16.mxu0 %v1941
        %2030 = vmatpush1.bf16.msra.mxu0 %v1940
        %2031 = vmatprep.subr.bf16.mxu0 0
        %2032 = vmatpush1.bf16.msra.mxu0 0
        %2033 = vmatprep.subr.bf16.mxu0 0
        %2034 = vmatpush1.bf16.msra.mxu0 0
        %2035 = vmatprep.subr.bf16.mxu0 0
        %2036 = vmatpush1.bf16.msra.mxu0 0
        %2037 = vmatprep.subr.bf16.mxu0 0
        %2038 = vmatpush1.bf16.msra.mxu0 0
        %2039 = vmatprep.subr.bf16.mxu0 0
        %2040 = vmatpush1.bf16.msra.mxu0 0
        %2041 = vmatprep.subr.bf16.mxu0 0
        %2042 = vmatpush1.bf16.msra.mxu0 0
        %2043 = vmatprep.subr.bf16.mxu0 0
        %2044 = vmatpush1.bf16.msra.mxu0 0
        %2045 = vmatprep.subr.bf16.mxu0 0
        %2046 = vmatpush1.bf16.msra.mxu0 0
        %2047 = vmatprep.mubr.bf16.mxu0 0
        %2048 = vmatmul.mubr.bf16.gmra.mrb[0].mxu0 %v1571
        %v2049 = vpop.f32.mrb[0].mxu0
        %v2050 = vadd.f32 %v1808, %v2049
        %v2051 = vpop.f32.mrb[0].mxu0
        %v2052 = vadd.f32 %v1810, %v2051
        %v2053 = vpop.f32.mrb[0].mxu0
        %v2054 = vpop.f32.mrb[0].mxu0
        %2055 = vdwg.mxu0
        %v2056 = vadd.f32 %v2009, %v1284
        %v2057 = vadd.f32 %v2011, %v1288
        %v2058 = vadd.f32 %v2050, %v1292
        %v2059 = vadd.f32 %v2052, %v1296
        %v2060 = vxor.u32 %v2056, 2147483648
        %v2061 = vmul.f32 %v2060, 1.442695
        %v2062 = vpow.pop %v2061
        %v2063 = vadd.f32 %v2062, 1.0
        %v2064 = vrcp.pop %v2063
        %v2065 = vmul.f32 1.0, %v2064
        %v2066 = vxor.u32 %v2057, 2147483648
        %v2067 = vmul.f32 %v2066, 1.442695
        %v2068 = vpow.pop %v2067
        %v2069 = vadd.f32 %v2068, 1.0
        %v2070 = vrcp.pop %v2069
        %v2071 = vmul.f32 1.0, %v2070
        %v2072 = vtanh.pop %v2058
        %v2073 = vxor.u32 %v2059, 2147483648
        %v2074 = vmul.f32 %v2073, 1.442695
        %v2075 = vpow.pop %v2074
        %v2076 = vadd.f32 %v2075, 1.0
        %v2077 = vrcp.pop %v2076
        %v2078 = vmul.f32 1.0, %v2077
        %v2079 = vmul.f32 %v2071, 0.0
        %v2080 = vmul.f32 %v2065, %v2072
        %v2081 = vadd.f32 %v2079, %v2080
        %v2082 = vtanh.pop %v2081
        %v2083 = vmul.f32 %v2078, %v2082
        %2084 = vmatprep.subr.bf16.mxu0 %v1398
        %2085 = vmatpush1.bf16.msra.mxu0 %v1397
        %2086 = vmatprep.subr.bf16.mxu0 %v1402
        %2087 = vmatpush1.bf16.msra.mxu0 %v1401
        %2088 = vmatprep.subr.bf16.mxu0 %v1406
        %2089 = vmatpush1.bf16.msra.mxu0 %v1405
        %2090 = vmatprep.subr.bf16.mxu0 %v1410
        %2091 = vmatpush1.bf16.msra.mxu0 %v1409
        %2092 = vmatprep.subr.bf16.mxu0 %v1414
        %2093 = vmatpush1.bf16.msra.mxu0 %v1413
        %2094 = vmatprep.subr.bf16.mxu0 %v1418
        %2095 = vmatpush1.bf16.msra.mxu0 %v1417
        %2096 = vmatprep.subr.bf16.mxu0 %v1422
        %2097 = vmatpush1.bf16.msra.mxu0 %v1421
        %2098 = vmatprep.subr.bf16.mxu0 %v1426
        %2099 = vmatpush1.bf16.msra.mxu0 %v1425
        %2100 = vmatprep.subr.bf16.mxu0 0
        %2101 = vmatpush1.bf16.msra.mxu0 0
        %2102 = vmatprep.subr.bf16.mxu0 0
        %2103 = vmatpush1.bf16.msra.mxu0 0
        %2104 = vmatprep.subr.bf16.mxu0 0
        %2105 = vmatpush1.bf16.msra.mxu0 0
        %2106 = vmatprep.subr.bf16.mxu0 0
        %2107 = vmatpush1.bf16.msra.mxu0 0
        %2108 = vmatprep.subr.bf16.mxu0 0
        %2109 = vmatpush1.bf16.msra.mxu0 0
        %2110 = vmatprep.subr.bf16.mxu0 0
        %2111 = vmatpush1.bf16.msra.mxu0 0
        %2112 = vmatprep.subr.bf16.mxu0 0
        %2113 = vmatpush1.bf16.msra.mxu0 0
        %2114 = vmatprep.subr.bf16.mxu0 0
        %2115 = vmatpush1.bf16.msra.mxu0 0
        %2116 = vmatprep.mubr.bf16.mxu0 0
        %2117 = vmatmul.mubr.bf16.gmra.mrb[0].mxu0 %v1571
        %v2118 = vpop.f32.mrb[0].mxu0
        %v2119 = vadd.f32 0.0, %v2118
        %v2120 = vpop.f32.mrb[0].mxu0
        %v2121 = vadd.f32 0.0, %v2120
        %v2122 = vpop.f32.mrb[0].mxu0
        %v2123 = vpop.f32.mrb[0].mxu0
        %2124 = vdwg.mxu0
        %2125 = vmatprep.subr.bf16.mxu0 %v1400
        %2126 = vmatpush1.bf16.msra.mxu0 %v1399
        %2127 = vmatprep.subr.bf16.mxu0 %v1404
        %2128 = vmatpush1.bf16.msra.mxu0 %v1403
        %2129 = vmatprep.subr.bf16.mxu0 %v1408
        %2130 = vmatpush1.bf16.msra.mxu0 %v1407
        %2131 = vmatprep.subr.bf16.mxu0 %v1412
        %2132 = vmatpush1.bf16.msra.mxu0 %v1411
        %2133 = vmatprep.subr.bf16.mxu0 %v1416
        %2134 = vmatpush1.bf16.msra.mxu0 %v1415
        %2135 = vmatprep.subr.bf16.mxu0 %v1420
        %2136 = vmatpush1.bf16.msra.mxu0 %v1419
        %2137 = vmatprep.subr.bf16.mxu0 %v1424
        %2138 = vmatpush1.bf16.msra.mxu0 %v1423
        %2139 = vmatprep.subr.bf16.mxu0 %v1428
        %2140 = vmatpush1.bf16.msra.mxu0 %v1427
        %2141 = vmatprep.subr.bf16.mxu0 0
        %2142 = vmatpush1.bf16.msra.mxu0 0
        %2143 = vmatprep.subr.bf16.mxu0 0
        %2144 = vmatpush1.bf16.msra.mxu0 0
        %2145 = vmatprep.subr.bf16.mxu0 0
        %2146 = vmatpush1.bf16.msra.mxu0 0
        %2147 = vmatprep.subr.bf16.mxu0 0
        %2148 = vmatpush1.bf16.msra.mxu0 0
        %2149 = vmatprep.subr.bf16.mxu0 0
        %2150 = vmatpush1.bf16.msra.mxu0 0
        %2151 = vmatprep.subr.bf16.mxu0 0
        %2152 = vmatpush1.bf16.msra.mxu0 0
        %2153 = vmatprep.subr.bf16.mxu0 0
        %2154 = vmatpush1.bf16.msra.mxu0 0
        %2155 = vmatprep.subr.bf16.mxu0 0
        %2156 = vmatpush1.bf16.msra.mxu0 0
        %2157 = vmatprep.mubr.bf16.mxu0 0
        %2158 = vmatmul.mubr.bf16.gmra.mrb[0].mxu0 %v1571
        %v2159 = vpop.f32.mrb[0].mxu0
        %v2160 = vadd.f32 0.0, %v2159
        %v2161 = vpop.f32.mrb[0].mxu0
        %v2162 = vadd.f32 0.0, %v2161
        %v2163 = vpop.f32.mrb[0].mxu0
        %v2164 = vpop.f32.mrb[0].mxu0
        %2165 = vdwg.mxu0
        %v2166 = vadd.f32 %v1076, %v2119
        %v2167 = vadd.f32 %v1078, %v2121
        %v2168 = vadd.f32 %v1149, %v2160
        %v2169 = vadd.f32 %v1151, %v2162
        %v2170 = vxor.u32 %v2166, 2147483648
        %v2171 = vmul.f32 %v2170, 1.442695
        %v2172 = vpow.pop %v2171
        %v2173 = vadd.f32 %v2172, 1.0
        %v2174 = vrcp.pop %v2173
        %v2175 = vmul.f32 1.0, %v2174
        %v2176 = vxor.u32 %v2167, 2147483648
        %v2177 = vmul.f32 %v2176, 1.442695
        %v2178 = vpow.pop %v2177
        %v2179 = vadd.f32 %v2178, 1.0
        %v2180 = vrcp.pop %v2179
        %v2181 = vmul.f32 1.0, %v2180
        %v2182 = vtanh.pop %v2168
        %v2183 = vxor.u32 %v2169, 2147483648
        %v2184 = vmul.f32 %v2183, 1.442695
        %v2185 = vpow.pop %v2184
        %v2186 = vadd.f32 %v2185, 1.0
        %v2187 = vrcp.pop %v2186
        %v2188 = vmul.f32 1.0, %v2187
        %v2189 = vmul.f32 %v2181, %v1568
        %v2190 = vmul.f32 %v2175, %v2182
        %v2191 = vadd.f32 %v2189, %v2190
        %v2192 = vtanh.pop %v2191
        %v2193 = vmul.f32 %v2188, %v2192
        %v2194 = vpack.c.bf16 %v2193, %v2193
        %v2195 = vpack.c.bf16 %v2083, %v2083
        %2196 = vmatprep.subr.bf16.mxu0 %v1669
        %2197 = vmatpush1.bf16.msra.mxu0 %v1668
        %2198 = vmatprep.subr.bf16.mxu0 %v1673
        %2199 = vmatpush1.bf16.msra.mxu0 %v1672
        %2200 = vmatprep.subr.bf16.mxu0 %v1677
        %2201 = vmatpush1.bf16.msra.mxu0 %v1676
        %2202 = vmatprep.subr.bf16.mxu0 %v1681
        %2203 = vmatpush1.bf16.msra.mxu0 %v1680
        %2204 = vmatprep.subr.bf16.mxu0 %v1685
        %2205 = vmatpush1.bf16.msra.mxu0 %v1684
        %2206 = vmatprep.subr.bf16.mxu0 %v1689
        %2207 = vmatpush1.bf16.msra.mxu0 %v1688
        %2208 = vmatprep.subr.bf16.mxu0 %v1693
        %2209 = vmatpush1.bf16.msra.mxu0 %v1692
        %2210 = vmatprep.subr.bf16.mxu0 %v1697
        %2211 = vmatpush1.bf16.msra.mxu0 %v1696
        %2212 = vmatprep.subr.bf16.mxu0 0
        %2213 = vmatpush1.bf16.msra.mxu0 0
        %2214 = vmatprep.subr.bf16.mxu0 0
        %2215 = vmatpush1.bf16.msra.mxu0 0
        %2216 = vmatprep.subr.bf16.mxu0 0
        %2217 = vmatpush1.bf16.msra.mxu0 0
        %2218 = vmatprep.subr.bf16.mxu0 0
        %2219 = vmatpush1.bf16.msra.mxu0 0
        %2220 = vmatprep.subr.bf16.mxu0 0
        %2221 = vmatpush1.bf16.msra.mxu0 0
        %2222 = vmatprep.subr.bf16.mxu0 0
        %2223 = vmatpush1.bf16.msra.mxu0 0
        %2224 = vmatprep.subr.bf16.mxu0 0
        %2225 = vmatpush1.bf16.msra.mxu0 0
        %2226 = vmatprep.subr.bf16.mxu0 0
        %2227 = vmatpush1.bf16.msra.mxu0 0
        %2228 = vmatprep.mubr.bf16.mxu0 0
        %2229 = vmatmul.mubr.bf16.gmra.mrb[0].mxu0 %v2195
        %v2230 = vpop.f32.mrb[0].mxu0
        %v2231 = vadd.f32 0.0, %v2230
        %v2232 = vpop.f32.mrb[0].mxu0
        %v2233 = vadd.f32 0.0, %v2232
        %v2234 = vpop.f32.mrb[0].mxu0
        %v2235 = vpop.f32.mrb[0].mxu0
        %2236 = vdwg.mxu0
        %2237 = vmatprep.subr.bf16.mxu0 %v1671
        %2238 = vmatpush1.bf16.msra.mxu0 %v1670
        %2239 = vmatprep.subr.bf16.mxu0 %v1675
        %2240 = vmatpush1.bf16.msra.mxu0 %v1674
        %2241 = vmatprep.subr.bf16.mxu0 %v1679
        %2242 = vmatpush1.bf16.msra.mxu0 %v1678
        %2243 = vmatprep.subr.bf16.mxu0 %v1683
        %2244 = vmatpush1.bf16.msra.mxu0 %v1682
        %2245 = vmatprep.subr.bf16.mxu0 %v1687
        %2246 = vmatpush1.bf16.msra.mxu0 %v1686
        %2247 = vmatprep.subr.bf16.mxu0 %v1691
        %2248 = vmatpush1.bf16.msra.mxu0 %v1690
        %2249 = vmatprep.subr.bf16.mxu0 %v1695
        %2250 = vmatpush1.bf16.msra.mxu0 %v1694
        %2251 = vmatprep.subr.bf16.mxu0 %v1699
        %2252 = vmatpush1.bf16.msra.mxu0 %v1698
        %2253 = vmatprep.subr.bf16.mxu0 0
        %2254 = vmatpush1.bf16.msra.mxu0 0
        %2255 = vmatprep.subr.bf16.mxu0 0
        %2256 = vmatpush1.bf16.msra.mxu0 0
        %2257 = vmatprep.subr.bf16.mxu0 0
        %2258 = vmatpush1.bf16.msra.mxu0 0
        %2259 = vmatprep.subr.bf16.mxu0 0
        %2260 = vmatpush1.bf16.msra.mxu0 0
        %2261 = vmatprep.subr.bf16.mxu0 0
        %2262 = vmatpush1.bf16.msra.mxu0 0
        %2263 = vmatprep.subr.bf16.mxu0 0
        %2264 = vmatpush1.bf16.msra.mxu0 0
        %2265 = vmatprep.subr.bf16.mxu0 0
        %2266 = vmatpush1.bf16.msra.mxu0 0
        %2267 = vmatprep.subr.bf16.mxu0 0
        %2268 = vmatpush1.bf16.msra.mxu0 0
        %2269 = vmatprep.mubr.bf16.mxu0 0
        %2270 = vmatmul.mubr.bf16.gmra.mrb[0].mxu0 %v2195
        %v2271 = vpop.f32.mrb[0].mxu0
        %v2272 = vadd.f32 0.0, %v2271
        %v2273 = vpop.f32.mrb[0].mxu0
        %v2274 = vadd.f32 0.0, %v2273
        %v2275 = vpop.f32.mrb[0].mxu0
        %v2276 = vpop.f32.mrb[0].mxu0
        %2277 = vdwg.mxu0
        %2278 = vmatprep.subr.bf16.mxu0 %v1911
        %2279 = vmatpush1.bf16.msra.mxu0 %v1910
        %2280 = vmatprep.subr.bf16.mxu0 %v1915
        %2281 = vmatpush1.bf16.msra.mxu0 %v1914
        %2282 = vmatprep.subr.bf16.mxu0 %v1919
        %2283 = vmatpush1.bf16.msra.mxu0 %v1918
        %2284 = vmatprep.subr.bf16.mxu0 %v1923
        %2285 = vmatpush1.bf16.msra.mxu0 %v1922
        %2286 = vmatprep.subr.bf16.mxu0 %v1927
        %2287 = vmatpush1.bf16.msra.mxu0 %v1926
        %2288 = vmatprep.subr.bf16.mxu0 %v1931
        %2289 = vmatpush1.bf16.msra.mxu0 %v1930
        %2290 = vmatprep.subr.bf16.mxu0 %v1935
        %2291 = vmatpush1.bf16.msra.mxu0 %v1934
        %2292 = vmatprep.subr.bf16.mxu0 %v1939
        %2293 = vmatpush1.bf16.msra.mxu0 %v1938
        %2294 = vmatprep.subr.bf16.mxu0 0
        %2295 = vmatpush1.bf16.msra.mxu0 0
        %2296 = vmatprep.subr.bf16.mxu0 0
        %2297 = vmatpush1.bf16.msra.mxu0 0
        %2298 = vmatprep.subr.bf16.mxu0 0
        %2299 = vmatpush1.bf16.msra.mxu0 0
        %2300 = vmatprep.subr.bf16.mxu0 0
        %2301 = vmatpush1.bf16.msra.mxu0 0
        %2302 = vmatprep.subr.bf16.mxu0 0
        %2303 = vmatpush1.bf16.msra.mxu0 0
        %2304 = vmatprep.subr.bf16.mxu0 0
        %2305 = vmatpush1.bf16.msra.mxu0 0
        %2306 = vmatprep.subr.bf16.mxu0 0
        %2307 = vmatpush1.bf16.msra.mxu0 0
        %2308 = vmatprep.subr.bf16.mxu0 0
        %2309 = vmatpush1.bf16.msra.mxu0 0
        %2310 = vmatprep.mubr.bf16.mxu0 0
        %2311 = vmatmul.mubr.bf16.gmra.mrb[0].mxu0 %v2194
        %v2312 = vpop.f32.mrb[0].mxu0
        %v2313 = vadd.f32 %v2231, %v2312
        %v2314 = vpop.f32.mrb[0].mxu0
        %v2315 = vadd.f32 %v2233, %v2314
        %v2316 = vpop.f32.mrb[0].mxu0
        %v2317 = vpop.f32.mrb[0].mxu0
        %2318 = vdwg.mxu0
        %2319 = vmatprep.subr.bf16.mxu0 %v1913
        %2320 = vmatpush1.bf16.msra.mxu0 %v1912
        %2321 = vmatprep.subr.bf16.mxu0 %v1917
        %2322 = vmatpush1.bf16.msra.mxu0 %v1916
        %2323 = vmatprep.subr.bf16.mxu0 %v1921
        %2324 = vmatpush1.bf16.msra.mxu0 %v1920
        %2325 = vmatprep.subr.bf16.mxu0 %v1925
        %2326 = vmatpush1.bf16.msra.mxu0 %v1924
        %2327 = vmatprep.subr.bf16.mxu0 %v1929
        %2328 = vmatpush1.bf16.msra.mxu0 %v1928
        %2329 = vmatprep.subr.bf16.mxu0 %v1933
        %2330 = vmatpush1.bf16.msra.mxu0 %v1932
        %2331 = vmatprep.subr.bf16.mxu0 %v1937
        %2332 = vmatpush1.bf16.msra.mxu0 %v1936
        %2333 = vmatprep.subr.bf16.mxu0 %v1941
        %2334 = vmatpush1.bf16.msra.mxu0 %v1940
        %2335 = vmatprep.subr.bf16.mxu0 0
        %2336 = vmatpush1.bf16.msra.mxu0 0
        %2337 = vmatprep.subr.bf16.mxu0 0
        %2338 = vmatpush1.bf16.msra.mxu0 0
        %2339 = vmatprep.subr.bf16.mxu0 0
        %2340 = vmatpush1.bf16.msra.mxu0 0
        %2341 = vmatprep.subr.bf16.mxu0 0
        %2342 = vmatpush1.bf16.msra.mxu0 0
        %2343 = vmatprep.subr.bf16.mxu0 0
        %2344 = vmatpush1.bf16.msra.mxu0 0
        %2345 = vmatprep.subr.bf16.mxu0 0
        %2346 = vmatpush1.bf16.msra.mxu0 0
        %2347 = vmatprep.subr.bf16.mxu0 0
        %2348 = vmatpush1.bf16.msra.mxu0 0
        %2349 = vmatprep.subr.bf16.mxu0 0
        %2350 = vmatpush1.bf16.msra.mxu0 0
        %2351 = vmatprep.mubr.bf16.mxu0 0
        %2352 = vmatmul.mubr.bf16.gmra.mrb[0].mxu0 %v2194
        %v2353 = vpop.f32.mrb[0].mxu0
        %v2354 = vadd.f32 %v2272, %v2353
        %v2355 = vpop.f32.mrb[0].mxu0
        %v2356 = vadd.f32 %v2274, %v2355
        %v2357 = vpop.f32.mrb[0].mxu0
        %v2358 = vpop.f32.mrb[0].mxu0
        %2359 = vdwg.mxu0
        %v2360 = vadd.f32 %v2313, %v1284
        %v2361 = vadd.f32 %v2315, %v1288
        %v2362 = vadd.f32 %v2354, %v1292
        %v2363 = vadd.f32 %v2356, %v1296
        %v2364 = vxor.u32 %v2360, 2147483648
        %v2365 = vmul.f32 %v2364, 1.442695
        %v2366 = vpow.pop %v2365
        %v2367 = vadd.f32 %v2366, 1.0
        %v2368 = vrcp.pop %v2367
        %v2369 = vmul.f32 1.0, %v2368
        %v2370 = vxor.u32 %v2361, 2147483648
        %v2371 = vmul.f32 %v2370, 1.442695
        %v2372 = vpow.pop %v2371
        %v2373 = vadd.f32 %v2372, 1.0
        %v2374 = vrcp.pop %v2373
        %v2375 = vmul.f32 1.0, %v2374
        %v2376 = vtanh.pop %v2362
        %v2377 = vxor.u32 %v2363, 2147483648
        %v2378 = vmul.f32 %v2377, 1.442695
        %v2379 = vpow.pop %v2378
        %v2380 = vadd.f32 %v2379, 1.0
        %v2381 = vrcp.pop %v2380
        %v2382 = vmul.f32 1.0, %v2381
        %v2383 = vmul.f32 %v2375, %v2081
        %v2384 = vmul.f32 %v2369, %v2376
        %v2385 = vadd.f32 %v2383, %v2384
        %v2386 = vtanh.pop %v2385
        %v2387 = vmul.f32 %v2382, %v2386
        %2388 = vmatprep.subr.bf16.mxu0 %v1398
        %2389 = vmatpush1.bf16.msra.mxu0 %v1397
        %2390 = vmatprep.subr.bf16.mxu0 %v1402
        %2391 = vmatpush1.bf16.msra.mxu0 %v1401
        %2392 = vmatprep.subr.bf16.mxu0 %v1406
        %2393 = vmatpush1.bf16.msra.mxu0 %v1405
        %2394 = vmatprep.subr.bf16.mxu0 %v1410
        %2395 = vmatpush1.bf16.msra.mxu0 %v1409
        %2396 = vmatprep.subr.bf16.mxu0 %v1414
        %2397 = vmatpush1.bf16.msra.mxu0 %v1413
        %2398 = vmatprep.subr.bf16.mxu0 %v1418
        %2399 = vmatpush1.bf16.msra.mxu0 %v1417
        %2400 = vmatprep.subr.bf16.mxu0 %v1422
        %2401 = vmatpush1.bf16.msra.mxu0 %v1421
        %2402 = vmatprep.subr.bf16.mxu0 %v1426
        %2403 = vmatpush1.bf16.msra.mxu0 %v1425
        %2404 = vmatprep.subr.bf16.mxu0 0
        %2405 = vmatpush1.bf16.msra.mxu0 0
        %2406 = vmatprep.subr.bf16.mxu0 0
        %2407 = vmatpush1.bf16.msra.mxu0 0
        %2408 = vmatprep.subr.bf16.mxu0 0
        %2409 = vmatpush1.bf16.msra.mxu0 0
        %2410 = vmatprep.subr.bf16.mxu0 0
        %2411 = vmatpush1.bf16.msra.mxu0 0
        %2412 = vmatprep.subr.bf16.mxu0 0
        %2413 = vmatpush1.bf16.msra.mxu0 0
        %2414 = vmatprep.subr.bf16.mxu0 0
        %2415 = vmatpush1.bf16.msra.mxu0 0
        %2416 = vmatprep.subr.bf16.mxu0 0
        %2417 = vmatpush1.bf16.msra.mxu0 0
        %2418 = vmatprep.subr.bf16.mxu0 0
        %2419 = vmatpush1.bf16.msra.mxu0 0
        %2420 = vmatprep.mubr.bf16.mxu0 0
        %2421 = vmatmul.mubr.bf16.gmra.mrb[0].mxu0 %v2194
        %v2422 = vpop.f32.mrb[0].mxu0
        %v2423 = vadd.f32 0.0, %v2422
        %v2424 = vpop.f32.mrb[0].mxu0
        %v2425 = vadd.f32 0.0, %v2424
        %v2426 = vpop.f32.mrb[0].mxu0
        %v2427 = vpop.f32.mrb[0].mxu0
        %2428 = vdwg.mxu0
        %2429 = vmatprep.subr.bf16.mxu0 %v1400
        %2430 = vmatpush1.bf16.msra.mxu0 %v1399
        %2431 = vmatprep.subr.bf16.mxu0 %v1404
        %2432 = vmatpush1.bf16.msra.mxu0 %v1403
        %2433 = vmatprep.subr.bf16.mxu0 %v1408
        %2434 = vmatpush1.bf16.msra.mxu0 %v1407
        %2435 = vmatprep.subr.bf16.mxu0 %v1412
        %2436 = vmatpush1.bf16.msra.mxu0 %v1411
        %2437 = vmatprep.subr.bf16.mxu0 %v1416
        %2438 = vmatpush1.bf16.msra.mxu0 %v1415
        %2439 = vmatprep.subr.bf16.mxu0 %v1420
        %2440 = vmatpush1.bf16.msra.mxu0 %v1419
        %2441 = vmatprep.subr.bf16.mxu0 %v1424
        %2442 = vmatpush1.bf16.msra.mxu0 %v1423
        %2443 = vmatprep.subr.bf16.mxu0 %v1428
        %2444 = vmatpush1.bf16.msra.mxu0 %v1427
        %2445 = vmatprep.subr.bf16.mxu0 0
        %2446 = vmatpush1.bf16.msra.mxu0 0
        %2447 = vmatprep.subr.bf16.mxu0 0
        %2448 = vmatpush1.bf16.msra.mxu0 0
        %2449 = vmatprep.subr.bf16.mxu0 0
        %2450 = vmatpush1.bf16.msra.mxu0 0
        %2451 = vmatprep.subr.bf16.mxu0 0
        %2452 = vmatpush1.bf16.msra.mxu0 0
        %2453 = vmatprep.subr.bf16.mxu0 0
        %2454 = vmatpush1.bf16.msra.mxu0 0
        %2455 = vmatprep.subr.bf16.mxu0 0
        %2456 = vmatpush1.bf16.msra.mxu0 0
        %2457 = vmatprep.subr.bf16.mxu0 0
        %2458 = vmatpush1.bf16.msra.mxu0 0
        %2459 = vmatprep.subr.bf16.mxu0 0
        %2460 = vmatpush1.bf16.msra.mxu0 0
        %2461 = vmatprep.mubr.bf16.mxu0 0
        %2462 = vmatmul.mubr.bf16.gmra.mrb[0].mxu0 %v2194
        %v2463 = vpop.f32.mrb[0].mxu0
        %v2464 = vadd.f32 0.0, %v2463
        %v2465 = vpop.f32.mrb[0].mxu0
        %v2466 = vadd.f32 0.0, %v2465
        %v2467 = vpop.f32.mrb[0].mxu0
        %v2468 = vpop.f32.mrb[0].mxu0
        %2469 = vdwg.mxu0
        %v2470 = vadd.f32 %v1082, %v2423
        %v2471 = vadd.f32 %v1084, %v2425
        %v2472 = vadd.f32 %v1155, %v2464
        %v2473 = vadd.f32 %v1157, %v2466
        %v2474 = vxor.u32 %v2470, 2147483648
        %v2475 = vmul.f32 %v2474, 1.442695
        %v2476 = vpow.pop %v2475
        %v2477 = vadd.f32 %v2476, 1.0
        %v2478 = vrcp.pop %v2477
        %v2479 = vmul.f32 1.0, %v2478
        %v2480 = vxor.u32 %v2471, 2147483648
        %v2481 = vmul.f32 %v2480, 1.442695
        %v2482 = vpow.pop %v2481
        %v2483 = vadd.f32 %v2482, 1.0
        %v2484 = vrcp.pop %v2483
        %v2485 = vmul.f32 1.0, %v2484
        %v2486 = vtanh.pop %v2472
        %v2487 = vxor.u32 %v2473, 2147483648
        %v2488 = vmul.f32 %v2487, 1.442695
        %v2489 = vpow.pop %v2488
        %v2490 = vadd.f32 %v2489, 1.0
        %v2491 = vrcp.pop %v2490
        %v2492 = vmul.f32 1.0, %v2491
        %v2493 = vmul.f32 %v2485, %v2191
        %v2494 = vmul.f32 %v2479, %v2486
        %v2495 = vadd.f32 %v2493, %v2494
        %v2496 = vtanh.pop %v2495
        %v2497 = vmul.f32 %v2492, %v2496
        %v2498 = vpack.c.bf16 %v2497, %v2497
        %v2499 = vpack.c.bf16 %v2387, %v2387
        %2500 = vmatprep.subr.bf16.mxu0 %v1669
        %2501 = vmatpush1.bf16.msra.mxu0 %v1668
        %2502 = vmatprep.subr.bf16.mxu0 %v1673
        %2503 = vmatpush1.bf16.msra.mxu0 %v1672
        %2504 = vmatprep.subr.bf16.mxu0 %v1677
        %2505 = vmatpush1.bf16.msra.mxu0 %v1676
        %2506 = vmatprep.subr.bf16.mxu0 %v1681
        %2507 = vmatpush1.bf16.msra.mxu0 %v1680
        %2508 = vmatprep.subr.bf16.mxu0 %v1685
        %2509 = vmatpush1.bf16.msra.mxu0 %v1684
        %2510 = vmatprep.subr.bf16.mxu0 %v1689
        %2511 = vmatpush1.bf16.msra.mxu0 %v1688
        %2512 = vmatprep.subr.bf16.mxu0 %v1693
        %2513 = vmatpush1.bf16.msra.mxu0 %v1692
        %2514 = vmatprep.subr.bf16.mxu0 %v1697
        %2515 = vmatpush1.bf16.msra.mxu0 %v1696
        %2516 = vmatprep.subr.bf16.mxu0 0
        %2517 = vmatpush1.bf16.msra.mxu0 0
        %2518 = vmatprep.subr.bf16.mxu0 0
        %2519 = vmatpush1.bf16.msra.mxu0 0
        %2520 = vmatprep.subr.bf16.mxu0 0
        %2521 = vmatpush1.bf16.msra.mxu0 0
        %2522 = vmatprep.subr.bf16.mxu0 0
        %2523 = vmatpush1.bf16.msra.mxu0 0
        %2524 = vmatprep.subr.bf16.mxu0 0
        %2525 = vmatpush1.bf16.msra.mxu0 0
        %2526 = vmatprep.subr.bf16.mxu0 0
        %2527 = vmatpush1.bf16.msra.mxu0 0
        %2528 = vmatprep.subr.bf16.mxu0 0
        %2529 = vmatpush1.bf16.msra.mxu0 0
        %2530 = vmatprep.subr.bf16.mxu0 0
        %2531 = vmatpush1.bf16.msra.mxu0 0
        %2532 = vmatprep.mubr.bf16.mxu0 0
        %2533 = vmatmul.mubr.bf16.gmra.mrb[0].mxu0 %v2499
        %v2534 = vpop.f32.mrb[0].mxu0
        %v2535 = vadd.f32 0.0, %v2534
        %v2536 = vpop.f32.mrb[0].mxu0
        %v2537 = vadd.f32 0.0, %v2536
        %v2538 = vpop.f32.mrb[0].mxu0
        %v2539 = vpop.f32.mrb[0].mxu0
        %2540 = vdwg.mxu0
        %2541 = vmatprep.subr.bf16.mxu0 %v1671
        %2542 = vmatpush1.bf16.msra.mxu0 %v1670
        %2543 = vmatprep.subr.bf16.mxu0 %v1675
        %2544 = vmatpush1.bf16.msra.mxu0 %v1674
        %2545 = vmatprep.subr.bf16.mxu0 %v1679
        %2546 = vmatpush1.bf16.msra.mxu0 %v1678
        %2547 = vmatprep.subr.bf16.mxu0 %v1683
        %2548 = vmatpush1.bf16.msra.mxu0 %v1682
        %2549 = vmatprep.subr.bf16.mxu0 %v1687
        %2550 = vmatpush1.bf16.msra.mxu0 %v1686
        %2551 = vmatprep.subr.bf16.mxu0 %v1691
        %2552 = vmatpush1.bf16.msra.mxu0 %v1690
        %2553 = vmatprep.subr.bf16.mxu0 %v1695
        %2554 = vmatpush1.bf16.msra.mxu0 %v1694
        %2555 = vmatprep.subr.bf16.mxu0 %v1699
        %2556 = vmatpush1.bf16.msra.mxu0 %v1698
        %2557 = vmatprep.subr.bf16.mxu0 0
        %2558 = vmatpush1.bf16.msra.mxu0 0
        %2559 = vmatprep.subr.bf16.mxu0 0
        %2560 = vmatpush1.bf16.msra.mxu0 0
        %2561 = vmatprep.subr.bf16.mxu0 0
        %2562 = vmatpush1.bf16.msra.mxu0 0
        %2563 = vmatprep.subr.bf16.mxu0 0
        %2564 = vmatpush1.bf16.msra.mxu0 0
        %2565 = vmatprep.subr.bf16.mxu0 0
        %2566 = vmatpush1.bf16.msra.mxu0 0
        %2567 = vmatprep.subr.bf16.mxu0 0
        %2568 = vmatpush1.bf16.msra.mxu0 0
        %2569 = vmatprep.subr.bf16.mxu0 0
        %2570 = vmatpush1.bf16.msra.mxu0 0
        %2571 = vmatprep.subr.bf16.mxu0 0
        %2572 = vmatpush1.bf16.msra.mxu0 0
        %2573 = vmatprep.mubr.bf16.mxu0 0
        %2574 = vmatmul.mubr.bf16.gmra.mrb[0].mxu0 %v2499
        %v2575 = vpop.f32.mrb[0].mxu0
        %v2576 = vadd.f32 0.0, %v2575
        %v2577 = vpop.f32.mrb[0].mxu0
        %v2578 = vadd.f32 0.0, %v2577
        %v2579 = vpop.f32.mrb[0].mxu0
        %v2580 = vpop.f32.mrb[0].mxu0
        %2581 = vdwg.mxu0
        %2582 = vmatprep.subr.bf16.mxu0 %v1911
        %2583 = vmatpush1.bf16.msra.mxu0 %v1910
        %2584 = vmatprep.subr.bf16.mxu0 %v1915
        %2585 = vmatpush1.bf16.msra.mxu0 %v1914
        %2586 = vmatprep.subr.bf16.mxu0 %v1919
        %2587 = vmatpush1.bf16.msra.mxu0 %v1918
        %2588 = vmatprep.subr.bf16.mxu0 %v1923
        %2589 = vmatpush1.bf16.msra.mxu0 %v1922
        %2590 = vmatprep.subr.bf16.mxu0 %v1927
        %2591 = vmatpush1.bf16.msra.mxu0 %v1926
        %2592 = vmatprep.subr.bf16.mxu0 %v1931
        %2593 = vmatpush1.bf16.msra.mxu0 %v1930
        %2594 = vmatprep.subr.bf16.mxu0 %v1935
        %2595 = vmatpush1.bf16.msra.mxu0 %v1934
        %2596 = vmatprep.subr.bf16.mxu0 %v1939
        %2597 = vmatpush1.bf16.msra.mxu0 %v1938
        %2598 = vmatprep.subr.bf16.mxu0 0
        %2599 = vmatpush1.bf16.msra.mxu0 0
        %2600 = vmatprep.subr.bf16.mxu0 0
        %2601 = vmatpush1.bf16.msra.mxu0 0
        %2602 = vmatprep.subr.bf16.mxu0 0
        %2603 = vmatpush1.bf16.msra.mxu0 0
        %2604 = vmatprep.subr.bf16.mxu0 0
        %2605 = vmatpush1.bf16.msra.mxu0 0
        %2606 = vmatprep.subr.bf16.mxu0 0
        %2607 = vmatpush1.bf16.msra.mxu0 0
        %2608 = vmatprep.subr.bf16.mxu0 0
        %2609 = vmatpush1.bf16.msra.mxu0 0
        %2610 = vmatprep.subr.bf16.mxu0 0
        %2611 = vmatpush1.bf16.msra.mxu0 0
        %2612 = vmatprep.subr.bf16.mxu0 0
        %2613 = vmatpush1.bf16.msra.mxu0 0
        %2614 = vmatprep.mubr.bf16.mxu0 0
        %2615 = vmatmul.mubr.bf16.gmra.mrb[0].mxu0 %v2498
        %v2616 = vpop.f32.mrb[0].mxu0
        %v2617 = vadd.f32 %v2535, %v2616
        %v2618 = vpop.f32.mrb[0].mxu0
        %v2619 = vadd.f32 %v2537, %v2618
        %v2620 = vpop.f32.mrb[0].mxu0
        %v2621 = vpop.f32.mrb[0].mxu0
        %2622 = vdwg.mxu0
        %2623 = vmatprep.subr.bf16.mxu0 %v1913
        %2624 = vmatpush1.bf16.msra.mxu0 %v1912
        %2625 = vmatprep.subr.bf16.mxu0 %v1917
        %2626 = vmatpush1.bf16.msra.mxu0 %v1916
        %2627 = vmatprep.subr.bf16.mxu0 %v1921
        %2628 = vmatpush1.bf16.msra.mxu0 %v1920
        %2629 = vmatprep.subr.bf16.mxu0 %v1925
        %2630 = vmatpush1.bf16.msra.mxu0 %v1924
        %2631 = vmatprep.subr.bf16.mxu0 %v1929
        %2632 = vmatpush1.bf16.msra.mxu0 %v1928
        %2633 = vmatprep.subr.bf16.mxu0 %v1933
        %2634 = vmatpush1.bf16.msra.mxu0 %v1932
        %2635 = vmatprep.subr.bf16.mxu0 %v1937
        %2636 = vmatpush1.bf16.msra.mxu0 %v1936
        %2637 = vmatprep.subr.bf16.mxu0 %v1941
        %2638 = vmatpush1.bf16.msra.mxu0 %v1940
        %2639 = vmatprep.subr.bf16.mxu0 0
        %2640 = vmatpush1.bf16.msra.mxu0 0
        %2641 = vmatprep.subr.bf16.mxu0 0
        %2642 = vmatpush1.bf16.msra.mxu0 0
        %2643 = vmatprep.subr.bf16.mxu0 0
        %2644 = vmatpush1.bf16.msra.mxu0 0
        %2645 = vmatprep.subr.bf16.mxu0 0
        %2646 = vmatpush1.bf16.msra.mxu0 0
        %2647 = vmatprep.subr.bf16.mxu0 0
        %2648 = vmatpush1.bf16.msra.mxu0 0
        %2649 = vmatprep.subr.bf16.mxu0 0
        %2650 = vmatpush1.bf16.msra.mxu0 0
        %2651 = vmatprep.subr.bf16.mxu0 0
        %2652 = vmatpush1.bf16.msra.mxu0 0
        %2653 = vmatprep.subr.bf16.mxu0 0
        %2654 = vmatpush1.bf16.msra.mxu0 0
        %2655 = vmatprep.mubr.bf16.mxu0 0
        %2656 = vmatmul.mubr.bf16.gmra.mrb[0].mxu0 %v2498
        %v2657 = vpop.f32.mrb[0].mxu0
        %v2658 = vadd.f32 %v2576, %v2657
        %v2659 = vpop.f32.mrb[0].mxu0
        %v2660 = vadd.f32 %v2578, %v2659
        %v2661 = vpop.f32.mrb[0].mxu0
        %v2662 = vpop.f32.mrb[0].mxu0
        %2663 = vdwg.mxu0
        %v2664 = vadd.f32 %v2617, %v1284
        %v2665 = vadd.f32 %v2619, %v1288
        %v2666 = vadd.f32 %v2658, %v1292
        %v2667 = vadd.f32 %v2660, %v1296
        %v2668 = vxor.u32 %v2664, 2147483648
        %v2669 = vmul.f32 %v2668, 1.442695
        %v2670 = vpow.pop %v2669
        %v2671 = vadd.f32 %v2670, 1.0
        %v2672 = vrcp.pop %v2671
        %v2673 = vmul.f32 1.0, %v2672
        %v2674 = vxor.u32 %v2665, 2147483648
        %v2675 = vmul.f32 %v2674, 1.442695
        %v2676 = vpow.pop %v2675
        %v2677 = vadd.f32 %v2676, 1.0
        %v2678 = vrcp.pop %v2677
        %v2679 = vmul.f32 1.0, %v2678
        %v2680 = vtanh.pop %v2666
        %v2681 = vxor.u32 %v2667, 2147483648
        %v2682 = vmul.f32 %v2681, 1.442695
        %v2683 = vpow.pop %v2682
        %v2684 = vadd.f32 %v2683, 1.0
        %v2685 = vrcp.pop %v2684
        %v2686 = vmul.f32 1.0, %v2685
        %v2687 = vmul.f32 %v2679, %v2385
        %v2688 = vmul.f32 %v2673, %v2680
        %v2689 = vadd.f32 %v2687, %v2688
        %v2690 = vtanh.pop %v2689
        %v2691 = vmul.f32 %v2686, %v2690
        %2692 = vmatprep.subr.bf16.mxu0 %v1398
        %2693 = vmatpush1.bf16.msra.mxu0 %v1397
        %2694 = vmatprep.subr.bf16.mxu0 %v1402
        %2695 = vmatpush1.bf16.msra.mxu0 %v1401
        %2696 = vmatprep.subr.bf16.mxu0 %v1406
        %2697 = vmatpush1.bf16.msra.mxu0 %v1405
        %2698 = vmatprep.subr.bf16.mxu0 %v1410
        %2699 = vmatpush1.bf16.msra.mxu0 %v1409
        %2700 = vmatprep.subr.bf16.mxu0 %v1414
        %2701 = vmatpush1.bf16.msra.mxu0 %v1413
        %2702 = vmatprep.subr.bf16.mxu0 %v1418
        %2703 = vmatpush1.bf16.msra.mxu0 %v1417
        %2704 = vmatprep.subr.bf16.mxu0 %v1422
        %2705 = vmatpush1.bf16.msra.mxu0 %v1421
        %2706 = vmatprep.subr.bf16.mxu0 %v1426
        %2707 = vmatpush1.bf16.msra.mxu0 %v1425
        %2708 = vmatprep.subr.bf16.mxu0 0
        %2709 = vmatpush1.bf16.msra.mxu0 0
        %2710 = vmatprep.subr.bf16.mxu0 0
        %2711 = vmatpush1.bf16.msra.mxu0 0
        %2712 = vmatprep.subr.bf16.mxu0 0
        %2713 = vmatpush1.bf16.msra.mxu0 0
        %2714 = vmatprep.subr.bf16.mxu0 0
        %2715 = vmatpush1.bf16.msra.mxu0 0
        %2716 = vmatprep.subr.bf16.mxu0 0
        %2717 = vmatpush1.bf16.msra.mxu0 0
        %2718 = vmatprep.subr.bf16.mxu0 0
        %2719 = vmatpush1.bf16.msra.mxu0 0
        %2720 = vmatprep.subr.bf16.mxu0 0
        %2721 = vmatpush1.bf16.msra.mxu0 0
        %2722 = vmatprep.subr.bf16.mxu0 0
        %2723 = vmatpush1.bf16.msra.mxu0 0
        %2724 = vmatprep.mubr.bf16.mxu0 0
        %2725 = vmatmul.mubr.bf16.gmra.mrb[0].mxu0 %v2498
        %v2726 = vpop.f32.mrb[0].mxu0
        %v2727 = vadd.f32 0.0, %v2726
        %v2728 = vpop.f32.mrb[0].mxu0
        %v2729 = vadd.f32 0.0, %v2728
        %v2730 = vpop.f32.mrb[0].mxu0
        %v2731 = vpop.f32.mrb[0].mxu0
        %2732 = vdwg.mxu0
        %2733 = vmatprep.subr.bf16.mxu0 %v1400
        %2734 = vmatpush1.bf16.msra.mxu0 %v1399
        %2735 = vmatprep.subr.bf16.mxu0 %v1404
        %2736 = vmatpush1.bf16.msra.mxu0 %v1403
        %2737 = vmatprep.subr.bf16.mxu0 %v1408
        %2738 = vmatpush1.bf16.msra.mxu0 %v1407
        %2739 = vmatprep.subr.bf16.mxu0 %v1412
        %2740 = vmatpush1.bf16.msra.mxu0 %v1411
        %2741 = vmatprep.subr.bf16.mxu0 %v1416
        %2742 = vmatpush1.bf16.msra.mxu0 %v1415
        %2743 = vmatprep.subr.bf16.mxu0 %v1420
        %2744 = vmatpush1.bf16.msra.mxu0 %v1419
        %2745 = vmatprep.subr.bf16.mxu0 %v1424
        %2746 = vmatpush1.bf16.msra.mxu0 %v1423
        %2747 = vmatprep.subr.bf16.mxu0 %v1428
        %2748 = vmatpush1.bf16.msra.mxu0 %v1427
        %2749 = vmatprep.subr.bf16.mxu0 0
        %2750 = vmatpush1.bf16.msra.mxu0 0
        %2751 = vmatprep.subr.bf16.mxu0 0
        %2752 = vmatpush1.bf16.msra.mxu0 0
        %2753 = vmatprep.subr.bf16.mxu0 0
        %2754 = vmatpush1.bf16.msra.mxu0 0
        %2755 = vmatprep.subr.bf16.mxu0 0
        %2756 = vmatpush1.bf16.msra.mxu0 0
        %2757 = vmatprep.subr.bf16.mxu0 0
        %2758 = vmatpush1.bf16.msra.mxu0 0
        %2759 = vmatprep.subr.bf16.mxu0 0
        %2760 = vmatpush1.bf16.msra.mxu0 0
        %2761 = vmatprep.subr.bf16.mxu0 0
        %2762 = vmatpush1.bf16.msra.mxu0 0
        %2763 = vmatprep.subr.bf16.mxu0 0
        %2764 = vmatpush1.bf16.msra.mxu0 0
        %2765 = vmatprep.mubr.bf16.mxu0 0
        %2766 = vmatmul.mubr.bf16.gmra.mrb[0].mxu0 %v2498
        %v2767 = vpop.f32.mrb[0].mxu0
        %v2768 = vadd.f32 0.0, %v2767
        %v2769 = vpop.f32.mrb[0].mxu0
        %v2770 = vadd.f32 0.0, %v2769
        %v2771 = vpop.f32.mrb[0].mxu0
        %v2772 = vpop.f32.mrb[0].mxu0
        %2773 = vdwg.mxu0
        %v2774 = vadd.f32 %v1086, %v2727
        %v2775 = vadd.f32 %v1088, %v2729
        %v2776 = vadd.f32 %v1159, %v2768
        %v2777 = vadd.f32 %v1161, %v2770
        %v2778 = vxor.u32 %v2774, 2147483648
        %v2779 = vmul.f32 %v2778, 1.442695
        %v2780 = vpow.pop %v2779
        %v2781 = vadd.f32 %v2780, 1.0
        %v2782 = vrcp.pop %v2781
        %v2783 = vmul.f32 1.0, %v2782
        %v2784 = vxor.u32 %v2775, 2147483648
        %v2785 = vmul.f32 %v2784, 1.442695
        %v2786 = vpow.pop %v2785
        %v2787 = vadd.f32 %v2786, 1.0
        %v2788 = vrcp.pop %v2787
        %v2789 = vmul.f32 1.0, %v2788
        %v2790 = vtanh.pop %v2776
        %v2791 = vxor.u32 %v2777, 2147483648
        %v2792 = vmul.f32 %v2791, 1.442695
        %v2793 = vpow.pop %v2792
        %v2794 = vadd.f32 %v2793, 1.0
        %v2795 = vrcp.pop %v2794
        %v2796 = vmul.f32 1.0, %v2795
        %v2797 = vmul.f32 %v2789, %v2495
        %v2798 = vmul.f32 %v2783, %v2790
        %v2799 = vadd.f32 %v2797, %v2798
        %v2800 = vtanh.pop %v2799
        %v2801 = vmul.f32 %v2796, %v2800
        %v2802 = vpack.c.bf16 %v2801, %v2801
        %v2803 = vpack.c.bf16 %v2691, %v2691
        %2804 = vmatprep.subr.bf16.mxu0 %v1669
        %2805 = vmatpush1.bf16.msra.mxu0 %v1668
        %2806 = vmatprep.subr.bf16.mxu0 %v1673
        %2807 = vmatpush1.bf16.msra.mxu0 %v1672
        %2808 = vmatprep.subr.bf16.mxu0 %v1677
        %2809 = vmatpush1.bf16.msra.mxu0 %v1676
        %2810 = vmatprep.subr.bf16.mxu0 %v1681
        %2811 = vmatpush1.bf16.msra.mxu0 %v1680
        %2812 = vmatprep.subr.bf16.mxu0 %v1685
        %2813 = vmatpush1.bf16.msra.mxu0 %v1684
        %2814 = vmatprep.subr.bf16.mxu0 %v1689
        %2815 = vmatpush1.bf16.msra.mxu0 %v1688
        %2816 = vmatprep.subr.bf16.mxu0 %v1693
        %2817 = vmatpush1.bf16.msra.mxu0 %v1692
        %2818 = vmatprep.subr.bf16.mxu0 %v1697
        %2819 = vmatpush1.bf16.msra.mxu0 %v1696
        %2820 = vmatprep.subr.bf16.mxu0 0
        %2821 = vmatpush1.bf16.msra.mxu0 0
        %2822 = vmatprep.subr.bf16.mxu0 0
        %2823 = vmatpush1.bf16.msra.mxu0 0
        %2824 = vmatprep.subr.bf16.mxu0 0
        %2825 = vmatpush1.bf16.msra.mxu0 0
        %2826 = vmatprep.subr.bf16.mxu0 0
        %2827 = vmatpush1.bf16.msra.mxu0 0
        %2828 = vmatprep.subr.bf16.mxu0 0
        %2829 = vmatpush1.bf16.msra.mxu0 0
        %2830 = vmatprep.subr.bf16.mxu0 0
        %2831 = vmatpush1.bf16.msra.mxu0 0
        %2832 = vmatprep.subr.bf16.mxu0 0
        %2833 = vmatpush1.bf16.msra.mxu0 0
        %2834 = vmatprep.subr.bf16.mxu0 0
        %2835 = vmatpush1.bf16.msra.mxu0 0
        %2836 = vmatprep.mubr.bf16.mxu0 0
        %2837 = vmatmul.mubr.bf16.gmra.mrb[0].mxu0 %v2803
        %v2838 = vpop.f32.mrb[0].mxu0
        %v2839 = vadd.f32 0.0, %v2838
        %v2840 = vpop.f32.mrb[0].mxu0
        %v2841 = vadd.f32 0.0, %v2840
        %v2842 = vpop.f32.mrb[0].mxu0
        %v2843 = vpop.f32.mrb[0].mxu0
        %2844 = vdwg.mxu0
        %2845 = vmatprep.subr.bf16.mxu0 %v1671
        %2846 = vmatpush1.bf16.msra.mxu0 %v1670
        %2847 = vmatprep.subr.bf16.mxu0 %v1675
        %2848 = vmatpush1.bf16.msra.mxu0 %v1674
        %2849 = vmatprep.subr.bf16.mxu0 %v1679
        %2850 = vmatpush1.bf16.msra.mxu0 %v1678
        %2851 = vmatprep.subr.bf16.mxu0 %v1683
        %2852 = vmatpush1.bf16.msra.mxu0 %v1682
        %2853 = vmatprep.subr.bf16.mxu0 %v1687
        %2854 = vmatpush1.bf16.msra.mxu0 %v1686
        %2855 = vmatprep.subr.bf16.mxu0 %v1691
        %2856 = vmatpush1.bf16.msra.mxu0 %v1690
        %2857 = vmatprep.subr.bf16.mxu0 %v1695
        %2858 = vmatpush1.bf16.msra.mxu0 %v1694
        %2859 = vmatprep.subr.bf16.mxu0 %v1699
        %2860 = vmatpush1.bf16.msra.mxu0 %v1698
        %2861 = vmatprep.subr.bf16.mxu0 0
        %2862 = vmatpush1.bf16.msra.mxu0 0
        %2863 = vmatprep.subr.bf16.mxu0 0
        %2864 = vmatpush1.bf16.msra.mxu0 0
        %2865 = vmatprep.subr.bf16.mxu0 0
        %2866 = vmatpush1.bf16.msra.mxu0 0
        %2867 = vmatprep.subr.bf16.mxu0 0
        %2868 = vmatpush1.bf16.msra.mxu0 0
        %2869 = vmatprep.subr.bf16.mxu0 0
        %2870 = vmatpush1.bf16.msra.mxu0 0
        %2871 = vmatprep.subr.bf16.mxu0 0
        %2872 = vmatpush1.bf16.msra.mxu0 0
        %2873 = vmatprep.subr.bf16.mxu0 0
        %2874 = vmatpush1.bf16.msra.mxu0 0
        %2875 = vmatprep.subr.bf16.mxu0 0
        %2876 = vmatpush1.bf16.msra.mxu0 0
        %2877 = vmatprep.mubr.bf16.mxu0 0
        %2878 = vmatmul.mubr.bf16.gmra.mrb[0].mxu0 %v2803
        %v2879 = vpop.f32.mrb[0].mxu0
        %v2880 = vadd.f32 0.0, %v2879
        %v2881 = vpop.f32.mrb[0].mxu0
        %v2882 = vadd.f32 0.0, %v2881
        %v2883 = vpop.f32.mrb[0].mxu0
        %v2884 = vpop.f32.mrb[0].mxu0
        %2885 = vdwg.mxu0
        %2886 = vmatprep.subr.bf16.mxu0 %v1911
        %2887 = vmatpush1.bf16.msra.mxu0 %v1910
        %2888 = vmatprep.subr.bf16.mxu0 %v1915
        %2889 = vmatpush1.bf16.msra.mxu0 %v1914
        %2890 = vmatprep.subr.bf16.mxu0 %v1919
        %2891 = vmatpush1.bf16.msra.mxu0 %v1918
        %2892 = vmatprep.subr.bf16.mxu0 %v1923
        %2893 = vmatpush1.bf16.msra.mxu0 %v1922
        %2894 = vmatprep.subr.bf16.mxu0 %v1927
        %2895 = vmatpush1.bf16.msra.mxu0 %v1926
        %2896 = vmatprep.subr.bf16.mxu0 %v1931
        %2897 = vmatpush1.bf16.msra.mxu0 %v1930
        %2898 = vmatprep.subr.bf16.mxu0 %v1935
        %2899 = vmatpush1.bf16.msra.mxu0 %v1934
        %2900 = vmatprep.subr.bf16.mxu0 %v1939
        %2901 = vmatpush1.bf16.msra.mxu0 %v1938
        %2902 = vmatprep.subr.bf16.mxu0 0
        %2903 = vmatpush1.bf16.msra.mxu0 0
        %2904 = vmatprep.subr.bf16.mxu0 0
        %2905 = vmatpush1.bf16.msra.mxu0 0
        %2906 = vmatprep.subr.bf16.mxu0 0
        %2907 = vmatpush1.bf16.msra.mxu0 0
        %2908 = vmatprep.subr.bf16.mxu0 0
        %2909 = vmatpush1.bf16.msra.mxu0 0
        %2910 = vmatprep.subr.bf16.mxu0 0
        %2911 = vmatpush1.bf16.msra.mxu0 0
        %2912 = vmatprep.subr.bf16.mxu0 0
        %2913 = vmatpush1.bf16.msra.mxu0 0
        %2914 = vmatprep.subr.bf16.mxu0 0
        %2915 = vmatpush1.bf16.msra.mxu0 0
        %2916 = vmatprep.subr.bf16.mxu0 0
        %2917 = vmatpush1.bf16.msra.mxu0 0
        %2918 = vmatprep.mubr.bf16.mxu0 0
        %2919 = vmatmul.mubr.bf16.gmra.mrb[0].mxu0 %v2802
        %v2920 = vpop.f32.mrb[0].mxu0
        %v2921 = vadd.f32 %v2839, %v2920
        %v2922 = vpop.f32.mrb[0].mxu0
        %v2923 = vadd.f32 %v2841, %v2922
        %v2924 = vpop.f32.mrb[0].mxu0
        %v2925 = vpop.f32.mrb[0].mxu0
        %2926 = vdwg.mxu0
        %2927 = vmatprep.subr.bf16.mxu0 %v1913
        %2928 = vmatpush1.bf16.msra.mxu0 %v1912
        %2929 = vmatprep.subr.bf16.mxu0 %v1917
        %2930 = vmatpush1.bf16.msra.mxu0 %v1916
        %2931 = vmatprep.subr.bf16.mxu0 %v1921
        %2932 = vmatpush1.bf16.msra.mxu0 %v1920
        %2933 = vmatprep.subr.bf16.mxu0 %v1925
        %2934 = vmatpush1.bf16.msra.mxu0 %v1924
        %2935 = vmatprep.subr.bf16.mxu0 %v1929
        %2936 = vmatpush1.bf16.msra.mxu0 %v1928
        %2937 = vmatprep.subr.bf16.mxu0 %v1933
        %2938 = vmatpush1.bf16.msra.mxu0 %v1932
        %2939 = vmatprep.subr.bf16.mxu0 %v1937
        %2940 = vmatpush1.bf16.msra.mxu0 %v1936
        %2941 = vmatprep.subr.bf16.mxu0 %v1941
        %2942 = vmatpush1.bf16.msra.mxu0 %v1940
        %2943 = vmatprep.subr.bf16.mxu0 0
        %2944 = vmatpush1.bf16.msra.mxu0 0
        %2945 = vmatprep.subr.bf16.mxu0 0
        %2946 = vmatpush1.bf16.msra.mxu0 0
        %2947 = vmatprep.subr.bf16.mxu0 0
        %2948 = vmatpush1.bf16.msra.mxu0 0
        %2949 = vmatprep.subr.bf16.mxu0 0
        %2950 = vmatpush1.bf16.msra.mxu0 0
        %2951 = vmatprep.subr.bf16.mxu0 0
        %2952 = vmatpush1.bf16.msra.mxu0 0
        %2953 = vmatprep.subr.bf16.mxu0 0
        %2954 = vmatpush1.bf16.msra.mxu0 0
        %2955 = vmatprep.subr.bf16.mxu0 0
        %2956 = vmatpush1.bf16.msra.mxu0 0
        %2957 = vmatprep.subr.bf16.mxu0 0
        %2958 = vmatpush1.bf16.msra.mxu0 0
        %2959 = vmatprep.mubr.bf16.mxu0 0
        %2960 = vmatmul.mubr.bf16.gmra.mrb[0].mxu0 %v2802
        %v2961 = vpop.f32.mrb[0].mxu0
        %v2962 = vadd.f32 %v2880, %v2961
        %v2963 = vpop.f32.mrb[0].mxu0
        %v2964 = vadd.f32 %v2882, %v2963
        %v2965 = vpop.f32.mrb[0].mxu0
        %v2966 = vpop.f32.mrb[0].mxu0
        %2967 = vdwg.mxu0
        %v2968 = vadd.f32 %v2921, %v1284
        %v2969 = vadd.f32 %v2923, %v1288
        %v2970 = vadd.f32 %v2962, %v1292
        %v2971 = vadd.f32 %v2964, %v1296
        %v2972 = vxor.u32 %v2968, 2147483648
        %v2973 = vmul.f32 %v2972, 1.442695
        %v2974 = vpow.pop %v2973
        %v2975 = vadd.f32 %v2974, 1.0
        %v2976 = vrcp.pop %v2975
        %v2977 = vmul.f32 1.0, %v2976
        %v2978 = vxor.u32 %v2969, 2147483648
        %v2979 = vmul.f32 %v2978, 1.442695
        %v2980 = vpow.pop %v2979
        %v2981 = vadd.f32 %v2980, 1.0
        %v2982 = vrcp.pop %v2981
        %v2983 = vmul.f32 1.0, %v2982
        %v2984 = vtanh.pop %v2970
        %v2985 = vxor.u32 %v2971, 2147483648
        %v2986 = vmul.f32 %v2985, 1.442695
        %v2987 = vpow.pop %v2986
        %v2988 = vadd.f32 %v2987, 1.0
        %v2989 = vrcp.pop %v2988
        %v2990 = vmul.f32 1.0, %v2989
        %v2991 = vmul.f32 %v2983, %v2689
        %v2992 = vmul.f32 %v2977, %v2984
        %v2993 = vadd.f32 %v2991, %v2992
        %v2994 = vtanh.pop %v2993
        %v2995 = vmul.f32 %v2990, %v2994
        %2996 = vmatprep.subr.bf16.mxu0 %v1398
        %2997 = vmatpush1.bf16.msra.mxu0 %v1397
        %2998 = vmatprep.subr.bf16.mxu0 %v1402
        %2999 = vmatpush1.bf16.msra.mxu0 %v1401
        %3000 = vmatprep.subr.bf16.mxu0 %v1406
        %3001 = vmatpush1.bf16.msra.mxu0 %v1405
        %3002 = vmatprep.subr.bf16.mxu0 %v1410
        %3003 = vmatpush1.bf16.msra.mxu0 %v1409
        %3004 = vmatprep.subr.bf16.mxu0 %v1414
        %3005 = vmatpush1.bf16.msra.mxu0 %v1413
        %3006 = vmatprep.subr.bf16.mxu0 %v1418
        %3007 = vmatpush1.bf16.msra.mxu0 %v1417
        %3008 = vmatprep.subr.bf16.mxu0 %v1422
        %3009 = vmatpush1.bf16.msra.mxu0 %v1421
        %3010 = vmatprep.subr.bf16.mxu0 %v1426
        %3011 = vmatpush1.bf16.msra.mxu0 %v1425
        %3012 = vmatprep.subr.bf16.mxu0 0
        %3013 = vmatpush1.bf16.msra.mxu0 0
        %3014 = vmatprep.subr.bf16.mxu0 0
        %3015 = vmatpush1.bf16.msra.mxu0 0
        %3016 = vmatprep.subr.bf16.mxu0 0
        %3017 = vmatpush1.bf16.msra.mxu0 0
        %3018 = vmatprep.subr.bf16.mxu0 0
        %3019 = vmatpush1.bf16.msra.mxu0 0
        %3020 = vmatprep.subr.bf16.mxu0 0
        %3021 = vmatpush1.bf16.msra.mxu0 0
        %3022 = vmatprep.subr.bf16.mxu0 0
        %3023 = vmatpush1.bf16.msra.mxu0 0
        %3024 = vmatprep.subr.bf16.mxu0 0
        %3025 = vmatpush1.bf16.msra.mxu0 0
        %3026 = vmatprep.subr.bf16.mxu0 0
        %3027 = vmatpush1.bf16.msra.mxu0 0
        %3028 = vmatprep.mubr.bf16.mxu0 0
        %3029 = vmatmul.mubr.bf16.gmra.mrb[0].mxu0 %v2802
        %v3030 = vpop.f32.mrb[0].mxu0
        %v3031 = vadd.f32 0.0, %v3030
        %v3032 = vpop.f32.mrb[0].mxu0
        %v3033 = vadd.f32 0.0, %v3032
        %v3034 = vpop.f32.mrb[0].mxu0
        %v3035 = vpop.f32.mrb[0].mxu0
        %3036 = vdwg.mxu0
        %3037 = vmatprep.subr.bf16.mxu0 %v1400
        %3038 = vmatpush1.bf16.msra.mxu0 %v1399
        %3039 = vmatprep.subr.bf16.mxu0 %v1404
        %3040 = vmatpush1.bf16.msra.mxu0 %v1403
        %3041 = vmatprep.subr.bf16.mxu0 %v1408
        %3042 = vmatpush1.bf16.msra.mxu0 %v1407
        %3043 = vmatprep.subr.bf16.mxu0 %v1412
        %3044 = vmatpush1.bf16.msra.mxu0 %v1411
        %3045 = vmatprep.subr.bf16.mxu0 %v1416
        %3046 = vmatpush1.bf16.msra.mxu0 %v1415
        %3047 = vmatprep.subr.bf16.mxu0 %v1420
        %3048 = vmatpush1.bf16.msra.mxu0 %v1419
        %3049 = vmatprep.subr.bf16.mxu0 %v1424
        %3050 = vmatpush1.bf16.msra.mxu0 %v1423
        %3051 = vmatprep.subr.bf16.mxu0 %v1428
        %3052 = vmatpush1.bf16.msra.mxu0 %v1427
        %3053 = vmatprep.subr.bf16.mxu0 0
        %3054 = vmatpush1.bf16.msra.mxu0 0
        %3055 = vmatprep.subr.bf16.mxu0 0
        %3056 = vmatpush1.bf16.msra.mxu0 0
        %3057 = vmatprep.subr.bf16.mxu0 0
        %3058 = vmatpush1.bf16.msra.mxu0 0
        %3059 = vmatprep.subr.bf16.mxu0 0
        %3060 = vmatpush1.bf16.msra.mxu0 0
        %3061 = vmatprep.subr.bf16.mxu0 0
        %3062 = vmatpush1.bf16.msra.mxu0 0
        %3063 = vmatprep.subr.bf16.mxu0 0
        %3064 = vmatpush1.bf16.msra.mxu0 0
        %3065 = vmatprep.subr.bf16.mxu0 0
        %3066 = vmatpush1.bf16.msra.mxu0 0
        %3067 = vmatprep.subr.bf16.mxu0 0
        %3068 = vmatpush1.bf16.msra.mxu0 0
        %3069 = vmatprep.mubr.bf16.mxu0 0
        %3070 = vmatmul.mubr.bf16.gmra.mrb[0].mxu0 %v2802
        %v3071 = vpop.f32.mrb[0].mxu0
        %v3072 = vadd.f32 0.0, %v3071
        %v3073 = vpop.f32.mrb[0].mxu0
        %v3074 = vadd.f32 0.0, %v3073
        %v3075 = vpop.f32.mrb[0].mxu0
        %v3076 = vpop.f32.mrb[0].mxu0
        %3077 = vdwg.mxu0
        %v3078 = vadd.f32 %v1092, %v3031
        %v3079 = vadd.f32 %v1094, %v3033
        %v3080 = vadd.f32 %v1165, %v3072
        %v3081 = vadd.f32 %v1167, %v3074
        %v3082 = vxor.u32 %v3078, 2147483648
        %v3083 = vmul.f32 %v3082, 1.442695
        %v3084 = vpow.pop %v3083
        %v3085 = vadd.f32 %v3084, 1.0
        %v3086 = vrcp.pop %v3085
        %v3087 = vmul.f32 1.0, %v3086
        %v3088 = vxor.u32 %v3079, 2147483648
        %v3089 = vmul.f32 %v3088, 1.442695
        %v3090 = vpow.pop %v3089
        %v3091 = vadd.f32 %v3090, 1.0
        %v3092 = vrcp.pop %v3091
        %v3093 = vmul.f32 1.0, %v3092
        %v3094 = vtanh.pop %v3080
        %v3095 = vxor.u32 %v3081, 2147483648
        %v3096 = vmul.f32 %v3095, 1.442695
        %v3097 = vpow.pop %v3096
        %v3098 = vadd.f32 %v3097, 1.0
        %v3099 = vrcp.pop %v3098
        %v3100 = vmul.f32 1.0, %v3099
        %v3101 = vmul.f32 %v3093, %v2799
        %v3102 = vmul.f32 %v3087, %v3094
        %v3103 = vadd.f32 %v3101, %v3102
        %v3104 = vtanh.pop %v3103
        %v3105 = vmul.f32 %v3100, %v3104
        %v3106 = vpack.c.bf16 %v3105, %v3105
        %v3107 = vpack.c.bf16 %v2995, %v2995
        %3108 = vmatprep.subr.bf16.mxu0 %v1669
        %3109 = vmatpush1.bf16.msra.mxu0 %v1668
        %3110 = vmatprep.subr.bf16.mxu0 %v1673
        %3111 = vmatpush1.bf16.msra.mxu0 %v1672
        %3112 = vmatprep.subr.bf16.mxu0 %v1677
        %3113 = vmatpush1.bf16.msra.mxu0 %v1676
        %3114 = vmatprep.subr.bf16.mxu0 %v1681
        %3115 = vmatpush1.bf16.msra.mxu0 %v1680
        %3116 = vmatprep.subr.bf16.mxu0 %v1685
        %3117 = vmatpush1.bf16.msra.mxu0 %v1684
        %3118 = vmatprep.subr.bf16.mxu0 %v1689
        %3119 = vmatpush1.bf16.msra.mxu0 %v1688
        %3120 = vmatprep.subr.bf16.mxu0 %v1693
        %3121 = vmatpush1.bf16.msra.mxu0 %v1692
        %3122 = vmatprep.subr.bf16.mxu0 %v1697
        %3123 = vmatpush1.bf16.msra.mxu0 %v1696
        %3124 = vmatprep.subr.bf16.mxu0 0
        %3125 = vmatpush1.bf16.msra.mxu0 0
        %3126 = vmatprep.subr.bf16.mxu0 0
        %3127 = vmatpush1.bf16.msra.mxu0 0
        %3128 = vmatprep.subr.bf16.mxu0 0
        %3129 = vmatpush1.bf16.msra.mxu0 0
        %3130 = vmatprep.subr.bf16.mxu0 0
        %3131 = vmatpush1.bf16.msra.mxu0 0
        %3132 = vmatprep.subr.bf16.mxu0 0
        %3133 = vmatpush1.bf16.msra.mxu0 0
        %3134 = vmatprep.subr.bf16.mxu0 0
        %3135 = vmatpush1.bf16.msra.mxu0 0
        %3136 = vmatprep.subr.bf16.mxu0 0
        %3137 = vmatpush1.bf16.msra.mxu0 0
        %3138 = vmatprep.subr.bf16.mxu0 0
        %3139 = vmatpush1.bf16.msra.mxu0 0
        %3140 = vmatprep.mubr.bf16.mxu0 0
        %3141 = vmatmul.mubr.bf16.gmra.mrb[0].mxu0 %v3107
        %v3142 = vpop.f32.mrb[0].mxu0
        %v3143 = vadd.f32 0.0, %v3142
        %v3144 = vpop.f32.mrb[0].mxu0
        %v3145 = vadd.f32 0.0, %v3144
        %v3146 = vpop.f32.mrb[0].mxu0
        %v3147 = vpop.f32.mrb[0].mxu0
        %3148 = vdwg.mxu0
        %3149 = vmatprep.subr.bf16.mxu0 %v1671
        %3150 = vmatpush1.bf16.msra.mxu0 %v1670
        %3151 = vmatprep.subr.bf16.mxu0 %v1675
        %3152 = vmatpush1.bf16.msra.mxu0 %v1674
        %3153 = vmatprep.subr.bf16.mxu0 %v1679
        %3154 = vmatpush1.bf16.msra.mxu0 %v1678
        %3155 = vmatprep.subr.bf16.mxu0 %v1683
        %3156 = vmatpush1.bf16.msra.mxu0 %v1682
        %3157 = vmatprep.subr.bf16.mxu0 %v1687
        %3158 = vmatpush1.bf16.msra.mxu0 %v1686
        %3159 = vmatprep.subr.bf16.mxu0 %v1691
        %3160 = vmatpush1.bf16.msra.mxu0 %v1690
        %3161 = vmatprep.subr.bf16.mxu0 %v1695
        %3162 = vmatpush1.bf16.msra.mxu0 %v1694
        %3163 = vmatprep.subr.bf16.mxu0 %v1699
        %3164 = vmatpush1.bf16.msra.mxu0 %v1698
        %3165 = vmatprep.subr.bf16.mxu0 0
        %3166 = vmatpush1.bf16.msra.mxu0 0
        %3167 = vmatprep.subr.bf16.mxu0 0
        %3168 = vmatpush1.bf16.msra.mxu0 0
        %3169 = vmatprep.subr.bf16.mxu0 0
        %3170 = vmatpush1.bf16.msra.mxu0 0
        %3171 = vmatprep.subr.bf16.mxu0 0
        %3172 = vmatpush1.bf16.msra.mxu0 0
        %3173 = vmatprep.subr.bf16.mxu0 0
        %3174 = vmatpush1.bf16.msra.mxu0 0
        %3175 = vmatprep.subr.bf16.mxu0 0
        %3176 = vmatpush1.bf16.msra.mxu0 0
        %3177 = vmatprep.subr.bf16.mxu0 0
        %3178 = vmatpush1.bf16.msra.mxu0 0
        %3179 = vmatprep.subr.bf16.mxu0 0
        %3180 = vmatpush1.bf16.msra.mxu0 0
        %3181 = vmatprep.mubr.bf16.mxu0 0
        %3182 = vmatmul.mubr.bf16.gmra.mrb[0].mxu0 %v3107
        %v3183 = vpop.f32.mrb[0].mxu0
        %v3184 = vadd.f32 0.0, %v3183
        %v3185 = vpop.f32.mrb[0].mxu0
        %v3186 = vadd.f32 0.0, %v3185
        %v3187 = vpop.f32.mrb[0].mxu0
        %v3188 = vpop.f32.mrb[0].mxu0
        %3189 = vdwg.mxu0
        %3190 = vmatprep.subr.bf16.mxu0 %v1911
        %3191 = vmatpush1.bf16.msra.mxu0 %v1910
        %3192 = vmatprep.subr.bf16.mxu0 %v1915
        %3193 = vmatpush1.bf16.msra.mxu0 %v1914
        %3194 = vmatprep.subr.bf16.mxu0 %v1919
        %3195 = vmatpush1.bf16.msra.mxu0 %v1918
        %3196 = vmatprep.subr.bf16.mxu0 %v1923
        %3197 = vmatpush1.bf16.msra.mxu0 %v1922
        %3198 = vmatprep.subr.bf16.mxu0 %v1927
        %3199 = vmatpush1.bf16.msra.mxu0 %v1926
        %3200 = vmatprep.subr.bf16.mxu0 %v1931
        %3201 = vmatpush1.bf16.msra.mxu0 %v1930
        %3202 = vmatprep.subr.bf16.mxu0 %v1935
        %3203 = vmatpush1.bf16.msra.mxu0 %v1934
        %3204 = vmatprep.subr.bf16.mxu0 %v1939
        %3205 = vmatpush1.bf16.msra.mxu0 %v1938
        %3206 = vmatprep.subr.bf16.mxu0 0
        %3207 = vmatpush1.bf16.msra.mxu0 0
        %3208 = vmatprep.subr.bf16.mxu0 0
        %3209 = vmatpush1.bf16.msra.mxu0 0
        %3210 = vmatprep.subr.bf16.mxu0 0
        %3211 = vmatpush1.bf16.msra.mxu0 0
        %3212 = vmatprep.subr.bf16.mxu0 0
        %3213 = vmatpush1.bf16.msra.mxu0 0
        %3214 = vmatprep.subr.bf16.mxu0 0
        %3215 = vmatpush1.bf16.msra.mxu0 0
        %3216 = vmatprep.subr.bf16.mxu0 0
        %3217 = vmatpush1.bf16.msra.mxu0 0
        %3218 = vmatprep.subr.bf16.mxu0 0
        %3219 = vmatpush1.bf16.msra.mxu0 0
        %3220 = vmatprep.subr.bf16.mxu0 0
        %3221 = vmatpush1.bf16.msra.mxu0 0
        %3222 = vmatprep.mubr.bf16.mxu0 0
        %3223 = vmatmul.mubr.bf16.gmra.mrb[0].mxu0 %v3106
        %v3224 = vpop.f32.mrb[0].mxu0
        %v3225 = vadd.f32 %v3143, %v3224
        %v3226 = vpop.f32.mrb[0].mxu0
        %v3227 = vadd.f32 %v3145, %v3226
        %v3228 = vpop.f32.mrb[0].mxu0
        %v3229 = vpop.f32.mrb[0].mxu0
        %3230 = vdwg.mxu0
        %3231 = vmatprep.subr.bf16.mxu0 %v1913
        %3232 = vmatpush1.bf16.msra.mxu0 %v1912
        %3233 = vmatprep.subr.bf16.mxu0 %v1917
        %3234 = vmatpush1.bf16.msra.mxu0 %v1916
        %3235 = vmatprep.subr.bf16.mxu0 %v1921
        %3236 = vmatpush1.bf16.msra.mxu0 %v1920
        %3237 = vmatprep.subr.bf16.mxu0 %v1925
        %3238 = vmatpush1.bf16.msra.mxu0 %v1924
        %3239 = vmatprep.subr.bf16.mxu0 %v1929
        %3240 = vmatpush1.bf16.msra.mxu0 %v1928
        %3241 = vmatprep.subr.bf16.mxu0 %v1933
        %3242 = vmatpush1.bf16.msra.mxu0 %v1932
        %3243 = vmatprep.subr.bf16.mxu0 %v1937
        %3244 = vmatpush1.bf16.msra.mxu0 %v1936
        %3245 = vmatprep.subr.bf16.mxu0 %v1941
        %3246 = vmatpush1.bf16.msra.mxu0 %v1940
        %3247 = vmatprep.subr.bf16.mxu0 0
        %3248 = vmatpush1.bf16.msra.mxu0 0
        %3249 = vmatprep.subr.bf16.mxu0 0
        %3250 = vmatpush1.bf16.msra.mxu0 0
        %3251 = vmatprep.subr.bf16.mxu0 0
        %3252 = vmatpush1.bf16.msra.mxu0 0
        %3253 = vmatprep.subr.bf16.mxu0 0
        %3254 = vmatpush1.bf16.msra.mxu0 0
        %3255 = vmatprep.subr.bf16.mxu0 0
        %3256 = vmatpush1.bf16.msra.mxu0 0
        %3257 = vmatprep.subr.bf16.mxu0 0
        %3258 = vmatpush1.bf16.msra.mxu0 0
        %3259 = vmatprep.subr.bf16.mxu0 0
        %3260 = vmatpush1.bf16.msra.mxu0 0
        %3261 = vmatprep.subr.bf16.mxu0 0
        %3262 = vmatpush1.bf16.msra.mxu0 0
        %3263 = vmatprep.mubr.bf16.mxu0 0
        %3264 = vmatmul.mubr.bf16.gmra.mrb[0].mxu0 %v3106
        %v3265 = vpop.f32.mrb[0].mxu0
        %v3266 = vadd.f32 %v3184, %v3265
        %v3267 = vpop.f32.mrb[0].mxu0
        %v3268 = vadd.f32 %v3186, %v3267
        %v3269 = vpop.f32.mrb[0].mxu0
        %v3270 = vpop.f32.mrb[0].mxu0
        %3271 = vdwg.mxu0
        %v3272 = vadd.f32 %v3225, %v1284
        %v3273 = vadd.f32 %v3227, %v1288
        %v3274 = vadd.f32 %v3266, %v1292
        %v3275 = vadd.f32 %v3268, %v1296
        %v3276 = vxor.u32 %v3272, 2147483648
        %v3277 = vmul.f32 %v3276, 1.442695
        %v3278 = vpow.pop %v3277
        %v3279 = vadd.f32 %v3278, 1.0
        %v3280 = vrcp.pop %v3279
        %v3281 = vmul.f32 1.0, %v3280
        %v3282 = vxor.u32 %v3273, 2147483648
        %v3283 = vmul.f32 %v3282, 1.442695
        %v3284 = vpow.pop %v3283
        %v3285 = vadd.f32 %v3284, 1.0
        %v3286 = vrcp.pop %v3285
        %v3287 = vmul.f32 1.0, %v3286
        %v3288 = vtanh.pop %v3274
        %v3289 = vxor.u32 %v3275, 2147483648
        %v3290 = vmul.f32 %v3289, 1.442695
        %v3291 = vpow.pop %v3290
        %v3292 = vadd.f32 %v3291, 1.0
        %v3293 = vrcp.pop %v3292
        %v3294 = vmul.f32 1.0, %v3293
        %v3295 = vmul.f32 %v3287, %v2993
        %v3296 = vmul.f32 %v3281, %v3288
        %v3297 = vadd.f32 %v3295, %v3296
        %v3298 = vtanh.pop %v3297
        %v3299 = vmul.f32 %v3294, %v3298
        %3300 = vmatprep.subr.bf16.mxu0 %v1398
        %3301 = vmatpush1.bf16.msra.mxu0 %v1397
        %3302 = vmatprep.subr.bf16.mxu0 %v1402
        %3303 = vmatpush1.bf16.msra.mxu0 %v1401
        %3304 = vmatprep.subr.bf16.mxu0 %v1406
        %3305 = vmatpush1.bf16.msra.mxu0 %v1405
        %3306 = vmatprep.subr.bf16.mxu0 %v1410
        %3307 = vmatpush1.bf16.msra.mxu0 %v1409
        %3308 = vmatprep.subr.bf16.mxu0 %v1414
        %3309 = vmatpush1.bf16.msra.mxu0 %v1413
        %3310 = vmatprep.subr.bf16.mxu0 %v1418
        %3311 = vmatpush1.bf16.msra.mxu0 %v1417
        %3312 = vmatprep.subr.bf16.mxu0 %v1422
        %3313 = vmatpush1.bf16.msra.mxu0 %v1421
        %3314 = vmatprep.subr.bf16.mxu0 %v1426
        %3315 = vmatpush1.bf16.msra.mxu0 %v1425
        %3316 = vmatprep.subr.bf16.mxu0 0
        %3317 = vmatpush1.bf16.msra.mxu0 0
        %3318 = vmatprep.subr.bf16.mxu0 0
        %3319 = vmatpush1.bf16.msra.mxu0 0
        %3320 = vmatprep.subr.bf16.mxu0 0
        %3321 = vmatpush1.bf16.msra.mxu0 0
        %3322 = vmatprep.subr.bf16.mxu0 0
        %3323 = vmatpush1.bf16.msra.mxu0 0
        %3324 = vmatprep.subr.bf16.mxu0 0
        %3325 = vmatpush1.bf16.msra.mxu0 0
        %3326 = vmatprep.subr.bf16.mxu0 0
        %3327 = vmatpush1.bf16.msra.mxu0 0
        %3328 = vmatprep.subr.bf16.mxu0 0
        %3329 = vmatpush1.bf16.msra.mxu0 0
        %3330 = vmatprep.subr.bf16.mxu0 0
        %3331 = vmatpush1.bf16.msra.mxu0 0
        %3332 = vmatprep.mubr.bf16.mxu0 0
        %3333 = vmatmul.mubr.bf16.gmra.mrb[0].mxu0 %v3106
        %v3334 = vpop.f32.mrb[0].mxu0
        %v3335 = vadd.f32 0.0, %v3334
        %v3336 = vpop.f32.mrb[0].mxu0
        %v3337 = vadd.f32 0.0, %v3336
        %v3338 = vpop.f32.mrb[0].mxu0
        %v3339 = vpop.f32.mrb[0].mxu0
        %3340 = vdwg.mxu0
        %3341 = vmatprep.subr.bf16.mxu0 %v1400
        %3342 = vmatpush1.bf16.msra.mxu0 %v1399
        %3343 = vmatprep.subr.bf16.mxu0 %v1404
        %3344 = vmatpush1.bf16.msra.mxu0 %v1403
        %3345 = vmatprep.subr.bf16.mxu0 %v1408
        %3346 = vmatpush1.bf16.msra.mxu0 %v1407
        %3347 = vmatprep.subr.bf16.mxu0 %v1412
        %3348 = vmatpush1.bf16.msra.mxu0 %v1411
        %3349 = vmatprep.subr.bf16.mxu0 %v1416
        %3350 = vmatpush1.bf16.msra.mxu0 %v1415
        %3351 = vmatprep.subr.bf16.mxu0 %v1420
        %3352 = vmatpush1.bf16.msra.mxu0 %v1419
        %3353 = vmatprep.subr.bf16.mxu0 %v1424
        %3354 = vmatpush1.bf16.msra.mxu0 %v1423
        %3355 = vmatprep.subr.bf16.mxu0 %v1428
        %3356 = vmatpush1.bf16.msra.mxu0 %v1427
        %3357 = vmatprep.subr.bf16.mxu0 0
        %3358 = vmatpush1.bf16.msra.mxu0 0
        %3359 = vmatprep.subr.bf16.mxu0 0
        %3360 = vmatpush1.bf16.msra.mxu0 0
        %3361 = vmatprep.subr.bf16.mxu0 0
        %3362 = vmatpush1.bf16.msra.mxu0 0
        %3363 = vmatprep.subr.bf16.mxu0 0
        %3364 = vmatpush1.bf16.msra.mxu0 0
        %3365 = vmatprep.subr.bf16.mxu0 0
        %3366 = vmatpush1.bf16.msra.mxu0 0
        %3367 = vmatprep.subr.bf16.mxu0 0
        %3368 = vmatpush1.bf16.msra.mxu0 0
        %3369 = vmatprep.subr.bf16.mxu0 0
        %3370 = vmatpush1.bf16.msra.mxu0 0
        %3371 = vmatprep.subr.bf16.mxu0 0
        %3372 = vmatpush1.bf16.msra.mxu0 0
        %3373 = vmatprep.mubr.bf16.mxu0 0
        %3374 = vmatmul.mubr.bf16.gmra.mrb[0].mxu0 %v3106
        %v3375 = vpop.f32.mrb[0].mxu0
        %v3376 = vadd.f32 0.0, %v3375
        %v3377 = vpop.f32.mrb[0].mxu0
        %v3378 = vadd.f32 0.0, %v3377
        %v3379 = vpop.f32.mrb[0].mxu0
        %v3380 = vpop.f32.mrb[0].mxu0
        %3381 = vdwg.mxu0
        %v3382 = vadd.f32 %v1096, %v3335
        %v3383 = vadd.f32 %v1098, %v3337
        %v3384 = vadd.f32 %v1169, %v3376
        %v3385 = vadd.f32 %v1171, %v3378
        %v3386 = vxor.u32 %v3382, 2147483648
        %v3387 = vmul.f32 %v3386, 1.442695
        %v3388 = vpow.pop %v3387
        %v3389 = vadd.f32 %v3388, 1.0
        %v3390 = vrcp.pop %v3389
        %v3391 = vmul.f32 1.0, %v3390
        %v3392 = vxor.u32 %v3383, 2147483648
        %v3393 = vmul.f32 %v3392, 1.442695
        %v3394 = vpow.pop %v3393
        %v3395 = vadd.f32 %v3394, 1.0
        %v3396 = vrcp.pop %v3395
        %v3397 = vmul.f32 1.0, %v3396
        %v3398 = vtanh.pop %v3384
        %v3399 = vxor.u32 %v3385, 2147483648
        %v3400 = vmul.f32 %v3399, 1.442695
        %v3401 = vpow.pop %v3400
        %v3402 = vadd.f32 %v3401, 1.0
        %v3403 = vrcp.pop %v3402
        %v3404 = vmul.f32 1.0, %v3403
        %v3405 = vmul.f32 %v3397, %v3103
        %v3406 = vmul.f32 %v3391, %v3398
        %v3407 = vadd.f32 %v3405, %v3406
        %v3408 = vtanh.pop %v3407
        %v3409 = vmul.f32 %v3404, %v3408
        %v3410 = vpack.c.bf16 %v3409, %v3409
        %v3411 = vpack.c.bf16 %v3299, %v3299
        %3412 = vmatprep.subr.bf16.mxu0 %v1669
        %3413 = vmatpush1.bf16.msra.mxu0 %v1668
        %3414 = vmatprep.subr.bf16.mxu0 %v1673
        %3415 = vmatpush1.bf16.msra.mxu0 %v1672
        %3416 = vmatprep.subr.bf16.mxu0 %v1677
        %3417 = vmatpush1.bf16.msra.mxu0 %v1676
        %3418 = vmatprep.subr.bf16.mxu0 %v1681
        %3419 = vmatpush1.bf16.msra.mxu0 %v1680
        %3420 = vmatprep.subr.bf16.mxu0 %v1685
        %3421 = vmatpush1.bf16.msra.mxu0 %v1684
        %3422 = vmatprep.subr.bf16.mxu0 %v1689
        %3423 = vmatpush1.bf16.msra.mxu0 %v1688
        %3424 = vmatprep.subr.bf16.mxu0 %v1693
        %3425 = vmatpush1.bf16.msra.mxu0 %v1692
        %3426 = vmatprep.subr.bf16.mxu0 %v1697
        %3427 = vmatpush1.bf16.msra.mxu0 %v1696
        %3428 = vmatprep.subr.bf16.mxu0 0
        %3429 = vmatpush1.bf16.msra.mxu0 0
        %3430 = vmatprep.subr.bf16.mxu0 0
        %3431 = vmatpush1.bf16.msra.mxu0 0
        %3432 = vmatprep.subr.bf16.mxu0 0
        %3433 = vmatpush1.bf16.msra.mxu0 0
        %3434 = vmatprep.subr.bf16.mxu0 0
        %3435 = vmatpush1.bf16.msra.mxu0 0
        %3436 = vmatprep.subr.bf16.mxu0 0
        %3437 = vmatpush1.bf16.msra.mxu0 0
        %3438 = vmatprep.subr.bf16.mxu0 0
        %3439 = vmatpush1.bf16.msra.mxu0 0
        %3440 = vmatprep.subr.bf16.mxu0 0
        %3441 = vmatpush1.bf16.msra.mxu0 0
        %3442 = vmatprep.subr.bf16.mxu0 0
        %3443 = vmatpush1.bf16.msra.mxu0 0
        %3444 = vmatprep.mubr.bf16.mxu0 0
        %3445 = vmatmul.mubr.bf16.gmra.mrb[0].mxu0 %v3411
        %v3446 = vpop.f32.mrb[0].mxu0
        %v3447 = vadd.f32 0.0, %v3446
        %v3448 = vpop.f32.mrb[0].mxu0
        %v3449 = vadd.f32 0.0, %v3448
        %v3450 = vpop.f32.mrb[0].mxu0
        %v3451 = vpop.f32.mrb[0].mxu0
        %3452 = vdwg.mxu0
        %3453 = vmatprep.subr.bf16.mxu0 %v1671
        %3454 = vmatpush1.bf16.msra.mxu0 %v1670
        %3455 = vmatprep.subr.bf16.mxu0 %v1675
        %3456 = vmatpush1.bf16.msra.mxu0 %v1674
        %3457 = vmatprep.subr.bf16.mxu0 %v1679
        %3458 = vmatpush1.bf16.msra.mxu0 %v1678
        %3459 = vmatprep.subr.bf16.mxu0 %v1683
        %3460 = vmatpush1.bf16.msra.mxu0 %v1682
        %3461 = vmatprep.subr.bf16.mxu0 %v1687
        %3462 = vmatpush1.bf16.msra.mxu0 %v1686
        %3463 = vmatprep.subr.bf16.mxu0 %v1691
        %3464 = vmatpush1.bf16.msra.mxu0 %v1690
        %3465 = vmatprep.subr.bf16.mxu0 %v1695
        %3466 = vmatpush1.bf16.msra.mxu0 %v1694
        %3467 = vmatprep.subr.bf16.mxu0 %v1699
        %3468 = vmatpush1.bf16.msra.mxu0 %v1698
        %3469 = vmatprep.subr.bf16.mxu0 0
        %3470 = vmatpush1.bf16.msra.mxu0 0
        %3471 = vmatprep.subr.bf16.mxu0 0
        %3472 = vmatpush1.bf16.msra.mxu0 0
        %3473 = vmatprep.subr.bf16.mxu0 0
        %3474 = vmatpush1.bf16.msra.mxu0 0
        %3475 = vmatprep.subr.bf16.mxu0 0
        %3476 = vmatpush1.bf16.msra.mxu0 0
        %3477 = vmatprep.subr.bf16.mxu0 0
        %3478 = vmatpush1.bf16.msra.mxu0 0
        %3479 = vmatprep.subr.bf16.mxu0 0
        %3480 = vmatpush1.bf16.msra.mxu0 0
        %3481 = vmatprep.subr.bf16.mxu0 0
        %3482 = vmatpush1.bf16.msra.mxu0 0
        %3483 = vmatprep.subr.bf16.mxu0 0
        %3484 = vmatpush1.bf16.msra.mxu0 0
        %3485 = vmatprep.mubr.bf16.mxu0 0
        %3486 = vmatmul.mubr.bf16.gmra.mrb[0].mxu0 %v3411
        %v3487 = vpop.f32.mrb[0].mxu0
        %v3488 = vadd.f32 0.0, %v3487
        %v3489 = vpop.f32.mrb[0].mxu0
        %v3490 = vadd.f32 0.0, %v3489
        %v3491 = vpop.f32.mrb[0].mxu0
        %v3492 = vpop.f32.mrb[0].mxu0
        %3493 = vdwg.mxu0
        %3494 = vmatprep.subr.bf16.mxu0 %v1911
        %3495 = vmatpush1.bf16.msra.mxu0 %v1910
        %3496 = vmatprep.subr.bf16.mxu0 %v1915
        %3497 = vmatpush1.bf16.msra.mxu0 %v1914
        %3498 = vmatprep.subr.bf16.mxu0 %v1919
        %3499 = vmatpush1.bf16.msra.mxu0 %v1918
        %3500 = vmatprep.subr.bf16.mxu0 %v1923
        %3501 = vmatpush1.bf16.msra.mxu0 %v1922
        %3502 = vmatprep.subr.bf16.mxu0 %v1927
        %3503 = vmatpush1.bf16.msra.mxu0 %v1926
        %3504 = vmatprep.subr.bf16.mxu0 %v1931
        %3505 = vmatpush1.bf16.msra.mxu0 %v1930
        %3506 = vmatprep.subr.bf16.mxu0 %v1935
        %3507 = vmatpush1.bf16.msra.mxu0 %v1934
        %3508 = vmatprep.subr.bf16.mxu0 %v1939
        %3509 = vmatpush1.bf16.msra.mxu0 %v1938
        %3510 = vmatprep.subr.bf16.mxu0 0
        %3511 = vmatpush1.bf16.msra.mxu0 0
        %3512 = vmatprep.subr.bf16.mxu0 0
        %3513 = vmatpush1.bf16.msra.mxu0 0
        %3514 = vmatprep.subr.bf16.mxu0 0
        %3515 = vmatpush1.bf16.msra.mxu0 0
        %3516 = vmatprep.subr.bf16.mxu0 0
        %3517 = vmatpush1.bf16.msra.mxu0 0
        %3518 = vmatprep.subr.bf16.mxu0 0
        %3519 = vmatpush1.bf16.msra.mxu0 0
        %3520 = vmatprep.subr.bf16.mxu0 0
        %3521 = vmatpush1.bf16.msra.mxu0 0
        %3522 = vmatprep.subr.bf16.mxu0 0
        %3523 = vmatpush1.bf16.msra.mxu0 0
        %3524 = vmatprep.subr.bf16.mxu0 0
        %3525 = vmatpush1.bf16.msra.mxu0 0
        %3526 = vmatprep.mubr.bf16.mxu0 0
        %3527 = vmatmul.mubr.bf16.gmra.mrb[0].mxu0 %v3410
        %v3528 = vpop.f32.mrb[0].mxu0
        %v3529 = vadd.f32 %v3447, %v3528
        %v3530 = vpop.f32.mrb[0].mxu0
        %v3531 = vadd.f32 %v3449, %v3530
        %v3532 = vpop.f32.mrb[0].mxu0
        %v3533 = vpop.f32.mrb[0].mxu0
        %3534 = vdwg.mxu0
        %3535 = vmatprep.subr.bf16.mxu0 %v1913
        %3536 = vmatpush1.bf16.msra.mxu0 %v1912
        %3537 = vmatprep.subr.bf16.mxu0 %v1917
        %3538 = vmatpush1.bf16.msra.mxu0 %v1916
        %3539 = vmatprep.subr.bf16.mxu0 %v1921
        %3540 = vmatpush1.bf16.msra.mxu0 %v1920
        %3541 = vmatprep.subr.bf16.mxu0 %v1925
        %3542 = vmatpush1.bf16.msra.mxu0 %v1924
        %3543 = vmatprep.subr.bf16.mxu0 %v1929
        %3544 = vmatpush1.bf16.msra.mxu0 %v1928
        %3545 = vmatprep.subr.bf16.mxu0 %v1933
        %3546 = vmatpush1.bf16.msra.mxu0 %v1932
        %3547 = vmatprep.subr.bf16.mxu0 %v1937
        %3548 = vmatpush1.bf16.msra.mxu0 %v1936
        %3549 = vmatprep.subr.bf16.mxu0 %v1941
        %3550 = vmatpush1.bf16.msra.mxu0 %v1940
        %3551 = vmatprep.subr.bf16.mxu0 0
        %3552 = vmatpush1.bf16.msra.mxu0 0
        %3553 = vmatprep.subr.bf16.mxu0 0
        %3554 = vmatpush1.bf16.msra.mxu0 0
        %3555 = vmatprep.subr.bf16.mxu0 0
        %3556 = vmatpush1.bf16.msra.mxu0 0
        %3557 = vmatprep.subr.bf16.mxu0 0
        %3558 = vmatpush1.bf16.msra.mxu0 0
        %3559 = vmatprep.subr.bf16.mxu0 0
        %3560 = vmatpush1.bf16.msra.mxu0 0
        %3561 = vmatprep.subr.bf16.mxu0 0
        %3562 = vmatpush1.bf16.msra.mxu0 0
        %3563 = vmatprep.subr.bf16.mxu0 0
        %3564 = vmatpush1.bf16.msra.mxu0 0
        %3565 = vmatprep.subr.bf16.mxu0 0
        %3566 = vmatpush1.bf16.msra.mxu0 0
        %3567 = vmatprep.mubr.bf16.mxu0 0
        %3568 = vmatmul.mubr.bf16.gmra.mrb[0].mxu0 %v3410
        %v3569 = vpop.f32.mrb[0].mxu0
        %v3570 = vadd.f32 %v3488, %v3569
        %v3571 = vpop.f32.mrb[0].mxu0
        %v3572 = vadd.f32 %v3490, %v3571
        %v3573 = vpop.f32.mrb[0].mxu0
        %v3574 = vpop.f32.mrb[0].mxu0
        %3575 = vdwg.mxu0
        %v3576 = vadd.f32 %v3529, %v1284
        %v3577 = vadd.f32 %v3531, %v1288
        %v3578 = vadd.f32 %v3570, %v1292
        %v3579 = vadd.f32 %v3572, %v1296
        %v3580 = vxor.u32 %v3576, 2147483648
        %v3581 = vmul.f32 %v3580, 1.442695
        %v3582 = vpow.pop %v3581
        %v3583 = vadd.f32 %v3582, 1.0
        %v3584 = vrcp.pop %v3583
        %v3585 = vmul.f32 1.0, %v3584
        %v3586 = vxor.u32 %v3577, 2147483648
        %v3587 = vmul.f32 %v3586, 1.442695
        %v3588 = vpow.pop %v3587
        %v3589 = vadd.f32 %v3588, 1.0
        %v3590 = vrcp.pop %v3589
        %v3591 = vmul.f32 1.0, %v3590
        %v3592 = vtanh.pop %v3578
        %v3593 = vxor.u32 %v3579, 2147483648
        %v3594 = vmul.f32 %v3593, 1.442695
        %v3595 = vpow.pop %v3594
        %v3596 = vadd.f32 %v3595, 1.0
        %v3597 = vrcp.pop %v3596
        %v3598 = vmul.f32 1.0, %v3597
        %v3599 = vmul.f32 %v3591, %v3297
        %v3600 = vmul.f32 %v3585, %v3592
        %v3601 = vadd.f32 %v3599, %v3600
        %v3602 = vtanh.pop %v3601
        %v3603 = vmul.f32 %v3598, %v3602
        %3604 = vmatprep.subr.bf16.mxu0 %v1398
        %3605 = vmatpush1.bf16.msra.mxu0 %v1397
        %3606 = vmatprep.subr.bf16.mxu0 %v1402
        %3607 = vmatpush1.bf16.msra.mxu0 %v1401
        %3608 = vmatprep.subr.bf16.mxu0 %v1406
        %3609 = vmatpush1.bf16.msra.mxu0 %v1405
        %3610 = vmatprep.subr.bf16.mxu0 %v1410
        %3611 = vmatpush1.bf16.msra.mxu0 %v1409
        %3612 = vmatprep.subr.bf16.mxu0 %v1414
        %3613 = vmatpush1.bf16.msra.mxu0 %v1413
        %3614 = vmatprep.subr.bf16.mxu0 %v1418
        %3615 = vmatpush1.bf16.msra.mxu0 %v1417
        %3616 = vmatprep.subr.bf16.mxu0 %v1422
        %3617 = vmatpush1.bf16.msra.mxu0 %v1421
        %3618 = vmatprep.subr.bf16.mxu0 %v1426
        %3619 = vmatpush1.bf16.msra.mxu0 %v1425
        %3620 = vmatprep.subr.bf16.mxu0 0
        %3621 = vmatpush1.bf16.msra.mxu0 0
        %3622 = vmatprep.subr.bf16.mxu0 0
        %3623 = vmatpush1.bf16.msra.mxu0 0
        %3624 = vmatprep.subr.bf16.mxu0 0
        %3625 = vmatpush1.bf16.msra.mxu0 0
        %3626 = vmatprep.subr.bf16.mxu0 0
        %3627 = vmatpush1.bf16.msra.mxu0 0
        %3628 = vmatprep.subr.bf16.mxu0 0
        %3629 = vmatpush1.bf16.msra.mxu0 0
        %3630 = vmatprep.subr.bf16.mxu0 0
        %3631 = vmatpush1.bf16.msra.mxu0 0
        %3632 = vmatprep.subr.bf16.mxu0 0
        %3633 = vmatpush1.bf16.msra.mxu0 0
        %3634 = vmatprep.subr.bf16.mxu0 0
        %3635 = vmatpush1.bf16.msra.mxu0 0
        %3636 = vmatprep.mubr.bf16.mxu0 0
        %3637 = vmatmul.mubr.bf16.gmra.mrb[0].mxu0 %v3410
        %v3638 = vpop.f32.mrb[0].mxu0
        %v3639 = vadd.f32 0.0, %v3638
        %v3640 = vpop.f32.mrb[0].mxu0
        %v3641 = vadd.f32 0.0, %v3640
        %v3642 = vpop.f32.mrb[0].mxu0
        %v3643 = vpop.f32.mrb[0].mxu0
        %3644 = vdwg.mxu0
        %3645 = vmatprep.subr.bf16.mxu0 %v1400
        %3646 = vmatpush1.bf16.msra.mxu0 %v1399
        %3647 = vmatprep.subr.bf16.mxu0 %v1404
        %3648 = vmatpush1.bf16.msra.mxu0 %v1403
        %3649 = vmatprep.subr.bf16.mxu0 %v1408
        %3650 = vmatpush1.bf16.msra.mxu0 %v1407
        %3651 = vmatprep.subr.bf16.mxu0 %v1412
        %3652 = vmatpush1.bf16.msra.mxu0 %v1411
        %3653 = vmatprep.subr.bf16.mxu0 %v1416
        %3654 = vmatpush1.bf16.msra.mxu0 %v1415
        %3655 = vmatprep.subr.bf16.mxu0 %v1420
        %3656 = vmatpush1.bf16.msra.mxu0 %v1419
        %3657 = vmatprep.subr.bf16.mxu0 %v1424
        %3658 = vmatpush1.bf16.msra.mxu0 %v1423
        %3659 = vmatprep.subr.bf16.mxu0 %v1428
        %3660 = vmatpush1.bf16.msra.mxu0 %v1427
        %3661 = vmatprep.subr.bf16.mxu0 0
        %3662 = vmatpush1.bf16.msra.mxu0 0
        %3663 = vmatprep.subr.bf16.mxu0 0
        %3664 = vmatpush1.bf16.msra.mxu0 0
        %3665 = vmatprep.subr.bf16.mxu0 0
        %3666 = vmatpush1.bf16.msra.mxu0 0
        %3667 = vmatprep.subr.bf16.mxu0 0
        %3668 = vmatpush1.bf16.msra.mxu0 0
        %3669 = vmatprep.subr.bf16.mxu0 0
        %3670 = vmatpush1.bf16.msra.mxu0 0
        %3671 = vmatprep.subr.bf16.mxu0 0
        %3672 = vmatpush1.bf16.msra.mxu0 0
        %3673 = vmatprep.subr.bf16.mxu0 0
        %3674 = vmatpush1.bf16.msra.mxu0 0
        %3675 = vmatprep.subr.bf16.mxu0 0
        %3676 = vmatpush1.bf16.msra.mxu0 0
        %3677 = vmatprep.mubr.bf16.mxu0 0
        %3678 = vmatmul.mubr.bf16.gmra.mrb[0].mxu0 %v3410
        %v3679 = vpop.f32.mrb[0].mxu0
        %v3680 = vadd.f32 0.0, %v3679
        %v3681 = vpop.f32.mrb[0].mxu0
        %v3682 = vadd.f32 0.0, %v3681
        %v3683 = vpop.f32.mrb[0].mxu0
        %v3684 = vpop.f32.mrb[0].mxu0
        %3685 = vdwg.mxu0
        %v3686 = vadd.f32 %v1102, %v3639
        %v3687 = vadd.f32 %v1104, %v3641
        %v3688 = vadd.f32 %v1175, %v3680
        %v3689 = vadd.f32 %v1177, %v3682
        %v3690 = vxor.u32 %v3686, 2147483648
        %v3691 = vmul.f32 %v3690, 1.442695
        %v3692 = vpow.pop %v3691
        %v3693 = vadd.f32 %v3692, 1.0
        %v3694 = vrcp.pop %v3693
        %v3695 = vmul.f32 1.0, %v3694
        %v3696 = vxor.u32 %v3687, 2147483648
        %v3697 = vmul.f32 %v3696, 1.442695
        %v3698 = vpow.pop %v3697
        %v3699 = vadd.f32 %v3698, 1.0
        %v3700 = vrcp.pop %v3699
        %v3701 = vmul.f32 1.0, %v3700
        %v3702 = vtanh.pop %v3688
        %v3703 = vxor.u32 %v3689, 2147483648
        %v3704 = vmul.f32 %v3703, 1.442695
        %v3705 = vpow.pop %v3704
        %v3706 = vadd.f32 %v3705, 1.0
        %v3707 = vrcp.pop %v3706
        %v3708 = vmul.f32 1.0, %v3707
        %v3709 = vmul.f32 %v3701, %v3407
        %v3710 = vmul.f32 %v3695, %v3702
        %v3711 = vadd.f32 %v3709, %v3710
        %v3712 = vtanh.pop %v3711
        %v3713 = vmul.f32 %v3708, %v3712
        %v3714 = vpack.c.bf16 %v3713, %v3713
        %v3715 = vpack.c.bf16 %v3603, %v3603
        %3716 = vmatprep.subr.bf16.mxu0 %v1669
        %3717 = vmatpush1.bf16.msra.mxu0 %v1668
        %3718 = vmatprep.subr.bf16.mxu0 %v1673
        %3719 = vmatpush1.bf16.msra.mxu0 %v1672
        %3720 = vmatprep.subr.bf16.mxu0 %v1677
        %3721 = vmatpush1.bf16.msra.mxu0 %v1676
        %3722 = vmatprep.subr.bf16.mxu0 %v1681
        %3723 = vmatpush1.bf16.msra.mxu0 %v1680
        %3724 = vmatprep.subr.bf16.mxu0 %v1685
        %3725 = vmatpush1.bf16.msra.mxu0 %v1684
        %3726 = vmatprep.subr.bf16.mxu0 %v1689
        %3727 = vmatpush1.bf16.msra.mxu0 %v1688
        %3728 = vmatprep.subr.bf16.mxu0 %v1693
        %3729 = vmatpush1.bf16.msra.mxu0 %v1692
        %3730 = vmatprep.subr.bf16.mxu0 %v1697
        %3731 = vmatpush1.bf16.msra.mxu0 %v1696
        %3732 = vmatprep.subr.bf16.mxu0 0
        %3733 = vmatpush1.bf16.msra.mxu0 0
        %3734 = vmatprep.subr.bf16.mxu0 0
        %3735 = vmatpush1.bf16.msra.mxu0 0
        %3736 = vmatprep.subr.bf16.mxu0 0
        %3737 = vmatpush1.bf16.msra.mxu0 0
        %3738 = vmatprep.subr.bf16.mxu0 0
        %3739 = vmatpush1.bf16.msra.mxu0 0
        %3740 = vmatprep.subr.bf16.mxu0 0
        %3741 = vmatpush1.bf16.msra.mxu0 0
        %3742 = vmatprep.subr.bf16.mxu0 0
        %3743 = vmatpush1.bf16.msra.mxu0 0
        %3744 = vmatprep.subr.bf16.mxu0 0
        %3745 = vmatpush1.bf16.msra.mxu0 0
        %3746 = vmatprep.subr.bf16.mxu0 0
        %3747 = vmatpush1.bf16.msra.mxu0 0
        %3748 = vmatprep.mubr.bf16.mxu0 0
        %3749 = vmatmul.mubr.bf16.gmra.mrb[0].mxu0 %v3715
        %v3750 = vpop.f32.mrb[0].mxu0
        %v3751 = vadd.f32 0.0, %v3750
        %v3752 = vpop.f32.mrb[0].mxu0
        %v3753 = vadd.f32 0.0, %v3752
        %v3754 = vpop.f32.mrb[0].mxu0
        %v3755 = vpop.f32.mrb[0].mxu0
        %3756 = vdwg.mxu0
        %3757 = vmatprep.subr.bf16.mxu0 %v1671
        %3758 = vmatpush1.bf16.msra.mxu0 %v1670
        %3759 = vmatprep.subr.bf16.mxu0 %v1675
        %3760 = vmatpush1.bf16.msra.mxu0 %v1674
        %3761 = vmatprep.subr.bf16.mxu0 %v1679
        %3762 = vmatpush1.bf16.msra.mxu0 %v1678
        %3763 = vmatprep.subr.bf16.mxu0 %v1683
        %3764 = vmatpush1.bf16.msra.mxu0 %v1682
        %3765 = vmatprep.subr.bf16.mxu0 %v1687
        %3766 = vmatpush1.bf16.msra.mxu0 %v1686
        %3767 = vmatprep.subr.bf16.mxu0 %v1691
        %3768 = vmatpush1.bf16.msra.mxu0 %v1690
        %3769 = vmatprep.subr.bf16.mxu0 %v1695
        %3770 = vmatpush1.bf16.msra.mxu0 %v1694
        %3771 = vmatprep.subr.bf16.mxu0 %v1699
        %3772 = vmatpush1.bf16.msra.mxu0 %v1698
        %3773 = vmatprep.subr.bf16.mxu0 0
        %3774 = vmatpush1.bf16.msra.mxu0 0
        %3775 = vmatprep.subr.bf16.mxu0 0
        %3776 = vmatpush1.bf16.msra.mxu0 0
        %3777 = vmatprep.subr.bf16.mxu0 0
        %3778 = vmatpush1.bf16.msra.mxu0 0
        %3779 = vmatprep.subr.bf16.mxu0 0
        %3780 = vmatpush1.bf16.msra.mxu0 0
        %3781 = vmatprep.subr.bf16.mxu0 0
        %3782 = vmatpush1.bf16.msra.mxu0 0
        %3783 = vmatprep.subr.bf16.mxu0 0
        %3784 = vmatpush1.bf16.msra.mxu0 0
        %3785 = vmatprep.subr.bf16.mxu0 0
        %3786 = vmatpush1.bf16.msra.mxu0 0
        %3787 = vmatprep.subr.bf16.mxu0 0
        %3788 = vmatpush1.bf16.msra.mxu0 0
        %3789 = vmatprep.mubr.bf16.mxu0 0
        %3790 = vmatmul.mubr.bf16.gmra.mrb[0].mxu0 %v3715
        %v3791 = vpop.f32.mrb[0].mxu0
        %v3792 = vadd.f32 0.0, %v3791
        %v3793 = vpop.f32.mrb[0].mxu0
        %v3794 = vadd.f32 0.0, %v3793
        %v3795 = vpop.f32.mrb[0].mxu0
        %v3796 = vpop.f32.mrb[0].mxu0
        %3797 = vdwg.mxu0
        %3798 = vmatprep.subr.bf16.mxu0 %v1911
        %3799 = vmatpush1.bf16.msra.mxu0 %v1910
        %3800 = vmatprep.subr.bf16.mxu0 %v1915
        %3801 = vmatpush1.bf16.msra.mxu0 %v1914
        %3802 = vmatprep.subr.bf16.mxu0 %v1919
        %3803 = vmatpush1.bf16.msra.mxu0 %v1918
        %3804 = vmatprep.subr.bf16.mxu0 %v1923
        %3805 = vmatpush1.bf16.msra.mxu0 %v1922
        %3806 = vmatprep.subr.bf16.mxu0 %v1927
        %3807 = vmatpush1.bf16.msra.mxu0 %v1926
        %3808 = vmatprep.subr.bf16.mxu0 %v1931
        %3809 = vmatpush1.bf16.msra.mxu0 %v1930
        %3810 = vmatprep.subr.bf16.mxu0 %v1935
        %3811 = vmatpush1.bf16.msra.mxu0 %v1934
        %3812 = vmatprep.subr.bf16.mxu0 %v1939
        %3813 = vmatpush1.bf16.msra.mxu0 %v1938
        %3814 = vmatprep.subr.bf16.mxu0 0
        %3815 = vmatpush1.bf16.msra.mxu0 0
        %3816 = vmatprep.subr.bf16.mxu0 0
        %3817 = vmatpush1.bf16.msra.mxu0 0
        %3818 = vmatprep.subr.bf16.mxu0 0
        %3819 = vmatpush1.bf16.msra.mxu0 0
        %3820 = vmatprep.subr.bf16.mxu0 0
        %3821 = vmatpush1.bf16.msra.mxu0 0
        %3822 = vmatprep.subr.bf16.mxu0 0
        %3823 = vmatpush1.bf16.msra.mxu0 0
        %3824 = vmatprep.subr.bf16.mxu0 0
        %3825 = vmatpush1.bf16.msra.mxu0 0
        %3826 = vmatprep.subr.bf16.mxu0 0
        %3827 = vmatpush1.bf16.msra.mxu0 0
        %3828 = vmatprep.subr.bf16.mxu0 0
        %3829 = vmatpush1.bf16.msra.mxu0 0
        %3830 = vmatprep.mubr.bf16.mxu0 0
        %3831 = vmatmul.mubr.bf16.gmra.mrb[0].mxu0 %v3714
        %v3832 = vpop.f32.mrb[0].mxu0
        %v3833 = vadd.f32 %v3751, %v3832
        %v3834 = vpop.f32.mrb[0].mxu0
        %v3835 = vadd.f32 %v3753, %v3834
        %v3836 = vpop.f32.mrb[0].mxu0
        %v3837 = vpop.f32.mrb[0].mxu0
        %3838 = vdwg.mxu0
        %3839 = vmatprep.subr.bf16.mxu0 %v1913
        %3840 = vmatpush1.bf16.msra.mxu0 %v1912
        %3841 = vmatprep.subr.bf16.mxu0 %v1917
        %3842 = vmatpush1.bf16.msra.mxu0 %v1916
        %3843 = vmatprep.subr.bf16.mxu0 %v1921
        %3844 = vmatpush1.bf16.msra.mxu0 %v1920
        %3845 = vmatprep.subr.bf16.mxu0 %v1925
        %3846 = vmatpush1.bf16.msra.mxu0 %v1924
        %3847 = vmatprep.subr.bf16.mxu0 %v1929
        %3848 = vmatpush1.bf16.msra.mxu0 %v1928
        %3849 = vmatprep.subr.bf16.mxu0 %v1933
        %3850 = vmatpush1.bf16.msra.mxu0 %v1932
        %3851 = vmatprep.subr.bf16.mxu0 %v1937
        %3852 = vmatpush1.bf16.msra.mxu0 %v1936
        %3853 = vmatprep.subr.bf16.mxu0 %v1941
        %3854 = vmatpush1.bf16.msra.mxu0 %v1940
        %3855 = vmatprep.subr.bf16.mxu0 0
        %3856 = vmatpush1.bf16.msra.mxu0 0
        %3857 = vmatprep.subr.bf16.mxu0 0
        %3858 = vmatpush1.bf16.msra.mxu0 0
        %3859 = vmatprep.subr.bf16.mxu0 0
        %3860 = vmatpush1.bf16.msra.mxu0 0
        %3861 = vmatprep.subr.bf16.mxu0 0
        %3862 = vmatpush1.bf16.msra.mxu0 0
        %3863 = vmatprep.subr.bf16.mxu0 0
        %3864 = vmatpush1.bf16.msra.mxu0 0
        %3865 = vmatprep.subr.bf16.mxu0 0
        %3866 = vmatpush1.bf16.msra.mxu0 0
        %3867 = vmatprep.subr.bf16.mxu0 0
        %3868 = vmatpush1.bf16.msra.mxu0 0
        %3869 = vmatprep.subr.bf16.mxu0 0
        %3870 = vmatpush1.bf16.msra.mxu0 0
        %3871 = vmatprep.mubr.bf16.mxu0 0
        %3872 = vmatmul.mubr.bf16.gmra.mrb[0].mxu0 %v3714
        %v3873 = vpop.f32.mrb[0].mxu0
        %v3874 = vadd.f32 %v3792, %v3873
        %v3875 = vpop.f32.mrb[0].mxu0
        %v3876 = vadd.f32 %v3794, %v3875
        %v3877 = vpop.f32.mrb[0].mxu0
        %v3878 = vpop.f32.mrb[0].mxu0
        %3879 = vdwg.mxu0
        %v3880 = vadd.f32 %v3833, %v1284
        %v3881 = vadd.f32 %v3835, %v1288
        %v3882 = vadd.f32 %v3874, %v1292
        %v3883 = vadd.f32 %v3876, %v1296
        %v3884 = vxor.u32 %v3880, 2147483648
        %v3885 = vmul.f32 %v3884, 1.442695
        %v3886 = vpow.pop %v3885
        %v3887 = vadd.f32 %v3886, 1.0
        %v3888 = vrcp.pop %v3887
        %v3889 = vmul.f32 1.0, %v3888
        %v3890 = vxor.u32 %v3881, 2147483648
        %v3891 = vmul.f32 %v3890, 1.442695
        %v3892 = vpow.pop %v3891
        %v3893 = vadd.f32 %v3892, 1.0
        %v3894 = vrcp.pop %v3893
        %v3895 = vmul.f32 1.0, %v3894
        %v3896 = vtanh.pop %v3882
        %v3897 = vxor.u32 %v3883, 2147483648
        %v3898 = vmul.f32 %v3897, 1.442695
        %v3899 = vpow.pop %v3898
        %v3900 = vadd.f32 %v3899, 1.0
        %v3901 = vrcp.pop %v3900
        %v3902 = vmul.f32 1.0, %v3901
        %v3903 = vmul.f32 %v3895, %v3601
        %v3904 = vmul.f32 %v3889, %v3896
        %v3905 = vadd.f32 %v3903, %v3904
        %v3906 = vtanh.pop %v3905
        %v3907 = vmul.f32 %v3902, %v3906
        %3908 = vmatprep.subr.bf16.mxu0 %v1398
        %3909 = vmatpush1.bf16.msra.mxu0 %v1397
        %3910 = vmatprep.subr.bf16.mxu0 %v1402
        %3911 = vmatpush1.bf16.msra.mxu0 %v1401
        %3912 = vmatprep.subr.bf16.mxu0 %v1406
        %3913 = vmatpush1.bf16.msra.mxu0 %v1405
        %3914 = vmatprep.subr.bf16.mxu0 %v1410
        %3915 = vmatpush1.bf16.msra.mxu0 %v1409
        %3916 = vmatprep.subr.bf16.mxu0 %v1414
        %3917 = vmatpush1.bf16.msra.mxu0 %v1413
        %3918 = vmatprep.subr.bf16.mxu0 %v1418
        %3919 = vmatpush1.bf16.msra.mxu0 %v1417
        %3920 = vmatprep.subr.bf16.mxu0 %v1422
        %3921 = vmatpush1.bf16.msra.mxu0 %v1421
        %3922 = vmatprep.subr.bf16.mxu0 %v1426
        %3923 = vmatpush1.bf16.msra.mxu0 %v1425
        %3924 = vmatprep.subr.bf16.mxu0 0
        %3925 = vmatpush1.bf16.msra.mxu0 0
        %3926 = vmatprep.subr.bf16.mxu0 0
        %3927 = vmatpush1.bf16.msra.mxu0 0
        %3928 = vmatprep.subr.bf16.mxu0 0
        %3929 = vmatpush1.bf16.msra.mxu0 0
        %3930 = vmatprep.subr.bf16.mxu0 0
        %3931 = vmatpush1.bf16.msra.mxu0 0
        %3932 = vmatprep.subr.bf16.mxu0 0
        %3933 = vmatpush1.bf16.msra.mxu0 0
        %3934 = vmatprep.subr.bf16.mxu0 0
        %3935 = vmatpush1.bf16.msra.mxu0 0
        %3936 = vmatprep.subr.bf16.mxu0 0
        %3937 = vmatpush1.bf16.msra.mxu0 0
        %3938 = vmatprep.subr.bf16.mxu0 0
        %3939 = vmatpush1.bf16.msra.mxu0 0
        %3940 = vmatprep.mubr.bf16.mxu0 0
        %3941 = vmatmul.mubr.bf16.gmra.mrb[0].mxu0 %v3714
        %v3942 = vpop.f32.mrb[0].mxu0
        %v3943 = vadd.f32 0.0, %v3942
        %v3944 = vpop.f32.mrb[0].mxu0
        %v3945 = vadd.f32 0.0, %v3944
        %v3946 = vpop.f32.mrb[0].mxu0
        %v3947 = vpop.f32.mrb[0].mxu0
        %3948 = vdwg.mxu0
        %3949 = vmatprep.subr.bf16.mxu0 %v1400
        %3950 = vmatpush1.bf16.msra.mxu0 %v1399
        %3951 = vmatprep.subr.bf16.mxu0 %v1404
        %3952 = vmatpush1.bf16.msra.mxu0 %v1403
        %3953 = vmatprep.subr.bf16.mxu0 %v1408
        %3954 = vmatpush1.bf16.msra.mxu0 %v1407
        %3955 = vmatprep.subr.bf16.mxu0 %v1412
        %3956 = vmatpush1.bf16.msra.mxu0 %v1411
        %3957 = vmatprep.subr.bf16.mxu0 %v1416
        %3958 = vmatpush1.bf16.msra.mxu0 %v1415
        %3959 = vmatprep.subr.bf16.mxu0 %v1420
        %3960 = vmatpush1.bf16.msra.mxu0 %v1419
        %3961 = vmatprep.subr.bf16.mxu0 %v1424
        %3962 = vmatpush1.bf16.msra.mxu0 %v1423
        %3963 = vmatprep.subr.bf16.mxu0 %v1428
        %3964 = vmatpush1.bf16.msra.mxu0 %v1427
        %3965 = vmatprep.subr.bf16.mxu0 0
        %3966 = vmatpush1.bf16.msra.mxu0 0
        %3967 = vmatprep.subr.bf16.mxu0 0
        %3968 = vmatpush1.bf16.msra.mxu0 0
        %3969 = vmatprep.subr.bf16.mxu0 0
        %3970 = vmatpush1.bf16.msra.mxu0 0
        %3971 = vmatprep.subr.bf16.mxu0 0
        %3972 = vmatpush1.bf16.msra.mxu0 0
        %3973 = vmatprep.subr.bf16.mxu0 0
        %3974 = vmatpush1.bf16.msra.mxu0 0
        %3975 = vmatprep.subr.bf16.mxu0 0
        %3976 = vmatpush1.bf16.msra.mxu0 0
        %3977 = vmatprep.subr.bf16.mxu0 0
        %3978 = vmatpush1.bf16.msra.mxu0 0
        %3979 = vmatprep.subr.bf16.mxu0 0
        %3980 = vmatpush1.bf16.msra.mxu0 0
        %3981 = vmatprep.mubr.bf16.mxu0 0
        %3982 = vmatmul.mubr.bf16.gmra.mrb[0].mxu0 %v3714
        %v3983 = vpop.f32.mrb[0].mxu0
        %v3984 = vadd.f32 0.0, %v3983
        %v3985 = vpop.f32.mrb[0].mxu0
        %v3986 = vadd.f32 0.0, %v3985
        %v3987 = vpop.f32.mrb[0].mxu0
        %v3988 = vpop.f32.mrb[0].mxu0
        %3989 = vdwg.mxu0
        %v3990 = vadd.f32 %v1106, %v3943
        %v3991 = vadd.f32 %v1108, %v3945
        %v3992 = vadd.f32 %v1179, %v3984
        %v3993 = vadd.f32 %v1181, %v3986
        %v3994 = vxor.u32 %v3990, 2147483648
        %v3995 = vmul.f32 %v3994, 1.442695
        %v3996 = vpow.pop %v3995
        %v3997 = vadd.f32 %v3996, 1.0
        %v3998 = vrcp.pop %v3997
        %v3999 = vmul.f32 1.0, %v3998
        %v4000 = vxor.u32 %v3991, 2147483648
        %v4001 = vmul.f32 %v4000, 1.442695
        %v4002 = vpow.pop %v4001
        %v4003 = vadd.f32 %v4002, 1.0
        %v4004 = vrcp.pop %v4003
        %v4005 = vmul.f32 1.0, %v4004
        %v4006 = vtanh.pop %v3992
        %v4007 = vxor.u32 %v3993, 2147483648
        %v4008 = vmul.f32 %v4007, 1.442695
        %v4009 = vpow.pop %v4008
        %v4010 = vadd.f32 %v4009, 1.0
        %v4011 = vrcp.pop %v4010
        %v4012 = vmul.f32 1.0, %v4011
        %v4013 = vmul.f32 %v4005, %v3711
        %v4014 = vmul.f32 %v3999, %v4006
        %v4015 = vadd.f32 %v4013, %v4014
        %v4016 = vtanh.pop %v4015
        %v4017 = vmul.f32 %v4012, %v4016
        %v4018 = vpack.c.bf16 %v4017, %v4017
        %v4019 = vpack.c.bf16 %v3907, %v3907
        %4020 = vmatprep.subr.bf16.mxu0 %v1669
        %4021 = vmatpush1.bf16.msra.mxu0 %v1668
        %4022 = vmatprep.subr.bf16.mxu0 %v1673
        %4023 = vmatpush1.bf16.msra.mxu0 %v1672
        %4024 = vmatprep.subr.bf16.mxu0 %v1677
        %4025 = vmatpush1.bf16.msra.mxu0 %v1676
        %4026 = vmatprep.subr.bf16.mxu0 %v1681
        %4027 = vmatpush1.bf16.msra.mxu0 %v1680
        %4028 = vmatprep.subr.bf16.mxu0 %v1685
        %4029 = vmatpush1.bf16.msra.mxu0 %v1684
        %4030 = vmatprep.subr.bf16.mxu0 %v1689
        %4031 = vmatpush1.bf16.msra.mxu0 %v1688
        %4032 = vmatprep.subr.bf16.mxu0 %v1693
        %4033 = vmatpush1.bf16.msra.mxu0 %v1692
        %4034 = vmatprep.subr.bf16.mxu0 %v1697
        %4035 = vmatpush1.bf16.msra.mxu0 %v1696
        %4036 = vmatprep.subr.bf16.mxu0 0
        %4037 = vmatpush1.bf16.msra.mxu0 0
        %4038 = vmatprep.subr.bf16.mxu0 0
        %4039 = vmatpush1.bf16.msra.mxu0 0
        %4040 = vmatprep.subr.bf16.mxu0 0
        %4041 = vmatpush1.bf16.msra.mxu0 0
        %4042 = vmatprep.subr.bf16.mxu0 0
        %4043 = vmatpush1.bf16.msra.mxu0 0
        %4044 = vmatprep.subr.bf16.mxu0 0
        %4045 = vmatpush1.bf16.msra.mxu0 0
        %4046 = vmatprep.subr.bf16.mxu0 0
        %4047 = vmatpush1.bf16.msra.mxu0 0
        %4048 = vmatprep.subr.bf16.mxu0 0
        %4049 = vmatpush1.bf16.msra.mxu0 0
        %4050 = vmatprep.subr.bf16.mxu0 0
        %4051 = vmatpush1.bf16.msra.mxu0 0
        %4052 = vmatprep.mubr.bf16.mxu0 0
        %4053 = vmatmul.mubr.bf16.gmra.mrb[0].mxu0 %v4019
        %v4054 = vpop.f32.mrb[0].mxu0
        %v4055 = vadd.f32 0.0, %v4054
        %v4056 = vpop.f32.mrb[0].mxu0
        %v4057 = vadd.f32 0.0, %v4056
        %v4058 = vpop.f32.mrb[0].mxu0
        %v4059 = vpop.f32.mrb[0].mxu0
        %4060 = vdwg.mxu0
        %4061 = vmatprep.subr.bf16.mxu0 %v1671
        %4062 = vmatpush1.bf16.msra.mxu0 %v1670
        %4063 = vmatprep.subr.bf16.mxu0 %v1675
        %4064 = vmatpush1.bf16.msra.mxu0 %v1674
        %4065 = vmatprep.subr.bf16.mxu0 %v1679
        %4066 = vmatpush1.bf16.msra.mxu0 %v1678
        %4067 = vmatprep.subr.bf16.mxu0 %v1683
        %4068 = vmatpush1.bf16.msra.mxu0 %v1682
        %4069 = vmatprep.subr.bf16.mxu0 %v1687
        %4070 = vmatpush1.bf16.msra.mxu0 %v1686
        %4071 = vmatprep.subr.bf16.mxu0 %v1691
        %4072 = vmatpush1.bf16.msra.mxu0 %v1690
        %4073 = vmatprep.subr.bf16.mxu0 %v1695
        %4074 = vmatpush1.bf16.msra.mxu0 %v1694
        %4075 = vmatprep.subr.bf16.mxu0 %v1699
        %4076 = vmatpush1.bf16.msra.mxu0 %v1698
        %4077 = vmatprep.subr.bf16.mxu0 0
        %4078 = vmatpush1.bf16.msra.mxu0 0
        %4079 = vmatprep.subr.bf16.mxu0 0
        %4080 = vmatpush1.bf16.msra.mxu0 0
        %4081 = vmatprep.subr.bf16.mxu0 0
        %4082 = vmatpush1.bf16.msra.mxu0 0
        %4083 = vmatprep.subr.bf16.mxu0 0
        %4084 = vmatpush1.bf16.msra.mxu0 0
        %4085 = vmatprep.subr.bf16.mxu0 0
        %4086 = vmatpush1.bf16.msra.mxu0 0
        %4087 = vmatprep.subr.bf16.mxu0 0
        %4088 = vmatpush1.bf16.msra.mxu0 0
        %4089 = vmatprep.subr.bf16.mxu0 0
        %4090 = vmatpush1.bf16.msra.mxu0 0
        %4091 = vmatprep.subr.bf16.mxu0 0
        %4092 = vmatpush1.bf16.msra.mxu0 0
        %4093 = vmatprep.mubr.bf16.mxu0 0
        %4094 = vmatmul.mubr.bf16.gmra.mrb[0].mxu0 %v4019
        %v4095 = vpop.f32.mrb[0].mxu0
        %v4096 = vadd.f32 0.0, %v4095
        %v4097 = vpop.f32.mrb[0].mxu0
        %v4098 = vadd.f32 0.0, %v4097
        %v4099 = vpop.f32.mrb[0].mxu0
        %v4100 = vpop.f32.mrb[0].mxu0
        %4101 = vdwg.mxu0
        %4102 = vmatprep.subr.bf16.mxu0 %v1911
        %4103 = vmatpush1.bf16.msra.mxu0 %v1910
        %4104 = vmatprep.subr.bf16.mxu0 %v1915
        %4105 = vmatpush1.bf16.msra.mxu0 %v1914
        %4106 = vmatprep.subr.bf16.mxu0 %v1919
        %4107 = vmatpush1.bf16.msra.mxu0 %v1918
        %4108 = vmatprep.subr.bf16.mxu0 %v1923
        %4109 = vmatpush1.bf16.msra.mxu0 %v1922
        %4110 = vmatprep.subr.bf16.mxu0 %v1927
        %4111 = vmatpush1.bf16.msra.mxu0 %v1926
        %4112 = vmatprep.subr.bf16.mxu0 %v1931
        %4113 = vmatpush1.bf16.msra.mxu0 %v1930
        %4114 = vmatprep.subr.bf16.mxu0 %v1935
        %4115 = vmatpush1.bf16.msra.mxu0 %v1934
        %4116 = vmatprep.subr.bf16.mxu0 %v1939
        %4117 = vmatpush1.bf16.msra.mxu0 %v1938
        %4118 = vmatprep.subr.bf16.mxu0 0
        %4119 = vmatpush1.bf16.msra.mxu0 0
        %4120 = vmatprep.subr.bf16.mxu0 0
        %4121 = vmatpush1.bf16.msra.mxu0 0
        %4122 = vmatprep.subr.bf16.mxu0 0
        %4123 = vmatpush1.bf16.msra.mxu0 0
        %4124 = vmatprep.subr.bf16.mxu0 0
        %4125 = vmatpush1.bf16.msra.mxu0 0
        %4126 = vmatprep.subr.bf16.mxu0 0
        %4127 = vmatpush1.bf16.msra.mxu0 0
        %4128 = vmatprep.subr.bf16.mxu0 0
        %4129 = vmatpush1.bf16.msra.mxu0 0
        %4130 = vmatprep.subr.bf16.mxu0 0
        %4131 = vmatpush1.bf16.msra.mxu0 0
        %4132 = vmatprep.subr.bf16.mxu0 0
        %4133 = vmatpush1.bf16.msra.mxu0 0
        %4134 = vmatprep.mubr.bf16.mxu0 0
        %4135 = vmatmul.mubr.bf16.gmra.mrb[0].mxu0 %v4018
        %v4136 = vpop.f32.mrb[0].mxu0
        %v4137 = vadd.f32 %v4055, %v4136
        %v4138 = vpop.f32.mrb[0].mxu0
        %v4139 = vadd.f32 %v4057, %v4138
        %v4140 = vpop.f32.mrb[0].mxu0
        %v4141 = vpop.f32.mrb[0].mxu0
        %4142 = vdwg.mxu0
        %4143 = vmatprep.subr.bf16.mxu0 %v1913
        %4144 = vmatpush1.bf16.msra.mxu0 %v1912
        %4145 = vmatprep.subr.bf16.mxu0 %v1917
        %4146 = vmatpush1.bf16.msra.mxu0 %v1916
        %4147 = vmatprep.subr.bf16.mxu0 %v1921
        %4148 = vmatpush1.bf16.msra.mxu0 %v1920
        %4149 = vmatprep.subr.bf16.mxu0 %v1925
        %4150 = vmatpush1.bf16.msra.mxu0 %v1924
        %4151 = vmatprep.subr.bf16.mxu0 %v1929
        %4152 = vmatpush1.bf16.msra.mxu0 %v1928
        %4153 = vmatprep.subr.bf16.mxu0 %v1933
        %4154 = vmatpush1.bf16.msra.mxu0 %v1932
        %4155 = vmatprep.subr.bf16.mxu0 %v1937
        %4156 = vmatpush1.bf16.msra.mxu0 %v1936
        %4157 = vmatprep.subr.bf16.mxu0 %v1941
        %4158 = vmatpush1.bf16.msra.mxu0 %v1940
        %4159 = vmatprep.subr.bf16.mxu0 0
        %4160 = vmatpush1.bf16.msra.mxu0 0
        %4161 = vmatprep.subr.bf16.mxu0 0
        %4162 = vmatpush1.bf16.msra.mxu0 0
        %4163 = vmatprep.subr.bf16.mxu0 0
        %4164 = vmatpush1.bf16.msra.mxu0 0
        %4165 = vmatprep.subr.bf16.mxu0 0
        %4166 = vmatpush1.bf16.msra.mxu0 0
        %4167 = vmatprep.subr.bf16.mxu0 0
        %4168 = vmatpush1.bf16.msra.mxu0 0
        %4169 = vmatprep.subr.bf16.mxu0 0
        %4170 = vmatpush1.bf16.msra.mxu0 0
        %4171 = vmatprep.subr.bf16.mxu0 0
        %4172 = vmatpush1.bf16.msra.mxu0 0
        %4173 = vmatprep.subr.bf16.mxu0 0
        %4174 = vmatpush1.bf16.msra.mxu0 0
        %4175 = vmatprep.mubr.bf16.mxu0 0
        %4176 = vmatmul.mubr.bf16.gmra.mrb[0].mxu0 %v4018
        %v4177 = vpop.f32.mrb[0].mxu0
        %v4178 = vadd.f32 %v4096, %v4177
        %v4179 = vpop.f32.mrb[0].mxu0
        %v4180 = vadd.f32 %v4098, %v4179
        %v4181 = vpop.f32.mrb[0].mxu0
        %v4182 = vpop.f32.mrb[0].mxu0
        %4183 = vdwg.mxu0
        %v4184 = vadd.f32 %v4137, %v1284
        %v4185 = vadd.f32 %v4139, %v1288
        %v4186 = vadd.f32 %v4178, %v1292
        %v4187 = vadd.f32 %v4180, %v1296
        %v4188 = vxor.u32 %v4184, 2147483648
        %v4189 = vmul.f32 %v4188, 1.442695
        %v4190 = vpow.pop %v4189
        %v4191 = vadd.f32 %v4190, 1.0
        %v4192 = vrcp.pop %v4191
        %v4193 = vmul.f32 1.0, %v4192
        %v4194 = vxor.u32 %v4185, 2147483648
        %v4195 = vmul.f32 %v4194, 1.442695
        %v4196 = vpow.pop %v4195
        %v4197 = vadd.f32 %v4196, 1.0
        %v4198 = vrcp.pop %v4197
        %v4199 = vmul.f32 1.0, %v4198
        %v4200 = vtanh.pop %v4186
        %v4201 = vxor.u32 %v4187, 2147483648
        %v4202 = vmul.f32 %v4201, 1.442695
        %v4203 = vpow.pop %v4202
        %v4204 = vadd.f32 %v4203, 1.0
        %v4205 = vrcp.pop %v4204
        %v4206 = vmul.f32 1.0, %v4205
        %v4207 = vmul.f32 %v4199, %v3905
        %v4208 = vmul.f32 %v4193, %v4200
        %v4209 = vadd.f32 %v4207, %v4208
        %v4210 = vtanh.pop %v4209
        %v4211 = vmul.f32 %v4206, %v4210
        %v4212 = vld [vmem:[%s12] sm:$0xf]
        %v4213 = vld [vmem:[%s12 + $0x4] sm:$0xf]
        %v4214 = vld [vmem:[%s12 + $0x8] sm:$0xf]
        %v4215 = vld [vmem:[%s12 + $0xc] sm:$0xf]
        %v4216 = vld [vmem:[%s12 + $0x10] sm:$0xf]
        %v4217 = vld [vmem:[%s12 + $0x14] sm:$0xf]
        %v4218 = vld [vmem:[%s12 + $0x18] sm:$0xf]
        %v4219 = vld [vmem:[%s12 + $0x1c] sm:$0xf]
        %v4220 = vld [vmem:[%s12 + $0x20] sm:$0xf]
        %v4221 = vld [vmem:[%s12 + $0x24] sm:$0xf]
        %v4222 = vld [vmem:[%s12 + $0x28] sm:$0xf]
        %v4223 = vld [vmem:[%s12 + $0x2c] sm:$0xf]
        %v4224 = vld [vmem:[%s12 + $0x30] sm:$0xf]
        %v4225 = vld [vmem:[%s12 + $0x34] sm:$0xf]
        %v4226 = vld [vmem:[%s12 + $0x38] sm:$0xf]
        %v4227 = vld [vmem:[%s12 + $0x3c] sm:$0xf]
        %v4228 = vld [vmem:[%s12 + $0x40] sm:$0xf]
        %v4229 = vld [vmem:[%s12 + $0x44] sm:$0xf]
        %v4230 = vld [vmem:[%s12 + $0x48] sm:$0xf]
        %v4231 = vld [vmem:[%s12 + $0x4c] sm:$0xf]
        %v4232 = vld [vmem:[%s12 + $0x50] sm:$0xf]
        %v4233 = vld [vmem:[%s12 + $0x54] sm:$0xf]
        %v4234 = vld [vmem:[%s12 + $0x58] sm:$0xf]
        %v4235 = vld [vmem:[%s12 + $0x5c] sm:$0xf]
        %v4236 = vld [vmem:[%s12 + $0x60] sm:$0xf]
        %v4237 = vld [vmem:[%s12 + $0x64] sm:$0xf]
        %v4238 = vld [vmem:[%s12 + $0x68] sm:$0xf]
        %v4239 = vld [vmem:[%s12 + $0x6c] sm:$0xf]
        %v4240 = vld [vmem:[%s12 + $0x70] sm:$0xf]
        %v4241 = vld [vmem:[%s12 + $0x74] sm:$0xf]
        %v4242 = vld [vmem:[%s12 + $0x78] sm:$0xf]
        %v4243 = vld [vmem:[%s12 + $0x7c] sm:$0xf]
        %v4244 = vld [vmem:[%s12 + $0x80] sm:$0xf]
        %v4245 = vld [vmem:[%s12 + $0x84] sm:$0xf]
        %v4246 = vld [vmem:[%s12 + $0x88] sm:$0xf]
        %v4247 = vld [vmem:[%s12 + $0x8c] sm:$0xf]
        %v4248 = vld [vmem:[%s12 + $0x90] sm:$0xf]
        %v4249 = vld [vmem:[%s12 + $0x94] sm:$0xf]
        %v4250 = vld [vmem:[%s12 + $0x98] sm:$0xf]
        %v4251 = vld [vmem:[%s12 + $0x9c] sm:$0xf]
        %v4252 = vld [vmem:[%s12 + $0xa0] sm:$0xf]
        %v4253 = vld [vmem:[%s12 + $0xa4] sm:$0xf]
        %v4254 = vld [vmem:[%s12 + $0xa8] sm:$0xf]
        %v4255 = vld [vmem:[%s12 + $0xac] sm:$0xf]
        %v4256 = vld [vmem:[%s12 + $0xb0] sm:$0xf]
        %v4257 = vld [vmem:[%s12 + $0xb4] sm:$0xf]
        %v4258 = vld [vmem:[%s12 + $0xb8] sm:$0xf]
        %v4259 = vld [vmem:[%s12 + $0xbc] sm:$0xf]
        %v4260 = vld [vmem:[%s12 + $0xc0] sm:$0xf]
        %v4261 = vld [vmem:[%s12 + $0xc4] sm:$0xf]
        %v4262 = vld [vmem:[%s12 + $0xc8] sm:$0xf]
        %v4263 = vld [vmem:[%s12 + $0xcc] sm:$0xf]
        %v4264 = vld [vmem:[%s12 + $0xd0] sm:$0xf]
        %v4265 = vld [vmem:[%s12 + $0xd4] sm:$0xf]
        %v4266 = vld [vmem:[%s12 + $0xd8] sm:$0xf]
        %v4267 = vld [vmem:[%s12 + $0xdc] sm:$0xf]
        %v4268 = vld [vmem:[%s12 + $0xe0] sm:$0xf]
        %v4269 = vld [vmem:[%s12 + $0xe4] sm:$0xf]
        %v4270 = vld [vmem:[%s12 + $0xe8] sm:$0xf]
        %v4271 = vld [vmem:[%s12 + $0xec] sm:$0xf]
        %v4272 = vld [vmem:[%s12 + $0xf0] sm:$0xf]
        %v4273 = vld [vmem:[%s12 + $0xf4] sm:$0xf]
        %v4274 = vld [vmem:[%s12 + $0xf8] sm:$0xf]
        %v4275 = vld [vmem:[%s12 + $0xfc] sm:$0xf]
        %v4276 = vpack.c.bf16 %v4211, %v4211
        %v4277 = vpack.c.bf16 %v4015, %v4015
        %v4278 = vpack.c.bf16 %v4209, %v4209
        %v4279 = vld [vmem:[%s13] sm:$0x1]
        %v4281 = vlaneseq
        %v4282 = vshrl.u32 %v4281, 7
        %v4283 = vsub.s32 0, %v4282
        %v4284 = vrot.slane %v4279, %v4283
        %v4350 = vunpack.c.l.b16 %v4212
        %v4351 = vunpack.c.l.b16 %v4213
        %v4352 = vunpack.c.l.b16 %v4214
        %v4353 = vunpack.c.l.b16 %v4215
        %v4354 = vunpack.c.l.b16 %v4216
        %v4355 = vunpack.c.l.b16 %v4217
        %v4356 = vunpack.c.l.b16 %v4218
        %v4357 = vunpack.c.l.b16 %v4219
        %v4358 = vunpack.c.l.b16 %v4220
        %v4359 = vunpack.c.l.b16 %v4221
        %v4360 = vunpack.c.l.b16 %v4222
        %v4361 = vunpack.c.l.b16 %v4223
        %v4362 = vunpack.c.l.b16 %v4224
        %v4363 = vunpack.c.l.b16 %v4225
        %v4364 = vunpack.c.l.b16 %v4226
        %v4365 = vunpack.c.l.b16 %v4227
        %v4366 = vunpack.c.l.b16 %v4228
        %v4367 = vunpack.c.l.b16 %v4229
        %v4368 = vunpack.c.l.b16 %v4230
        %v4369 = vunpack.c.l.b16 %v4231
        %v4370 = vunpack.c.l.b16 %v4232
        %v4371 = vunpack.c.l.b16 %v4233
        %v4372 = vunpack.c.l.b16 %v4234
        %v4373 = vunpack.c.l.b16 %v4235
        %v4374 = vunpack.c.l.b16 %v4236
        %v4375 = vunpack.c.l.b16 %v4237
        %v4376 = vunpack.c.l.b16 %v4238
        %v4377 = vunpack.c.l.b16 %v4239
        %v4378 = vunpack.c.l.b16 %v4240
        %v4379 = vunpack.c.l.b16 %v4241
        %v4380 = vunpack.c.l.b16 %v4242
        %v4381 = vunpack.c.l.b16 %v4243
        %v4382 = vunpack.c.l.b16 %v4244
        %v4383 = vunpack.c.l.b16 %v4245
        %v4384 = vunpack.c.l.b16 %v4246
        %v4385 = vunpack.c.l.b16 %v4247
        %v4386 = vunpack.c.l.b16 %v4248
        %v4387 = vunpack.c.l.b16 %v4249
        %v4388 = vunpack.c.l.b16 %v4250
        %v4389 = vunpack.c.l.b16 %v4251
        %v4390 = vunpack.c.l.b16 %v4252
        %v4391 = vunpack.c.l.b16 %v4253
        %v4392 = vunpack.c.l.b16 %v4254
        %v4393 = vunpack.c.l.b16 %v4255
        %v4394 = vunpack.c.l.b16 %v4256
        %v4395 = vunpack.c.l.b16 %v4257
        %v4396 = vunpack.c.l.b16 %v4258
        %v4397 = vunpack.c.l.b16 %v4259
        %v4398 = vunpack.c.l.b16 %v4260
        %v4399 = vunpack.c.l.b16 %v4261
        %v4400 = vunpack.c.l.b16 %v4262
        %v4401 = vunpack.c.l.b16 %v4263
        %v4402 = vunpack.c.l.b16 %v4264
        %v4403 = vunpack.c.l.b16 %v4265
        %v4404 = vunpack.c.l.b16 %v4266
        %v4405 = vunpack.c.l.b16 %v4267
        %v4406 = vunpack.c.l.b16 %v4268
        %v4407 = vunpack.c.l.b16 %v4269
        %v4408 = vunpack.c.l.b16 %v4270
        %v4409 = vunpack.c.l.b16 %v4271
        %v4410 = vunpack.c.l.b16 %v4272
        %v4411 = vunpack.c.l.b16 %v4273
        %v4412 = vunpack.c.l.b16 %v4274
        %v4413 = vunpack.c.l.b16 %v4275
        %v4414 = vpack.c.b16 %v4351, %v4350
        %v4415 = vpack.c.b16 %v4353, %v4352
        %v4416 = vpack.c.b16 %v4355, %v4354
        %v4417 = vpack.c.b16 %v4357, %v4356
        %v4418 = vpack.c.b16 %v4359, %v4358
        %v4419 = vpack.c.b16 %v4361, %v4360
        %v4420 = vpack.c.b16 %v4363, %v4362
        %v4421 = vpack.c.b16 %v4365, %v4364
        %v4422 = vpack.c.b16 %v4367, %v4366
        %v4423 = vpack.c.b16 %v4369, %v4368
        %v4424 = vpack.c.b16 %v4371, %v4370
        %v4425 = vpack.c.b16 %v4373, %v4372
        %v4426 = vpack.c.b16 %v4375, %v4374
        %v4427 = vpack.c.b16 %v4377, %v4376
        %v4428 = vpack.c.b16 %v4379, %v4378
        %v4429 = vpack.c.b16 %v4381, %v4380
        %v4430 = vpack.c.b16 %v4383, %v4382
        %v4431 = vpack.c.b16 %v4385, %v4384
        %v4432 = vpack.c.b16 %v4387, %v4386
        %v4433 = vpack.c.b16 %v4389, %v4388
        %v4434 = vpack.c.b16 %v4391, %v4390
        %v4435 = vpack.c.b16 %v4393, %v4392
        %v4436 = vpack.c.b16 %v4395, %v4394
        %v4437 = vpack.c.b16 %v4397, %v4396
        %v4438 = vpack.c.b16 %v4399, %v4398
        %v4439 = vpack.c.b16 %v4401, %v4400
        %v4440 = vpack.c.b16 %v4403, %v4402
        %v4441 = vpack.c.b16 %v4405, %v4404
        %v4442 = vpack.c.b16 %v4407, %v4406
        %v4443 = vpack.c.b16 %v4409, %v4408
        %v4444 = vpack.c.b16 %v4411, %v4410
        %v4445 = vpack.c.b16 %v4413, %v4412
        %4478 = vmatprep.subr.bf16.mxu0 0
        %4479 = vmatpush1.bf16.msra.mxu0 %v4414
        %4480 = vmatprep.subr.bf16.mxu0 0
        %4481 = vmatpush1.bf16.msra.mxu0 %v4415
        %4482 = vmatprep.subr.bf16.mxu0 0
        %4483 = vmatpush1.bf16.msra.mxu0 %v4416
        %4484 = vmatprep.subr.bf16.mxu0 0
        %4485 = vmatpush1.bf16.msra.mxu0 %v4417
        %4486 = vmatprep.subr.bf16.mxu0 0
        %4487 = vmatpush1.bf16.msra.mxu0 %v4418
        %4488 = vmatprep.subr.bf16.mxu0 0
        %4489 = vmatpush1.bf16.msra.mxu0 %v4419
        %4490 = vmatprep.subr.bf16.mxu0 0
        %4491 = vmatpush1.bf16.msra.mxu0 %v4420
        %4492 = vmatprep.subr.bf16.mxu0 0
        %4493 = vmatpush1.bf16.msra.mxu0 %v4421
        %4494 = vmatprep.subr.bf16.mxu0 0
        %4495 = vmatpush1.bf16.msra.mxu0 %v4422
        %4496 = vmatprep.subr.bf16.mxu0 0
        %4497 = vmatpush1.bf16.msra.mxu0 %v4423
        %4498 = vmatprep.subr.bf16.mxu0 0
        %4499 = vmatpush1.bf16.msra.mxu0 %v4424
        %4500 = vmatprep.subr.bf16.mxu0 0
        %4501 = vmatpush1.bf16.msra.mxu0 %v4425
        %4502 = vmatprep.subr.bf16.mxu0 0
        %4503 = vmatpush1.bf16.msra.mxu0 %v4426
        %4504 = vmatprep.subr.bf16.mxu0 0
        %4505 = vmatpush1.bf16.msra.mxu0 %v4427
        %4506 = vmatprep.subr.bf16.mxu0 0
        %4507 = vmatpush1.bf16.msra.mxu0 %v4428
        %4508 = vmatprep.subr.bf16.mxu0 0
        %4509 = vmatpush1.bf16.msra.mxu0 %v4429
        %4510 = vmatprep.mubr.bf16.mxu0 %v4276
        %4511 = vmatmul.mubr.bf16.gmra.mrb[0].mxu0 %v4018
        %v4512 = vpop.f32.mrb[0].mxu0
        %v4513 = vadd.f32 %v4284, %v4512
        %v4514 = vpop.f32.mrb[0].mxu0
        %v4515 = vpop.f32.mrb[0].mxu0
        %v4516 = vpop.f32.mrb[0].mxu0
        %4517 = vdwg.mxu0
        %4518 = vmatprep.subr.bf16.mxu0 0
        %4519 = vmatpush1.bf16.msra.mxu0 %v4430
        %4520 = vmatprep.subr.bf16.mxu0 0
        %4521 = vmatpush1.bf16.msra.mxu0 %v4431
        %4522 = vmatprep.subr.bf16.mxu0 0
        %4523 = vmatpush1.bf16.msra.mxu0 %v4432
        %4524 = vmatprep.subr.bf16.mxu0 0
        %4525 = vmatpush1.bf16.msra.mxu0 %v4433
        %4526 = vmatprep.subr.bf16.mxu0 0
        %4527 = vmatpush1.bf16.msra.mxu0 %v4434
        %4528 = vmatprep.subr.bf16.mxu0 0
        %4529 = vmatpush1.bf16.msra.mxu0 %v4435
        %4530 = vmatprep.subr.bf16.mxu0 0
        %4531 = vmatpush1.bf16.msra.mxu0 %v4436
        %4532 = vmatprep.subr.bf16.mxu0 0
        %4533 = vmatpush1.bf16.msra.mxu0 %v4437
        %4534 = vmatprep.subr.bf16.mxu0 0
        %4535 = vmatpush1.bf16.msra.mxu0 %v4438
        %4536 = vmatprep.subr.bf16.mxu0 0
        %4537 = vmatpush1.bf16.msra.mxu0 %v4439
        %4538 = vmatprep.subr.bf16.mxu0 0
        %4539 = vmatpush1.bf16.msra.mxu0 %v4440
        %4540 = vmatprep.subr.bf16.mxu0 0
        %4541 = vmatpush1.bf16.msra.mxu0 %v4441
        %4542 = vmatprep.subr.bf16.mxu0 0
        %4543 = vmatpush1.bf16.msra.mxu0 %v4442
        %4544 = vmatprep.subr.bf16.mxu0 0
        %4545 = vmatpush1.bf16.msra.mxu0 %v4443
        %4546 = vmatprep.subr.bf16.mxu0 0
        %4547 = vmatpush1.bf16.msra.mxu0 %v4444
        %4548 = vmatprep.subr.bf16.mxu0 0
        %4549 = vmatpush1.bf16.msra.mxu0 %v4445
        %4550 = vmatprep.mubr.bf16.mxu0 %v4278
        %4551 = vmatmul.mubr.bf16.gmra.mrb[0].mxu0 %v4277
        %v4552 = vpop.f32.mrb[0].mxu0
        %v4553 = vadd.f32 %v4513, %v4552
        %v4554 = vpop.f32.mrb[0].mxu0
        %v4555 = vpop.f32.mrb[0].mxu0
        %v4556 = vpop.f32.mrb[0].mxu0
        %4557 = vdwg.mxu0
        %v4558 = vtanh.pop %v4553
        %v4559 = vmul.f32 %v4558, %v787
        %v4560 = vld [vmem:[%s14] sm:$0xf]
        %v4561 = vld [vmem:[%s14 + $0x4] sm:$0xf]
        %v4562 = vld [vmem:[%s14 + $0x8] sm:$0xf]
        %v4563 = vld [vmem:[%s14 + $0xc] sm:$0xf]
        %v4564 = vld [vmem:[%s14 + $0x10] sm:$0xf]
        %v4565 = vld [vmem:[%s14 + $0x14] sm:$0xf]
        %v4566 = vld [vmem:[%s14 + $0x18] sm:$0xf]
        %v4567 = vld [vmem:[%s14 + $0x1c] sm:$0xf]
        %v4568 = vld [vmem:[%s14 + $0x20] sm:$0xf]
        %v4569 = vld [vmem:[%s14 + $0x24] sm:$0xf]
        %v4570 = vld [vmem:[%s14 + $0x28] sm:$0xf]
        %v4571 = vld [vmem:[%s14 + $0x2c] sm:$0xf]
        %v4572 = vld [vmem:[%s14 + $0x30] sm:$0xf]
        %v4573 = vld [vmem:[%s14 + $0x34] sm:$0xf]
        %v4574 = vld [vmem:[%s14 + $0x38] sm:$0xf]
        %v4575 = vld [vmem:[%s14 + $0x3c] sm:$0xf]
        %v4576 = vpack.c.bf16 %v4559, %v4559
        %v4577 = vld [vmem:[%s15] sm:$0x1]
        %v4579 = vlaneseq
        %v4580 = vshrl.u32 %v4579, 7
        %v4581 = vsub.s32 0, %v4580
        %v4582 = vrot.slane %v4577, %v4581
        %v4600 = vunpack.c.l.b16 %v4560
        %v4601 = vunpack.c.l.b16 %v4561
        %v4602 = vunpack.c.l.b16 %v4562
        %v4603 = vunpack.c.l.b16 %v4563
        %v4604 = vunpack.c.l.b16 %v4564
        %v4605 = vunpack.c.l.b16 %v4565
        %v4606 = vunpack.c.l.b16 %v4566
        %v4607 = vunpack.c.l.b16 %v4567
        %v4608 = vunpack.c.l.b16 %v4568
        %v4609 = vunpack.c.l.b16 %v4569
        %v4610 = vunpack.c.l.b16 %v4570
        %v4611 = vunpack.c.l.b16 %v4571
        %v4612 = vunpack.c.l.b16 %v4572
        %v4613 = vunpack.c.l.b16 %v4573
        %v4614 = vunpack.c.l.b16 %v4574
        %v4615 = vunpack.c.l.b16 %v4575
        %v4616 = vpack.c.b16 %v4601, %v4600
        %v4617 = vpack.c.b16 %v4603, %v4602
        %v4618 = vpack.c.b16 %v4605, %v4604
        %v4619 = vpack.c.b16 %v4607, %v4606
        %v4620 = vpack.c.b16 %v4609, %v4608
        %v4621 = vpack.c.b16 %v4611, %v4610
        %v4622 = vpack.c.b16 %v4613, %v4612
        %v4623 = vpack.c.b16 %v4615, %v4614
        %4632 = vmatprep.subr.bf16.mxu0 0
        %4633 = vmatpush1.bf16.msra.mxu0 %v4616
        %4634 = vmatprep.subr.bf16.mxu0 0
        %4635 = vmatpush1.bf16.msra.mxu0 %v4617
        %4636 = vmatprep.subr.bf16.mxu0 0
        %4637 = vmatpush1.bf16.msra.mxu0 %v4618
        %4638 = vmatprep.subr.bf16.mxu0 0
        %4639 = vmatpush1.bf16.msra.mxu0 %v4619
        %4640 = vmatprep.subr.bf16.mxu0 0
        %4641 = vmatpush1.bf16.msra.mxu0 %v4620
        %4642 = vmatprep.subr.bf16.mxu0 0
        %4643 = vmatpush1.bf16.msra.mxu0 %v4621
        %4644 = vmatprep.subr.bf16.mxu0 0
        %4645 = vmatpush1.bf16.msra.mxu0 %v4622
        %4646 = vmatprep.subr.bf16.mxu0 0
        %4647 = vmatpush1.bf16.msra.mxu0 %v4623
        %4648 = vmatprep.subr.bf16.mxu0 0
        %4649 = vmatpush1.bf16.msra.mxu0 0
        %4650 = vmatprep.subr.bf16.mxu0 0
        %4651 = vmatpush1.bf16.msra.mxu0 0
        %4652 = vmatprep.subr.bf16.mxu0 0
        %4653 = vmatpush1.bf16.msra.mxu0 0
        %4654 = vmatprep.subr.bf16.mxu0 0
        %4655 = vmatpush1.bf16.msra.mxu0 0
        %4656 = vmatprep.subr.bf16.mxu0 0
        %4657 = vmatpush1.bf16.msra.mxu0 0
        %4658 = vmatprep.subr.bf16.mxu0 0
        %4659 = vmatpush1.bf16.msra.mxu0 0
        %4660 = vmatprep.subr.bf16.mxu0 0
        %4661 = vmatpush1.bf16.msra.mxu0 0
        %4662 = vmatprep.subr.bf16.mxu0 0
        %4663 = vmatpush1.bf16.msra.mxu0 0
        %4664 = vmatprep.mubr.bf16.mxu0 0
        %4665 = vmatmul.mubr.bf16.gmra.mrb[0].mxu0 %v4576
        %v4666 = vpop.f32.mrb[0].mxu0
        %v4667 = vadd.f32 %v4582, %v4666
        %v4668 = vpop.f32.mrb[0].mxu0
        %v4669 = vpop.f32.mrb[0].mxu0
        %v4670 = vpop.f32.mrb[0].mxu0
        %4671 = vdwg.mxu0
        %4672 = vst [vmem:[%s597] sm:$0xff] %v4667
        %s4673 = sand.u32 %s385, 1
        %s4674 = scalar_lea.sflag [#allocation5], %s4673
        %s4675 = sand.u32 %s385, 1
        %s4676 = smul.addr %s4675, 8
        %s4677 = scalar_lea.vmem [#allocation4], %s4676
        // Predicated region
        $region123: #{deeper_lstm_forward.1} parent=117 // pred_check
          %p4678 = pneg %p395
        $region124: #{deeper_lstm_forward.1} parent=117 // pred_check_branch
          %4680 = sbr.rel (%p4678) target = $region126
        $region125: #{deeper_lstm_forward.1} parent=117 // pred_region
          %s4682 = ssub.s32 128, 128
          %4683 = vsyncadd %s4674, %s4682
          %s4684 = smul.addr %s31, 128
          %s4685 = scalar_lea.hbm %s16, %s4684
          %s4687 = sshll.u32 %s4677, 4
          %s4688 = int_to_ptr.vmem [resolvable:$true] %s4687
          %4690 = dma.vmem_to_hbm [thread:$0]  %s4688, 128, %s4685, %s4674
        $region126: #{deeper_lstm_forward.1} parent=117 // pred_fallthru
          _
      $region118: #{deeper_lstm_forward.1} parent=5 // pred_fallthru
        _
      %p4691 = scmp.le.s32.totalorder 2, %s26
      // Predicated region
      $region127: #{deeper_lstm_forward.1} parent=5 // pred_check
        %p4692 = pneg %p4691
      $region128: #{deeper_lstm_forward.1} parent=5 // pred_check_branch
        %4694 = sbr.rel (%p4692) target = $region130
      $region129: #{deeper_lstm_forward.1} parent=5 // pred_region
        %s4695 = ssub.s32 %s26, 2
        // Predicated region
        $region131: #{deeper_lstm_forward.1} parent=129 // pred_check
          %p4696 = pneg %p401
        $region132: #{deeper_lstm_forward.1} parent=129 // pred_check_branch
          %4698 = sbr.rel (%p4696) target = $region134
        $region133: #{deeper_lstm_forward.1} parent=129 // pred_region
          %s4699 = sand.u32 %s386, 1
          %s4700 = scalar_lea.sflag [#allocation5], %s4699
          %s4701 = sand.u32 %s386, 1
          %s4702 = smul.addr %s4701, 8
          %s4703 = scalar_lea.vmem [#allocation4], %s4702
          %4704 = dma.done %s4700, 128
        $region134: #{deeper_lstm_forward.1} parent=129 // pred_fallthru
          _
      $region130: #{deeper_lstm_forward.1} parent=5 // pred_fallthru
        _
    $region6: #{deeper_lstm_forward.1} parent=1 // loop_footer
      %s30 = sadd.s32 1, %s26
    $region7: #{deeper_lstm_forward.1} parent=1 // loop_footer_branch
      %25 = sbr.rel target = $region3
    $region8: #{deeper_lstm_forward.1} parent=1 // loop_exit
      _
    %4705 = vsyncpa [#allocation5], 1
    %s4706 = scalar_lea.sflag [#allocation5], 1
    %4707 = vsyncpa %s4706, 1

</llo_original>
